<compile_context>
chip_gen: v7x
topology: tpu7x:2x2x1
jax: 0.10.0
libtpu: 0.0.40
codegen_flags: <defaults>
</compile_context>

<pallas_src>
import functools
import numpy as np
import jax
import jax.numpy as jnp
from jax.experimental import pallas as pl
from jax.experimental.pallas import tpu as pltpu


def _round_up(x, m):
    return ((x + m - 1) // m) * m


# ----------------------------------------------------------------------------
# Fused multi-operand linear kernel:  y = sum_i a_i @ w_i + bias
# ----------------------------------------------------------------------------
def fused_linear(a_list, w_list, bias, out_dtype=jnp.bfloat16):
    """a_i: (M, K_i), w_i: (K_i, N) -> (M, N).

    bf16 operands, f32 accumulation, no K grid axis (full-K tiles).  Grid is
    (N tiles, M tiles) with M innermost so each weight tile is DMA'd once and
    reused across every M tile (weights are the small operand here)."""
    M = a_list[0].shape[0]
    N = w_list[0].shape[1]
    p = len(a_list)
    assert all(a.shape[0] == M for a in a_list)
    assert all(w.shape[1] == N for w in w_list)
    assert all(a.shape[1] == w.shape[0] for a, w in zip(a_list, w_list))
    assert M % 8 == 0

    Np = _round_up(N, 128)
    tn = next(t for t in (1024, 512, 256, 128) if Np % t == 0)
    tm = next(t for t in (512, 256, 128, 64, 32, 16, 8) if M % t == 0)
    Mp = M
    if M > 2048 and tm < 128:            # avoid tiny M tiles on awkward sizes
        tm = 256
        Mp = _round_up(M, tm)

    a_ops = [a.astype(jnp.bfloat16) for a in a_list]
    if Mp != M:
        a_ops = [jnp.zeros((Mp, a.shape[1]), jnp.bfloat16).at[:M, :].set(a)
                 for a in a_ops]
    w_ops = []
    for w in w_list:
        wb = w.astype(jnp.bfloat16)
        if Np != N:
            wb = jnp.zeros((w.shape[0], Np), jnp.bfloat16).at[:, :N].set(wb)
        w_ops.append(wb)
    bias_p = jnp.zeros((1, Np), jnp.float32).at[0, :N].set(bias.astype(jnp.float32))

    grid = (Np // tn, Mp // tm)          # N outer, M inner -> weight tiles reused

    def kernel(*refs):
        a_refs = refs[:p]
        w_refs = refs[p:2 * p]
        bias_ref = refs[2 * p]
        o_ref = refs[2 * p + 1]
        acc = jnp.dot(a_refs[0][...], w_refs[0][...],
                      preferred_element_type=jnp.float32)
        for q in range(1, p):
            acc = acc + jnp.dot(a_refs[q][...], w_refs[q][...],
                                preferred_element_type=jnp.float32)
        o_ref[...] = (acc + bias_ref[...]).astype(o_ref.dtype)

    in_specs = (
        [pl.BlockSpec((tm, a.shape[1]), lambda j, i: (i, 0)) for a in a_list] +
        [pl.BlockSpec((w.shape[0], tn), lambda j, i: (0, j)) for w in w_list] +
        [pl.BlockSpec((1, tn), lambda j, i: (0, j))]
    )

    out = pl.pallas_call(
        kernel,
        out_shape=jax.ShapeDtypeStruct((Mp, Np), out_dtype),
        grid=grid,
        in_specs=in_specs,
        out_specs=pl.BlockSpec((tm, tn), lambda j, i: (i, j)),
        compiler_params=pltpu.CompilerParams(
            dimension_semantics=("parallel", "parallel"),
            vmem_limit_bytes=48 * 1024 * 1024),
        cost_estimate=pl.CostEstimate(
            flops=2 * Mp * Np * sum(a.shape[1] for a in a_list),
            transcendentals=0,
            bytes_accessed=sum(Mp * a.shape[1] * 2 for a in a_list)
                           + sum(w.shape[0] * Np * 2 for w in w_list)
                           + Mp * Np * jnp.dtype(out_dtype).itemsize),
    )(*a_ops, *w_ops, bias_p)

    if Mp != M:
        out = out[:M]
    if Np != N:
        out = out[:, :N]
    return out


# ----------------------------------------------------------------------------
# Bidirectional LSTM recurrence: both directions in one kernel, one grid axis
# ----------------------------------------------------------------------------
def lstm_recurrence_bidir(xproj, whh, mask, hdim, t_blk):
    """xproj: (Tp, Bp, 8H) bf16  (x@W_ih^T + b, gate order [i,f,o,g];
                                   cols [:4H]=forward dir, [4H:]=reverse dir)
       whh:   (2, H, 4H) bf16    (W_hh^T per direction, same gate order)
       mask:  (Tp, Bp, 1) f32    (1 where the timestep is valid, natural order)
       -> (h_fwd, h_rev), each (Tp, Bp, H) bf16 in natural time order
          (zero at invalid/padded steps, like pad_packed_sequence).

    PyTorch math: c = f*c + i*g ; h = o*tanh(c).  Masked steps freeze h/c (so the
    reverse direction enters its first valid frame with zero state) and emit zero.
    The reverse direction is handled purely by index maps: time-block nT-1-t plus a
    reversed in-block index, so no XLA-side flip/stack is needed."""
    Tp, Bp, G8 = xproj.shape
    H = hdim
    G = 4 * H
    assert G8 == 8 * H and Tp % t_blk == 0
    nT = Tp // t_blk
    last = nT - 1
    unroll = min(8, t_blk)

    def kernel(xpf_ref, xpr_ref, mf_ref, mr_ref, whh_ref, of_ref, or_ref,
               hf, cf, hr, cr):
        @pl.when(pl.program_id(0) == 0)
        def _():
            hf[...] = jnp.zeros_like(hf)
            cf[...] = jnp.zeros_like(cf)
            hr[...] = jnp.zeros_like(hr)
            cr[...] = jnp.zeros_like(cr)

        w_f = whh_ref[0]                                  # (H, 4H) bf16
        w_r = whh_ref[1]

        def step(s, carry):
            sr = t_blk - 1 - s                            # reverse in-block index
            # two independent chains -> ILP on the latency-bound serial path
            g_f = xpf_ref[s] + jnp.dot(hf[...].astype(jnp.bfloat16), w_f,
                                       preferred_element_type=jnp.float32)
            g_r = xpr_ref[sr] + jnp.dot(hr[...].astype(jnp.bfloat16), w_r,
                                        preferred_element_type=jnp.float32)
            # gate order [i, f, o, g]: sigmoid on 3H, tanh on H (halved EUP work)
            sig_f = jax.nn.sigmoid(g_f[:, :3 * H])
            sig_r = jax.nn.sigmoid(g_r[:, :3 * H])
            gg_f = jnp.tanh(g_f[:, 3 * H:])
            gg_r = jnp.tanh(g_r[:, 3 * H:])
            c_new_f = sig_f[:, H:2 * H] * cf[...] + sig_f[:, :H] * gg_f
            c_new_r = sig_r[:, H:2 * H] * cr[...] + sig_r[:, :H] * gg_r
            h_new_f = sig_f[:, 2 * H:3 * H] * jnp.tanh(c_new_f)
            h_new_r = sig_r[:, 2 * H:3 * H] * jnp.tanh(c_new_r)
            mb_f = mf_ref[s] > 0.5                        # (Bp, 1) bool
            mb_r = mr_ref[sr] > 0.5
            cf[...] = jnp.where(mb_f, c_new_f, cf[...])
            cr[...] = jnp.where(mb_r, c_new_r, cr[...])
            hf[...] = jnp.where(mb_f, h_new_f, hf[...])
            hr[...] = jnp.where(mb_r, h_new_r, hr[...])
            of_ref[s] = jnp.where(mb_f, h_new_f, 0.0).astype(of_ref.dtype)
            or_ref[sr] = jnp.where(mb_r, h_new_r, 0.0).astype(or_ref.dtype)
            return carry

        jax.lax.fori_loop(0, t_blk, step, 0, unroll=unroll)

    return pl.pallas_call(
        kernel,
        out_shape=(jax.ShapeDtypeStruct((Tp, Bp, H), jnp.bfloat16),
                   jax.ShapeDtypeStruct((Tp, Bp, H), jnp.bfloat16)),
        grid=(nT,),
        in_specs=[
            pl.BlockSpec((t_blk, Bp, G), lambda t: (t, 0, 0)),         # fwd gates
            pl.BlockSpec((t_blk, Bp, G), lambda t: (last - t, 0, 1)),  # rev gates
            pl.BlockSpec((t_blk, Bp, 1), lambda t: (t, 0, 0)),         # fwd mask
            pl.BlockSpec((t_blk, Bp, 1), lambda t: (last - t, 0, 0)),  # rev mask
            pl.BlockSpec((2, H, G), lambda t: (0, 0, 0)),              # W_hh
        ],
        out_specs=(
            pl.BlockSpec((t_blk, Bp, H), lambda t: (t, 0, 0)),
            pl.BlockSpec((t_blk, Bp, H), lambda t: (last - t, 0, 0)),
        ),
        scratch_shapes=[pltpu.VMEM((Bp, H), jnp.float32)] * 4,
        compiler_params=pltpu.CompilerParams(
            dimension_semantics=("arbitrary",),
            vmem_limit_bytes=32 * 1024 * 1024),
    )(xproj, xproj, mask, mask, whh)


# ----------------------------------------------------------------------------
# Host-side (XLA) weight plumbing
# ----------------------------------------------------------------------------
def _permute_gates(w):
    """Reorder PyTorch LSTM gate blocks [i, f, g, o] -> [i, f, o, g] along axis 0."""
    i, f, g, o = jnp.split(w, 4, axis=0)
    return jnp.concatenate([i, f, o, g], axis=0)


def _layer_proj_weights(lp):
    """Fused input-projection weights for both directions (one matmul per layer)."""
    w_f = _permute_gates(lp['w_ih_f']).T                      # (Din, 4H)
    w_r = _permute_gates(lp['w_ih_r']).T
    w_cat = jnp.concatenate([w_f, w_r], axis=1)               # (Din, 8H)
    b_cat = jnp.concatenate([_permute_gates(lp['b_ih_f'] + lp['b_hh_f']),
                             _permute_gates(lp['b_ih_r'] + lp['b_hh_r'])], axis=0)
    whh = jnp.stack([_permute_gates(lp['w_hh_f']).T,
                     _permute_gates(lp['w_hh_r']).T], axis=0)  # (2, H, 4H)
    return w_cat, b_cat, whh


def _fold_bn_into_weights(w_cat, b_cat, k_sizes, affines):
    """Fold the previous layer's BN affine (y*scale+shift) into the consuming matmul:
       W' = scale[:,None] * W ; bias' = bias + shift @ W.  w_cat rows are split per
       input chunk (forward / reverse LSTM halves)."""
    parts = []
    bias = b_cat.astype(jnp.float32)
    off = 0
    for k, aff in zip(k_sizes, affines):
        w_i = w_cat[off:off + k]
        if aff is not None:
            scale, shift = aff
            bias = bias + shift @ w_i
            w_i = w_i * scale[:, None]
        parts.append(w_i)
        off += k
    return parts, bias


def bn_scale_shift(h, mask, gamma, beta, eps=1e-5):
    """MaskedBatchNorm1d (training-mode batch statistics over valid frames only)
    expressed as bn(y) = y*scale + shift, to be folded into the next matmul.
    TODO(synk): running-stat tracking / eval mode not implemented."""
    hf = h.astype(jnp.float32)
    n = jnp.maximum(jnp.sum(mask), 1.0)
    mean = jnp.sum(hf * mask, axis=(0, 1)) / n
    var = jnp.sum(jnp.square(hf - mean) * mask, axis=(0, 1)) / n
    scale = gamma / jnp.sqrt(var + eps)
    shift = beta - mean * scale
    return scale, shift


# ----------------------------------------------------------------------------
# BLSTMN forward
# ----------------------------------------------------------------------------
def blstmn_forward(params, x, ilens, *, hdim, n_layers):
    """Returns (logits (B, T, num_classes), lens)."""
    B, T, idim = x.shape
    H = hdim
    # keeps the 4H gate slab (projection block width) a multiple of 128 lanes
    assert H % 32 == 0, "hdim must be a multiple of 32"

    Bp = _round_up(B, 8)                      # sublane-aligned batch
    if T >= 64:
        t_blk = 32
    elif T >= 16:
        t_blk = 16
    else:
        t_blk = _round_up(T, 8)
    Tp = _round_up(T, t_blk)

    # one transpose in (and one out at the end); everything else stays time-major
    x_p = jnp.zeros((Bp, Tp, idim), jnp.float32).at[:B, :T].set(x.astype(jnp.float32))
    x_tm = jnp.transpose(x_p, (1, 0, 2))                       # (Tp, Bp, idim)
    ilens_p = jnp.zeros((Bp,), jnp.int32).at[:B].set(ilens.astype(jnp.int32))
    mask = (jnp.arange(Tp)[:, None] < ilens_p[None, :]
            ).astype(jnp.float32)[:, :, None]                  # (Tp, Bp, 1)

    cur = [x_tm.reshape(Tp * Bp, idim)]
    affines = [None]

    for i in range(n_layers):
        lp = params[f'lstm{i}']
        w_cat, b_cat, whh = _layer_proj_weights(lp)
        w_parts, bias_eff = _fold_bn_into_weights(
            w_cat, b_cat, [a.shape[1] for a in cur], affines)
        xproj = fused_linear(cur, w_parts, bias_eff, out_dtype=jnp.bfloat16)
        xproj = xproj.reshape(Tp, Bp, 8 * H)                   # free (contiguous)

        h_f, h_r = lstm_recurrence_bidir(
            xproj, whh.astype(jnp.bfloat16), mask, H, t_blk)   # (Tp, Bp, H) bf16 x2

        gamma = params[f'bn{i}_gamma']
        beta = params[f'bn{i}_beta']
        affines = [bn_scale_shift(h_f, mask, gamma[:H], beta[:H]),
                   bn_scale_shift(h_r, mask, gamma[H:], beta[H:])]
        cur = [h_f.reshape(Tp * Bp, H), h_r.reshape(Tp * Bp, H)]
        # TODO(synk): nn.Dropout omitted (inference-mode identity).

    # final Linear with the last BN folded in
    # TODO(synk): the spec writes nn.Linear(hdim, num_classes), which would shape-
    # mismatch the (B,T,2*hdim) BLSTM output; implemented as Linear(2*hdim, nc).
    w_lin = params['lin_w'].T                                   # (2H, num_classes)
    w_parts, bias_eff = _fold_bn_into_weights(
        w_lin, params['lin_b'], [a.shape[1] for a in cur], affines)
    logits = fused_linear(cur, w_parts, bias_eff, out_dtype=jnp.float32)
    nc = logits.shape[1]
    logits = logits.reshape(Tp, Bp, nc)[:T, :B].transpose(1, 0, 2)  # (B, T, nc)
    return logits, ilens


# ----------------------------------------------------------------------------
# Deterministic parameter init (matching the PyTorch module's shapes)
# ----------------------------------------------------------------------------
def init_params(key, idim, hdim, n_layers, num_classes):
    params = {}
    keys = iter(jax.random.split(key, 8 * n_layers + 8))

    def uniform(shape, fan_in):
        bound = 1.0 / np.sqrt(fan_in)
        return jax.random.uniform(next(keys), shape, jnp.float32, -bound, bound)

    for i in range(n_layers):
        din = idim if i == 0 else 2 * hdim
        params[f'lstm{i}'] = {
            'w_ih_f': uniform((4 * hdim, din), hdim),
            'w_hh_f': uniform((4 * hdim, hdim), hdim),
            'b_ih_f': uniform((4 * hdim,), hdim),
            'b_hh_f': uniform((4 * hdim,), hdim),
            'w_ih_r': uniform((4 * hdim, din), hdim),
            'w_hh_r': uniform((4 * hdim, hdim), hdim),
            'b_ih_r': uniform((4 * hdim,), hdim),
            'b_hh_r': uniform((4 * hdim,), hdim),
        }
        params[f'bn{i}_gamma'] = jnp.ones((2 * hdim,), jnp.float32)
        params[f'bn{i}_beta'] = jnp.zeros((2 * hdim,), jnp.float32)

    params['lin_w'] = uniform((num_classes, 2 * hdim), 2 * hdim)
    params['lin_b'] = uniform((num_classes,), 2 * hdim)
    return params


# ----------------------------------------------------------------------------
if __name__ == "__main__":
    B, T = 2, 8
    idim = 64
    hdim = 32
    n_layers = 2
    num_classes = 16

    key = jax.random.PRNGKey(0)
    pkey, xkey = jax.random.split(key)
    params = init_params(pkey, idim, hdim, n_layers, num_classes)

    x = jax.random.normal(xkey, (B, T, idim), jnp.float32)
    ilens = jnp.array([T, T - 2], dtype=jnp.int32)   # ragged batch exercises masking

    fwd = jax.jit(functools.partial(blstmn_forward, hdim=hdim, n_layers=n_layers))
    out, olens = fwd(params, x, ilens)
    out = jax.block_until_ready(out)
    olens = jax.block_until_ready(olens)

    assert out.shape == (B, T, num_classes), out.shape
    assert olens.shape == (B,)
    assert bool(jnp.all(jnp.isfinite(out)))
    print("KERNEL_OK")
</pallas_src>

<mosaic_0001>
module attributes {stable_mosaic.version = 11 : i64} {
  func.func @kernel(%arg0: i32, %arg1: i32, %arg2: memref<64x64xbf16, #tpu.memory_space<vmem>>, %arg3: memref<64x256xbf16, #tpu.memory_space<vmem>>, %arg4: memref<1x256xf32, #tpu.memory_space<vmem>>, %arg5: memref<64x256xbf16, #tpu.memory_space<vmem>>) attributes {dimension_semantics = [#tpu.dimension_semantics<parallel>, #tpu.dimension_semantics<parallel>], iteration_bounds = array<i64: 1, 1>, scalar_prefetch = 0 : i64, scratch_operands = 0 : i64, tpu.core_type = #tpu.core_type<tc>, window_params = [{transform_indices = @transform_0, window_bounds = array<i64: 64, 64>}, {transform_indices = @transform_1, window_bounds = array<i64: 64, 256>}, {transform_indices = @transform_2, window_bounds = array<i64: 1, 256>}, {transform_indices = @transform_3, window_bounds = array<i64: 64, 256>}]} {
    %c0 = arith.constant 0 : index
    %c0_0 = arith.constant 0 : index
    %0 = vector.load %arg2[%c0, %c0_0] : memref<64x64xbf16, #tpu.memory_space<vmem>>, vector<64x64xbf16>
    %c0_1 = arith.constant 0 : index
    %c0_2 = arith.constant 0 : index
    %1 = vector.load %arg3[%c0_1, %c0_2] : memref<64x256xbf16, #tpu.memory_space<vmem>>, vector<64x256xbf16>
    %cst = arith.constant dense<0.000000e+00> : vector<64x256xf32>
    %2 = tpu.matmul %0, %1, %cst {dimension_numbers = #tpu.dot_dimension_numbers<[1], [0], [0], [1], [0, 0, 1, 1], [], []>} : vector<64x64xbf16>, vector<64x256xbf16>, vector<64x256xf32> -> vector<64x256xf32>
    %c0_3 = arith.constant 0 : index
    %c0_4 = arith.constant 0 : index
    %3 = vector.load %arg4[%c0_3, %c0_4] : memref<1x256xf32, #tpu.memory_space<vmem>>, vector<1x256xf32>
    %4 = vector.broadcast %3 : vector<1x256xf32> to vector<64x256xf32>
    %5 = arith.addf %2, %4 : vector<64x256xf32>
    %6 = arith.truncf %5 : vector<64x256xf32> to vector<64x256xbf16>
    %c0_5 = arith.constant 0 : index
    %c0_6 = arith.constant 0 : index
    %7 = vector.load %arg5[%c0_5, %c0_6] : memref<64x256xbf16, #tpu.memory_space<vmem>>, vector<64x256xbf16>
    tpu.vector_store %arg5[%c0_5, %c0_6], %6 {strides = array<i32>} : memref<64x256xbf16, #tpu.memory_space<vmem>>, vector<64x256xbf16>,
    return
  }
  func.func @transform_0(%arg0: i32, %arg1: i32) -> (i32, i32) {
    %c0_i32 = arith.constant 0 : i32
    %c0_i32_0 = arith.constant 0 : i32
    return %arg1, %c0_i32 : i32, i32
  }
  func.func @transform_1(%arg0: i32, %arg1: i32) -> (i32, i32) {
    %c0_i32 = arith.constant 0 : i32
    %c0_i32_0 = arith.constant 0 : i32
    return %c0_i32, %arg0 : i32, i32
  }
  func.func @transform_2(%arg0: i32, %arg1: i32) -> (i32, i32) {
    %c0_i32 = arith.constant 0 : i32
    %c0_i32_0 = arith.constant 0 : i32
    return %c0_i32, %arg0 : i32, i32
  }
  func.func @transform_3(%arg0: i32, %arg1: i32) -> (i32, i32) {
    %c0_i32 = arith.constant 0 : i32
    return %arg1, %arg0 : i32, i32
  }
}

module attributes {stable_mosaic.version = 11 : i64} {
  func.func @kernel(%arg0: i32, %arg1: memref<8x8x128xbf16, #tpu.memory_space<vmem>>, %arg2: memref<8x8x128xbf16, #tpu.memory_space<vmem>>, %arg3: memref<8x8x1xf32, #tpu.memory_space<vmem>>, %arg4: memref<8x8x1xf32, #tpu.memory_space<vmem>>, %arg5: memref<2x32x128xbf16, #tpu.memory_space<vmem>>, %arg6: memref<8x8x32xbf16, #tpu.memory_space<vmem>>, %arg7: memref<8x8x32xbf16, #tpu.memory_space<vmem>>, %arg8: memref<8x32xf32, #tpu.memory_space<vmem>>, %arg9: memref<8x32xf32, #tpu.memory_space<vmem>>, %arg10: memref<8x32xf32, #tpu.memory_space<vmem>>, %arg11: memref<8x32xf32, #tpu.memory_space<vmem>>) attributes {dimension_semantics = [#tpu.dimension_semantics<arbitrary>], iteration_bounds = array<i64: 1>, scalar_prefetch = 0 : i64, scratch_operands = 4 : i64, tpu.core_type = #tpu.core_type<tc>, window_params = [{transform_indices = @transform_0, window_bounds = array<i64: 8, 8, 128>}, {transform_indices = @transform_1, window_bounds = array<i64: 8, 8, 128>}, {transform_indices = @transform_2, window_bounds = array<i64: 8, 8, 1>}, {transform_indices = @transform_3, window_bounds = array<i64: 8, 8, 1>}, {pipeline_mode = #tpu.pipeline_mode<synchronous>, transform_indices = @transform_4, window_bounds = array<i64: 2, 32, 128>}, {transform_indices = @transform_5, window_bounds = array<i64: 8, 8, 32>}, {transform_indices = @transform_6, window_bounds = array<i64: 8, 8, 32>}]} {
    %c0_i32 = arith.constant 0 : i32
    %0 = arith.cmpi eq, %arg0, %c0_i32 : i32
    %1 = arith.extui %0 : i1 to i32
    %c0_i32_0 = arith.constant 0 : i32
    %2 = arith.cmpi ne, %1, %c0_i32_0 : i32
    scf.if %2 {
      %cst_365 = arith.constant 0.000000e+00 : f32
      %799 = vector.broadcast %cst_365 : f32 to vector<8x32xf32>
      %c0_366 = arith.constant 0 : index
      %c0_367 = arith.constant 0 : index
      %800 = vector.load %arg8[%c0_366, %c0_367] : memref<8x32xf32, #tpu.memory_space<vmem>>, vector<8x32xf32>
      tpu.vector_store %arg8[%c0_366, %c0_367], %799 {strides = array<i32>} : memref<8x32xf32, #tpu.memory_space<vmem>>, vector<8x32xf32>,
      %cst_368 = arith.constant 0.000000e+00 : f32
      %801 = vector.broadcast %cst_368 : f32 to vector<8x32xf32>
      %c0_369 = arith.constant 0 : index
      %c0_370 = arith.constant 0 : index
      %802 = vector.load %arg9[%c0_369, %c0_370] : memref<8x32xf32, #tpu.memory_space<vmem>>, vector<8x32xf32>
      tpu.vector_store %arg9[%c0_369, %c0_370], %801 {strides = array<i32>} : memref<8x32xf32, #tpu.memory_space<vmem>>, vector<8x32xf32>,
      %cst_371 = arith.constant 0.000000e+00 : f32
      %803 = vector.broadcast %cst_371 : f32 to vector<8x32xf32>
      %c0_372 = arith.constant 0 : index
      %c0_373 = arith.constant 0 : index
      %804 = vector.load %arg10[%c0_372, %c0_373] : memref<8x32xf32, #tpu.memory_space<vmem>>, vector<8x32xf32>
      tpu.vector_store %arg10[%c0_372, %c0_373], %803 {strides = array<i32>} : memref<8x32xf32, #tpu.memory_space<vmem>>, vector<8x32xf32>,
      %cst_374 = arith.constant 0.000000e+00 : f32
      %805 = vector.broadcast %cst_374 : f32 to vector<8x32xf32>
      %c0_375 = arith.constant 0 : index
      %c0_376 = arith.constant 0 : index
      %806 = vector.load %arg11[%c0_375, %c0_376] : memref<8x32xf32, #tpu.memory_space<vmem>>, vector<8x32xf32>
      tpu.vector_store %arg11[%c0_375, %c0_376], %805 {strides = array<i32>} : memref<8x32xf32, #tpu.memory_space<vmem>>, vector<8x32xf32>,
    } else {
    }
    %c0 = arith.constant 0 : index
    %c0_1 = arith.constant 0 : index
    %c0_2 = arith.constant 0 : index
    %3 = vector.load %arg5[%c0, %c0_1, %c0_2] : memref<2x32x128xbf16, #tpu.memory_space<vmem>>, vector<1x32x128xbf16>
    %4 = vector.shape_cast %3 : vector<1x32x128xbf16> to vector<32x128xbf16>
    %c1 = arith.constant 1 : index
    %c0_3 = arith.constant 0 : index
    %c0_4 = arith.constant 0 : index
    %5 = vector.load %arg5[%c1, %c0_3, %c0_4] : memref<2x32x128xbf16, #tpu.memory_space<vmem>>, vector<1x32x128xbf16>
    %6 = vector.shape_cast %5 : vector<1x32x128xbf16> to vector<32x128xbf16>
    %c0_i32_5 = arith.constant 0 : i32
    %c7_i32 = arith.constant 7 : i32
    %7 = arith.subi %c7_i32, %c0_i32_5 : i32
    %8 = arith.index_cast %c0_i32_5 : i32 to index
    %c0_6 = arith.constant 0 : index
    %c0_7 = arith.constant 0 : index
    %9 = vector.load %arg1[%8, %c0_6, %c0_7] : memref<8x8x128xbf16, #tpu.memory_space<vmem>>, vector<1x8x128xbf16>
    %10 = vector.shape_cast %9 : vector<1x8x128xbf16> to vector<8x128xbf16>
    %c0_8 = arith.constant 0 : index
    %c0_9 = arith.constant 0 : index
    %11 = vector.load %arg8[%c0_8, %c0_9] : memref<8x32xf32, #tpu.memory_space<vmem>>, vector<8x32xf32>
    %12 = arith.truncf %11 : vector<8x32xf32> to vector<8x32xbf16>
    %cst = arith.constant dense<0.000000e+00> : vector<8x128xf32>
    %13 = tpu.matmul %12, %4, %cst {dimension_numbers = #tpu.dot_dimension_numbers<[1], [0], [0], [1], [0, 0, 1, 1], [], []>} : vector<8x32xbf16>, vector<32x128xbf16>, vector<8x128xf32> -> vector<8x128xf32>
    %14 = arith.extf %10 : vector<8x128xbf16> to vector<8x128xf32>
    %15 = arith.addf %14, %13 : vector<8x128xf32>
    %16 = arith.index_cast %7 : i32 to index
    %c0_10 = arith.constant 0 : index
    %c0_11 = arith.constant 0 : index
    %17 = vector.load %arg2[%16, %c0_10, %c0_11] : memref<8x8x128xbf16, #tpu.memory_space<vmem>>, vector<1x8x128xbf16>
    %18 = vector.shape_cast %17 : vector<1x8x128xbf16> to vector<8x128xbf16>
    %c0_12 = arith.constant 0 : index
    %c0_13 = arith.constant 0 : index
    %19 = vector.load %arg10[%c0_12, %c0_13] : memref<8x32xf32, #tpu.memory_space<vmem>>, vector<8x32xf32>
    %20 = arith.truncf %19 : vector<8x32xf32> to vector<8x32xbf16>
    %cst_14 = arith.constant dense<0.000000e+00> : vector<8x128xf32>
    %21 = tpu.matmul %20, %6, %cst_14 {dimension_numbers = #tpu.dot_dimension_numbers<[1], [0], [0], [1], [0, 0, 1, 1], [], []>} : vector<8x32xbf16>, vector<32x128xbf16>, vector<8x128xf32> -> vector<8x128xf32>
    %22 = arith.extf %18 : vector<8x128xbf16> to vector<8x128xf32>
    %23 = arith.addf %22, %21 : vector<8x128xf32>
    %24 = vector.extract_strided_slice %15 {offsets = [0, 0], sizes = [8, 96], strides = [1, 1]} : vector<8x128xf32> to vector<8x96xf32>
    %25 = arith.negf %24 : vector<8x96xf32>
    %26 = math.exp %25 : vector<8x96xf32>
    %cst_15 = arith.constant 1.000000e+00 : f32
    %27 = vector.broadcast %cst_15 : f32 to vector<8x96xf32>
    %28 = arith.addf %27, %26 : vector<8x96xf32>
    %29 = arith.divf %27, %28 : vector<8x96xf32>
    %30 = vector.extract_strided_slice %23 {offsets = [0, 0], sizes = [8, 96], strides = [1, 1]} : vector<8x128xf32> to vector<8x96xf32>
    %31 = arith.negf %30 : vector<8x96xf32>
    %32 = math.exp %31 : vector<8x96xf32>
    %cst_16 = arith.constant 1.000000e+00 : f32
    %33 = vector.broadcast %cst_16 : f32 to vector<8x96xf32>
    %34 = arith.addf %33, %32 : vector<8x96xf32>
    %35 = arith.divf %33, %34 : vector<8x96xf32>
    %36 = vector.extract_strided_slice %15 {offsets = [0, 96], sizes = [8, 32], strides = [1, 1]} : vector<8x128xf32> to vector<8x32xf32>
    %37 = math.tanh %36 : vector<8x32xf32>
    %38 = vector.extract_strided_slice %23 {offsets = [0, 96], sizes = [8, 32], strides = [1, 1]} : vector<8x128xf32> to vector<8x32xf32>
    %39 = math.tanh %38 : vector<8x32xf32>
    %40 = vector.extract_strided_slice %29 {offsets = [0, 32], sizes = [8, 32], strides = [1, 1]} : vector<8x96xf32> to vector<8x32xf32>
    %c0_17 = arith.constant 0 : index
    %c0_18 = arith.constant 0 : index
    %41 = vector.load %arg9[%c0_17, %c0_18] : memref<8x32xf32, #tpu.memory_space<vmem>>, vector<8x32xf32>
    %42 = arith.mulf %40, %41 : vector<8x32xf32>
    %43 = vector.extract_strided_slice %29 {offsets = [0, 0], sizes = [8, 32], strides = [1, 1]} : vector<8x96xf32> to vector<8x32xf32>
    %44 = arith.mulf %43, %37 : vector<8x32xf32>
    %45 = arith.addf %42, %44 : vector<8x32xf32>
    %46 = vector.extract_strided_slice %35 {offsets = [0, 32], sizes = [8, 32], strides = [1, 1]} : vector<8x96xf32> to vector<8x32xf32>
    %c0_19 = arith.constant 0 : index
    %c0_20 = arith.constant 0 : index
    %47 = vector.load %arg11[%c0_19, %c0_20] : memref<8x32xf32, #tpu.memory_space<vmem>>, vector<8x32xf32>
    %48 = arith.mulf %46, %47 : vector<8x32xf32>
    %49 = vector.extract_strided_slice %35 {offsets = [0, 0], sizes = [8, 32], strides = [1, 1]} : vector<8x96xf32> to vector<8x32xf32>
    %50 = arith.mulf %49, %39 : vector<8x32xf32>
    %51 = arith.addf %48, %50 : vector<8x32xf32>
    %52 = vector.extract_strided_slice %29 {offsets = [0, 64], sizes = [8, 32], strides = [1, 1]} : vector<8x96xf32> to vector<8x32xf32>
    %53 = math.tanh %45 : vector<8x32xf32>
    %54 = arith.mulf %52, %53 : vector<8x32xf32>
    %55 = vector.extract_strided_slice %35 {offsets = [0, 64], sizes = [8, 32], strides = [1, 1]} : vector<8x96xf32> to vector<8x32xf32>
    %56 = math.tanh %51 : vector<8x32xf32>
    %57 = arith.mulf %55, %56 : vector<8x32xf32>
    %58 = arith.index_cast %c0_i32_5 : i32 to index
    %c0_21 = arith.constant 0 : index
    %c0_22 = arith.constant 0 : index
    %59 = vector.load %arg3[%58, %c0_21, %c0_22] : memref<8x8x1xf32, #tpu.memory_space<vmem>>, vector<1x8x1xf32>
    %60 = vector.shape_cast %59 : vector<1x8x1xf32> to vector<8x1xf32>
    %cst_23 = arith.constant 5.000000e-01 : f32
    %61 = vector.broadcast %cst_23 : f32 to vector<8x1xf32>
    %62 = arith.cmpf ogt, %60, %61 : vector<8x1xf32>
    %63 = arith.index_cast %7 : i32 to index
    %c0_24 = arith.constant 0 : index
    %c0_25 = arith.constant 0 : index
    %64 = vector.load %arg4[%63, %c0_24, %c0_25] : memref<8x8x1xf32, #tpu.memory_space<vmem>>, vector<1x8x1xf32>
    %65 = vector.shape_cast %64 : vector<1x8x1xf32> to vector<8x1xf32>
    %cst_26 = arith.constant 5.000000e-01 : f32
    %66 = vector.broadcast %cst_26 : f32 to vector<8x1xf32>
    %67 = arith.cmpf ogt, %65, %66 : vector<8x1xf32>
    %c0_27 = arith.constant 0 : index
    %c0_28 = arith.constant 0 : index
    %68 = vector.load %arg9[%c0_27, %c0_28] : memref<8x32xf32, #tpu.memory_space<vmem>>, vector<8x32xf32>
    %69 = vector.shape_cast %62 : vector<8x1xi1> to vector<8x1xi1>
    %70 = vector.broadcast %69 : vector<8x1xi1> to vector<8x32xi1>
    %71 = arith.select %70, %45, %68 : vector<8x32xi1>, vector<8x32xf32>
    %c0_29 = arith.constant 0 : index
    %c0_30 = arith.constant 0 : index
    %72 = vector.load %arg9[%c0_29, %c0_30] : memref<8x32xf32, #tpu.memory_space<vmem>>, vector<8x32xf32>
    tpu.vector_store %arg9[%c0_29, %c0_30], %71 {strides = array<i32>} : memref<8x32xf32, #tpu.memory_space<vmem>>, vector<8x32xf32>,
    %c0_31 = arith.constant 0 : index
    %c0_32 = arith.constant 0 : index
    %73 = vector.load %arg11[%c0_31, %c0_32] : memref<8x32xf32, #tpu.memory_space<vmem>>, vector<8x32xf32>
    %74 = vector.shape_cast %67 : vector<8x1xi1> to vector<8x1xi1>
    %75 = vector.broadcast %74 : vector<8x1xi1> to vector<8x32xi1>
    %76 = arith.select %75, %51, %73 : vector<8x32xi1>, vector<8x32xf32>
    %c0_33 = arith.constant 0 : index
    %c0_34 = arith.constant 0 : index
    %77 = vector.load %arg11[%c0_33, %c0_34] : memref<8x32xf32, #tpu.memory_space<vmem>>, vector<8x32xf32>
    tpu.vector_store %arg11[%c0_33, %c0_34], %76 {strides = array<i32>} : memref<8x32xf32, #tpu.memory_space<vmem>>, vector<8x32xf32>,
    %c0_35 = arith.constant 0 : index
    %c0_36 = arith.constant 0 : index
    %78 = vector.load %arg8[%c0_35, %c0_36] : memref<8x32xf32, #tpu.memory_space<vmem>>, vector<8x32xf32>
    %79 = vector.shape_cast %62 : vector<8x1xi1> to vector<8x1xi1>
    %80 = vector.broadcast %79 : vector<8x1xi1> to vector<8x32xi1>
    %81 = arith.select %80, %54, %78 : vector<8x32xi1>, vector<8x32xf32>
    %c0_37 = arith.constant 0 : index
    %c0_38 = arith.constant 0 : index
    %82 = vector.load %arg8[%c0_37, %c0_38] : memref<8x32xf32, #tpu.memory_space<vmem>>, vector<8x32xf32>
    tpu.vector_store %arg8[%c0_37, %c0_38], %81 {strides = array<i32>} : memref<8x32xf32, #tpu.memory_space<vmem>>, vector<8x32xf32>,
    %c0_39 = arith.constant 0 : index
    %c0_40 = arith.constant 0 : index
    %83 = vector.load %arg10[%c0_39, %c0_40] : memref<8x32xf32, #tpu.memory_space<vmem>>, vector<8x32xf32>
    %84 = vector.shape_cast %67 : vector<8x1xi1> to vector<8x1xi1>
    %85 = vector.broadcast %84 : vector<8x1xi1> to vector<8x32xi1>
    %86 = arith.select %85, %57, %83 : vector<8x32xi1>, vector<8x32xf32>
    %c0_41 = arith.constant 0 : index
    %c0_42 = arith.constant 0 : index
    %87 = vector.load %arg10[%c0_41, %c0_42] : memref<8x32xf32, #tpu.memory_space<vmem>>, vector<8x32xf32>
    tpu.vector_store %arg10[%c0_41, %c0_42], %86 {strides = array<i32>} : memref<8x32xf32, #tpu.memory_space<vmem>>, vector<8x32xf32>,
    %cst_43 = arith.constant 0.000000e+00 : f32
    %88 = vector.shape_cast %62 : vector<8x1xi1> to vector<8x1xi1>
    %89 = vector.broadcast %88 : vector<8x1xi1> to vector<8x32xi1>
    %90 = vector.broadcast %cst_43 : f32 to vector<8x32xf32>
    %91 = arith.select %89, %54, %90 : vector<8x32xi1>, vector<8x32xf32>
    %92 = arith.truncf %91 : vector<8x32xf32> to vector<8x32xbf16>
    %93 = arith.index_cast %c0_i32_5 : i32 to index
    %c0_44 = arith.constant 0 : index
    %c0_45 = arith.constant 0 : index
    %94 = vector.load %arg6[%93, %c0_44, %c0_45] : memref<8x8x32xbf16, #tpu.memory_space<vmem>>, vector<1x8x32xbf16>
    %95 = vector.shape_cast %94 : vector<1x8x32xbf16> to vector<8x32xbf16>
    %96 = vector.shape_cast %92 : vector<8x32xbf16> to vector<1x8x32xbf16>
    tpu.vector_store %arg6[%93, %c0_44, %c0_45], %96 {strides = array<i32>} : memref<8x8x32xbf16, #tpu.memory_space<vmem>>, vector<1x8x32xbf16>,
    %cst_46 = arith.constant 0.000000e+00 : f32
    %97 = vector.shape_cast %67 : vector<8x1xi1> to vector<8x1xi1>
    %98 = vector.broadcast %97 : vector<8x1xi1> to vector<8x32xi1>
    %99 = vector.broadcast %cst_46 : f32 to vector<8x32xf32>
    %100 = arith.select %98, %57, %99 : vector<8x32xi1>, vector<8x32xf32>
    %101 = arith.truncf %100 : vector<8x32xf32> to vector<8x32xbf16>
    %102 = arith.index_cast %7 : i32 to index
    %c0_47 = arith.constant 0 : index
    %c0_48 = arith.constant 0 : index
    %103 = vector.load %arg7[%102, %c0_47, %c0_48] : memref<8x8x32xbf16, #tpu.memory_space<vmem>>, vector<1x8x32xbf16>
    %104 = vector.shape_cast %103 : vector<1x8x32xbf16> to vector<8x32xbf16>
    %105 = vector.shape_cast %101 : vector<8x32xbf16> to vector<1x8x32xbf16>
    tpu.vector_store %arg7[%102, %c0_47, %c0_48], %105 {strides = array<i32>} : memref<8x8x32xbf16, #tpu.memory_space<vmem>>, vector<1x8x32xbf16>,
    %c1_i32 = arith.constant 1 : i32
    %c7_i32_49 = arith.constant 7 : i32
    %106 = arith.subi %c7_i32_49, %c1_i32 : i32
    %107 = arith.index_cast %c1_i32 : i32 to index
    %c0_50 = arith.constant 0 : index
    %c0_51 = arith.constant 0 : index
    %108 = vector.load %arg1[%107, %c0_50, %c0_51] : memref<8x8x128xbf16, #tpu.memory_space<vmem>>, vector<1x8x128xbf16>
    %109 = vector.shape_cast %108 : vector<1x8x128xbf16> to vector<8x128xbf16>
    %c0_52 = arith.constant 0 : index
    %c0_53 = arith.constant 0 : index
    %110 = vector.load %arg8[%c0_52, %c0_53] : memref<8x32xf32, #tpu.memory_space<vmem>>, vector<8x32xf32>
    %111 = arith.truncf %110 : vector<8x32xf32> to vector<8x32xbf16>
    %cst_54 = arith.constant dense<0.000000e+00> : vector<8x128xf32>
    %112 = tpu.matmul %111, %4, %cst_54 {dimension_numbers = #tpu.dot_dimension_numbers<[1], [0], [0], [1], [0, 0, 1, 1], [], []>} : vector<8x32xbf16>, vector<32x128xbf16>, vector<8x128xf32> -> vector<8x128xf32>
    %113 = arith.extf %109 : vector<8x128xbf16> to vector<8x128xf32>
    %114 = arith.addf %113, %112 : vector<8x128xf32>
    %115 = arith.index_cast %106 : i32 to index
    %c0_55 = arith.constant 0 : index
    %c0_56 = arith.constant 0 : index
    %116 = vector.load %arg2[%115, %c0_55, %c0_56] : memref<8x8x128xbf16, #tpu.memory_space<vmem>>, vector<1x8x128xbf16>
    %117 = vector.shape_cast %116 : vector<1x8x128xbf16> to vector<8x128xbf16>
    %c0_57 = arith.constant 0 : index
    %c0_58 = arith.constant 0 : index
    %118 = vector.load %arg10[%c0_57, %c0_58] : memref<8x32xf32, #tpu.memory_space<vmem>>, vector<8x32xf32>
    %119 = arith.truncf %118 : vector<8x32xf32> to vector<8x32xbf16>
    %cst_59 = arith.constant dense<0.000000e+00> : vector<8x128xf32>
    %120 = tpu.matmul %119, %6, %cst_59 {dimension_numbers = #tpu.dot_dimension_numbers<[1], [0], [0], [1], [0, 0, 1, 1], [], []>} : vector<8x32xbf16>, vector<32x128xbf16>, vector<8x128xf32> -> vector<8x128xf32>
    %121 = arith.extf %117 : vector<8x128xbf16> to vector<8x128xf32>
    %122 = arith.addf %121, %120 : vector<8x128xf32>
    %123 = vector.extract_strided_slice %114 {offsets = [0, 0], sizes = [8, 96], strides = [1, 1]} : vector<8x128xf32> to vector<8x96xf32>
    %124 = arith.negf %123 : vector<8x96xf32>
    %125 = math.exp %124 : vector<8x96xf32>
    %cst_60 = arith.constant 1.000000e+00 : f32
    %126 = vector.broadcast %cst_60 : f32 to vector<8x96xf32>
    %127 = arith.addf %126, %125 : vector<8x96xf32>
    %128 = arith.divf %126, %127 : vector<8x96xf32>
    %129 = vector.extract_strided_slice %122 {offsets = [0, 0], sizes = [8, 96], strides = [1, 1]} : vector<8x128xf32> to vector<8x96xf32>
    %130 = arith.negf %129 : vector<8x96xf32>
    %131 = math.exp %130 : vector<8x96xf32>
    %cst_61 = arith.constant 1.000000e+00 : f32
    %132 = vector.broadcast %cst_61 : f32 to vector<8x96xf32>
    %133 = arith.addf %132, %131 : vector<8x96xf32>
    %134 = arith.divf %132, %133 : vector<8x96xf32>
    %135 = vector.extract_strided_slice %114 {offsets = [0, 96], sizes = [8, 32], strides = [1, 1]} : vector<8x128xf32> to vector<8x32xf32>
    %136 = math.tanh %135 : vector<8x32xf32>
    %137 = vector.extract_strided_slice %122 {offsets = [0, 96], sizes = [8, 32], strides = [1, 1]} : vector<8x128xf32> to vector<8x32xf32>
    %138 = math.tanh %137 : vector<8x32xf32>
    %139 = vector.extract_strided_slice %128 {offsets = [0, 32], sizes = [8, 32], strides = [1, 1]} : vector<8x96xf32> to vector<8x32xf32>
    %c0_62 = arith.constant 0 : index
    %c0_63 = arith.constant 0 : index
    %140 = vector.load %arg9[%c0_62, %c0_63] : memref<8x32xf32, #tpu.memory_space<vmem>>, vector<8x32xf32>
    %141 = arith.mulf %139, %140 : vector<8x32xf32>
    %142 = vector.extract_strided_slice %128 {offsets = [0, 0], sizes = [8, 32], strides = [1, 1]} : vector<8x96xf32> to vector<8x32xf32>
    %143 = arith.mulf %142, %136 : vector<8x32xf32>
    %144 = arith.addf %141, %143 : vector<8x32xf32>
    %145 = vector.extract_strided_slice %134 {offsets = [0, 32], sizes = [8, 32], strides = [1, 1]} : vector<8x96xf32> to vector<8x32xf32>
    %c0_64 = arith.constant 0 : index
    %c0_65 = arith.constant 0 : index
    %146 = vector.load %arg11[%c0_64, %c0_65] : memref<8x32xf32, #tpu.memory_space<vmem>>, vector<8x32xf32>
    %147 = arith.mulf %145, %146 : vector<8x32xf32>
    %148 = vector.extract_strided_slice %134 {offsets = [0, 0], sizes = [8, 32], strides = [1, 1]} : vector<8x96xf32> to vector<8x32xf32>
    %149 = arith.mulf %148, %138 : vector<8x32xf32>
    %150 = arith.addf %147, %149 : vector<8x32xf32>
    %151 = vector.extract_strided_slice %128 {offsets = [0, 64], sizes = [8, 32], strides = [1, 1]} : vector<8x96xf32> to vector<8x32xf32>
    %152 = math.tanh %144 : vector<8x32xf32>
    %153 = arith.mulf %151, %152 : vector<8x32xf32>
    %154 = vector.extract_strided_slice %134 {offsets = [0, 64], sizes = [8, 32], strides = [1, 1]} : vector<8x96xf32> to vector<8x32xf32>
    %155 = math.tanh %150 : vector<8x32xf32>
    %156 = arith.mulf %154, %155 : vector<8x32xf32>
    %157 = arith.index_cast %c1_i32 : i32 to index
    %c0_66 = arith.constant 0 : index
    %c0_67 = arith.constant 0 : index
    %158 = vector.load %arg3[%157, %c0_66, %c0_67] : memref<8x8x1xf32, #tpu.memory_space<vmem>>, vector<1x8x1xf32>
    %159 = vector.shape_cast %158 : vector<1x8x1xf32> to vector<8x1xf32>
    %cst_68 = arith.constant 5.000000e-01 : f32
    %160 = vector.broadcast %cst_68 : f32 to vector<8x1xf32>
    %161 = arith.cmpf ogt, %159, %160 : vector<8x1xf32>
    %162 = arith.index_cast %106 : i32 to index
    %c0_69 = arith.constant 0 : index
    %c0_70 = arith.constant 0 : index
    %163 = vector.load %arg4[%162, %c0_69, %c0_70] : memref<8x8x1xf32, #tpu.memory_space<vmem>>, vector<1x8x1xf32>
    %164 = vector.shape_cast %163 : vector<1x8x1xf32> to vector<8x1xf32>
    %cst_71 = arith.constant 5.000000e-01 : f32
    %165 = vector.broadcast %cst_71 : f32 to vector<8x1xf32>
    %166 = arith.cmpf ogt, %164, %165 : vector<8x1xf32>
    %c0_72 = arith.constant 0 : index
    %c0_73 = arith.constant 0 : index
    %167 = vector.load %arg9[%c0_72, %c0_73] : memref<8x32xf32, #tpu.memory_space<vmem>>, vector<8x32xf32>
    %168 = vector.shape_cast %161 : vector<8x1xi1> to vector<8x1xi1>
    %169 = vector.broadcast %168 : vector<8x1xi1> to vector<8x32xi1>
    %170 = arith.select %169, %144, %167 : vector<8x32xi1>, vector<8x32xf32>
    %c0_74 = arith.constant 0 : index
    %c0_75 = arith.constant 0 : index
    %171 = vector.load %arg9[%c0_74, %c0_75] : memref<8x32xf32, #tpu.memory_space<vmem>>, vector<8x32xf32>
    tpu.vector_store %arg9[%c0_74, %c0_75], %170 {strides = array<i32>} : memref<8x32xf32, #tpu.memory_space<vmem>>, vector<8x32xf32>,
    %c0_76 = arith.constant 0 : index
    %c0_77 = arith.constant 0 : index
    %172 = vector.load %arg11[%c0_76, %c0_77] : memref<8x32xf32, #tpu.memory_space<vmem>>, vector<8x32xf32>
    %173 = vector.shape_cast %166 : vector<8x1xi1> to vector<8x1xi1>
    %174 = vector.broadcast %173 : vector<8x1xi1> to vector<8x32xi1>
    %175 = arith.select %174, %150, %172 : vector<8x32xi1>, vector<8x32xf32>
    %c0_78 = arith.constant 0 : index
    %c0_79 = arith.constant 0 : index
    %176 = vector.load %arg11[%c0_78, %c0_79] : memref<8x32xf32, #tpu.memory_space<vmem>>, vector<8x32xf32>
    tpu.vector_store %arg11[%c0_78, %c0_79], %175 {strides = array<i32>} : memref<8x32xf32, #tpu.memory_space<vmem>>, vector<8x32xf32>,
    %c0_80 = arith.constant 0 : index
    %c0_81 = arith.constant 0 : index
    %177 = vector.load %arg8[%c0_80, %c0_81] : memref<8x32xf32, #tpu.memory_space<vmem>>, vector<8x32xf32>
    %178 = vector.shape_cast %161 : vector<8x1xi1> to vector<8x1xi1>
    %179 = vector.broadcast %178 : vector<8x1xi1> to vector<8x32xi1>
    %180 = arith.select %179, %153, %177 : vector<8x32xi1>, vector<8x32xf32>
    %c0_82 = arith.constant 0 : index
    %c0_83 = arith.constant 0 : index
    %181 = vector.load %arg8[%c0_82, %c0_83] : memref<8x32xf32, #tpu.memory_space<vmem>>, vector<8x32xf32>
    tpu.vector_store %arg8[%c0_82, %c0_83], %180 {strides = array<i32>} : memref<8x32xf32, #tpu.memory_space<vmem>>, vector<8x32xf32>,
    %c0_84 = arith.constant 0 : index
    %c0_85 = arith.constant 0 : index
    %182 = vector.load %arg10[%c0_84, %c0_85] : memref<8x32xf32, #tpu.memory_space<vmem>>, vector<8x32xf32>
    %183 = vector.shape_cast %166 : vector<8x1xi1> to vector<8x1xi1>
    %184 = vector.broadcast %183 : vector<8x1xi1> to vector<8x32xi1>
    %185 = arith.select %184, %156, %182 : vector<8x32xi1>, vector<8x32xf32>
    %c0_86 = arith.constant 0 : index
    %c0_87 = arith.constant 0 : index
    %186 = vector.load %arg10[%c0_86, %c0_87] : memref<8x32xf32, #tpu.memory_space<vmem>>, vector<8x32xf32>
    tpu.vector_store %arg10[%c0_86, %c0_87], %185 {strides = array<i32>} : memref<8x32xf32, #tpu.memory_space<vmem>>, vector<8x32xf32>,
    %cst_88 = arith.constant 0.000000e+00 : f32
    %187 = vector.shape_cast %161 : vector<8x1xi1> to vector<8x1xi1>
    %188 = vector.broadcast %187 : vector<8x1xi1> to vector<8x32xi1>
    %189 = vector.broadcast %cst_88 : f32 to vector<8x32xf32>
    %190 = arith.select %188, %153, %189 : vector<8x32xi1>, vector<8x32xf32>
    %191 = arith.truncf %190 : vector<8x32xf32> to vector<8x32xbf16>
    %192 = arith.index_cast %c1_i32 : i32 to index
    %c0_89 = arith.constant 0 : index
    %c0_90 = arith.constant 0 : index
    %193 = vector.load %arg6[%192, %c0_89, %c0_90] : memref<8x8x32xbf16, #tpu.memory_space<vmem>>, vector<1x8x32xbf16>
    %194 = vector.shape_cast %193 : vector<1x8x32xbf16> to vector<8x32xbf16>
    %195 = vector.shape_cast %191 : vector<8x32xbf16> to vector<1x8x32xbf16>
    tpu.vector_store %arg6[%192, %c0_89, %c0_90], %195 {strides = array<i32>} : memref<8x8x32xbf16, #tpu.memory_space<vmem>>, vector<1x8x32xbf16>,
    %cst_91 = arith.constant 0.000000e+00 : f32
    %196 = vector.shape_cast %166 : vector<8x1xi1> to vector<8x1xi1>
    %197 = vector.broadcast %196 : vector<8x1xi1> to vector<8x32xi1>
    %198 = vector.broadcast %cst_91 : f32 to vector<8x32xf32>
    %199 = arith.select %197, %156, %198 : vector<8x32xi1>, vector<8x32xf32>
    %200 = arith.truncf %199 : vector<8x32xf32> to vector<8x32xbf16>
    %201 = arith.index_cast %106 : i32 to index
    %c0_92 = arith.constant 0 : index
    %c0_93 = arith.constant 0 : index
    %202 = vector.load %arg7[%201, %c0_92, %c0_93] : memref<8x8x32xbf16, #tpu.memory_space<vmem>>, vector<1x8x32xbf16>
    %203 = vector.shape_cast %202 : vector<1x8x32xbf16> to vector<8x32xbf16>
    %204 = vector.shape_cast %200 : vector<8x32xbf16> to vector<1x8x32xbf16>
    tpu.vector_store %arg7[%201, %c0_92, %c0_93], %204 {strides = array<i32>} : memref<8x8x32xbf16, #tpu.memory_space<vmem>>, vector<1x8x32xbf16>,
    %c2_i32 = arith.constant 2 : i32
    %c7_i32_94 = arith.constant 7 : i32
    %205 = arith.subi %c7_i32_94, %c2_i32 : i32
    %206 = arith.index_cast %c2_i32 : i32 to index
    %c0_95 = arith.constant 0 : index
    %c0_96 = arith.constant 0 : index
    %207 = vector.load %arg1[%206, %c0_95, %c0_96] : memref<8x8x128xbf16, #tpu.memory_space<vmem>>, vector<1x8x128xbf16>
    %208 = vector.shape_cast %207 : vector<1x8x128xbf16> to vector<8x128xbf16>
    %c0_97 = arith.constant 0 : index
    %c0_98 = arith.constant 0 : index
    %209 = vector.load %arg8[%c0_97, %c0_98] : memref<8x32xf32, #tpu.memory_space<vmem>>, vector<8x32xf32>
    %210 = arith.truncf %209 : vector<8x32xf32> to vector<8x32xbf16>
    %cst_99 = arith.constant dense<0.000000e+00> : vector<8x128xf32>
    %211 = tpu.matmul %210, %4, %cst_99 {dimension_numbers = #tpu.dot_dimension_numbers<[1], [0], [0], [1], [0, 0, 1, 1], [], []>} : vector<8x32xbf16>, vector<32x128xbf16>, vector<8x128xf32> -> vector<8x128xf32>
    %212 = arith.extf %208 : vector<8x128xbf16> to vector<8x128xf32>
    %213 = arith.addf %212, %211 : vector<8x128xf32>
    %214 = arith.index_cast %205 : i32 to index
    %c0_100 = arith.constant 0 : index
    %c0_101 = arith.constant 0 : index
    %215 = vector.load %arg2[%214, %c0_100, %c0_101] : memref<8x8x128xbf16, #tpu.memory_space<vmem>>, vector<1x8x128xbf16>
    %216 = vector.shape_cast %215 : vector<1x8x128xbf16> to vector<8x128xbf16>
    %c0_102 = arith.constant 0 : index
    %c0_103 = arith.constant 0 : index
    %217 = vector.load %arg10[%c0_102, %c0_103] : memref<8x32xf32, #tpu.memory_space<vmem>>, vector<8x32xf32>
    %218 = arith.truncf %217 : vector<8x32xf32> to vector<8x32xbf16>
    %cst_104 = arith.constant dense<0.000000e+00> : vector<8x128xf32>
    %219 = tpu.matmul %218, %6, %cst_104 {dimension_numbers = #tpu.dot_dimension_numbers<[1], [0], [0], [1], [0, 0, 1, 1], [], []>} : vector<8x32xbf16>, vector<32x128xbf16>, vector<8x128xf32> -> vector<8x128xf32>
    %220 = arith.extf %216 : vector<8x128xbf16> to vector<8x128xf32>
    %221 = arith.addf %220, %219 : vector<8x128xf32>
    %222 = vector.extract_strided_slice %213 {offsets = [0, 0], sizes = [8, 96], strides = [1, 1]} : vector<8x128xf32> to vector<8x96xf32>
    %223 = arith.negf %222 : vector<8x96xf32>
    %224 = math.exp %223 : vector<8x96xf32>
    %cst_105 = arith.constant 1.000000e+00 : f32
    %225 = vector.broadcast %cst_105 : f32 to vector<8x96xf32>
    %226 = arith.addf %225, %224 : vector<8x96xf32>
    %227 = arith.divf %225, %226 : vector<8x96xf32>
    %228 = vector.extract_strided_slice %221 {offsets = [0, 0], sizes = [8, 96], strides = [1, 1]} : vector<8x128xf32> to vector<8x96xf32>
    %229 = arith.negf %228 : vector<8x96xf32>
    %230 = math.exp %229 : vector<8x96xf32>
    %cst_106 = arith.constant 1.000000e+00 : f32
    %231 = vector.broadcast %cst_106 : f32 to vector<8x96xf32>
    %232 = arith.addf %231, %230 : vector<8x96xf32>
    %233 = arith.divf %231, %232 : vector<8x96xf32>
    %234 = vector.extract_strided_slice %213 {offsets = [0, 96], sizes = [8, 32], strides = [1, 1]} : vector<8x128xf32> to vector<8x32xf32>
    %235 = math.tanh %234 : vector<8x32xf32>
    %236 = vector.extract_strided_slice %221 {offsets = [0, 96], sizes = [8, 32], strides = [1, 1]} : vector<8x128xf32> to vector<8x32xf32>
    %237 = math.tanh %236 : vector<8x32xf32>
    %238 = vector.extract_strided_slice %227 {offsets = [0, 32], sizes = [8, 32], strides = [1, 1]} : vector<8x96xf32> to vector<8x32xf32>
    %c0_107 = arith.constant 0 : index
    %c0_108 = arith.constant 0 : index
    %239 = vector.load %arg9[%c0_107, %c0_108] : memref<8x32xf32, #tpu.memory_space<vmem>>, vector<8x32xf32>
    %240 = arith.mulf %238, %239 : vector<8x32xf32>
    %241 = vector.extract_strided_slice %227 {offsets = [0, 0], sizes = [8, 32], strides = [1, 1]} : vector<8x96xf32> to vector<8x32xf32>
    %242 = arith.mulf %241, %235 : vector<8x32xf32>
    %243 = arith.addf %240, %242 : vector<8x32xf32>
    %244 = vector.extract_strided_slice %233 {offsets = [0, 32], sizes = [8, 32], strides = [1, 1]} : vector<8x96xf32> to vector<8x32xf32>
    %c0_109 = arith.constant 0 : index
    %c0_110 = arith.constant 0 : index
    %245 = vector.load %arg11[%c0_109, %c0_110] : memref<8x32xf32, #tpu.memory_space<vmem>>, vector<8x32xf32>
    %246 = arith.mulf %244, %245 : vector<8x32xf32>
    %247 = vector.extract_strided_slice %233 {offsets = [0, 0], sizes = [8, 32], strides = [1, 1]} : vector<8x96xf32> to vector<8x32xf32>
    %248 = arith.mulf %247, %237 : vector<8x32xf32>
    %249 = arith.addf %246, %248 : vector<8x32xf32>
    %250 = vector.extract_strided_slice %227 {offsets = [0, 64], sizes = [8, 32], strides = [1, 1]} : vector<8x96xf32> to vector<8x32xf32>
    %251 = math.tanh %243 : vector<8x32xf32>
    %252 = arith.mulf %250, %251 : vector<8x32xf32>
    %253 = vector.extract_strided_slice %233 {offsets = [0, 64], sizes = [8, 32], strides = [1, 1]} : vector<8x96xf32> to vector<8x32xf32>
    %254 = math.tanh %249 : vector<8x32xf32>
    %255 = arith.mulf %253, %254 : vector<8x32xf32>
    %256 = arith.index_cast %c2_i32 : i32 to index
    %c0_111 = arith.constant 0 : index
    %c0_112 = arith.constant 0 : index
    %257 = vector.load %arg3[%256, %c0_111, %c0_112] : memref<8x8x1xf32, #tpu.memory_space<vmem>>, vector<1x8x1xf32>
    %258 = vector.shape_cast %257 : vector<1x8x1xf32> to vector<8x1xf32>
    %cst_113 = arith.constant 5.000000e-01 : f32
    %259 = vector.broadcast %cst_113 : f32 to vector<8x1xf32>
    %260 = arith.cmpf ogt, %258, %259 : vector<8x1xf32>
    %261 = arith.index_cast %205 : i32 to index
    %c0_114 = arith.constant 0 : index
    %c0_115 = arith.constant 0 : index
    %262 = vector.load %arg4[%261, %c0_114, %c0_115] : memref<8x8x1xf32, #tpu.memory_space<vmem>>, vector<1x8x1xf32>
    %263 = vector.shape_cast %262 : vector<1x8x1xf32> to vector<8x1xf32>
    %cst_116 = arith.constant 5.000000e-01 : f32
    %264 = vector.broadcast %cst_116 : f32 to vector<8x1xf32>
    %265 = arith.cmpf ogt, %263, %264 : vector<8x1xf32>
    %c0_117 = arith.constant 0 : index
    %c0_118 = arith.constant 0 : index
    %266 = vector.load %arg9[%c0_117, %c0_118] : memref<8x32xf32, #tpu.memory_space<vmem>>, vector<8x32xf32>
    %267 = vector.shape_cast %260 : vector<8x1xi1> to vector<8x1xi1>
    %268 = vector.broadcast %267 : vector<8x1xi1> to vector<8x32xi1>
    %269 = arith.select %268, %243, %266 : vector<8x32xi1>, vector<8x32xf32>
    %c0_119 = arith.constant 0 : index
    %c0_120 = arith.constant 0 : index
    %270 = vector.load %arg9[%c0_119, %c0_120] : memref<8x32xf32, #tpu.memory_space<vmem>>, vector<8x32xf32>
    tpu.vector_store %arg9[%c0_119, %c0_120], %269 {strides = array<i32>} : memref<8x32xf32, #tpu.memory_space<vmem>>, vector<8x32xf32>,
    %c0_121 = arith.constant 0 : index
    %c0_122 = arith.constant 0 : index
    %271 = vector.load %arg11[%c0_121, %c0_122] : memref<8x32xf32, #tpu.memory_space<vmem>>, vector<8x32xf32>
    %272 = vector.shape_cast %265 : vector<8x1xi1> to vector<8x1xi1>
    %273 = vector.broadcast %272 : vector<8x1xi1> to vector<8x32xi1>
    %274 = arith.select %273, %249, %271 : vector<8x32xi1>, vector<8x32xf32>
    %c0_123 = arith.constant 0 : index
    %c0_124 = arith.constant 0 : index
    %275 = vector.load %arg11[%c0_123, %c0_124] : memref<8x32xf32, #tpu.memory_space<vmem>>, vector<8x32xf32>
    tpu.vector_store %arg11[%c0_123, %c0_124], %274 {strides = array<i32>} : memref<8x32xf32, #tpu.memory_space<vmem>>, vector<8x32xf32>,
    %c0_125 = arith.constant 0 : index
    %c0_126 = arith.constant 0 : index
    %276 = vector.load %arg8[%c0_125, %c0_126] : memref<8x32xf32, #tpu.memory_space<vmem>>, vector<8x32xf32>
    %277 = vector.shape_cast %260 : vector<8x1xi1> to vector<8x1xi1>
    %278 = vector.broadcast %277 : vector<8x1xi1> to vector<8x32xi1>
    %279 = arith.select %278, %252, %276 : vector<8x32xi1>, vector<8x32xf32>
    %c0_127 = arith.constant 0 : index
    %c0_128 = arith.constant 0 : index
    %280 = vector.load %arg8[%c0_127, %c0_128] : memref<8x32xf32, #tpu.memory_space<vmem>>, vector<8x32xf32>
    tpu.vector_store %arg8[%c0_127, %c0_128], %279 {strides = array<i32>} : memref<8x32xf32, #tpu.memory_space<vmem>>, vector<8x32xf32>,
    %c0_129 = arith.constant 0 : index
    %c0_130 = arith.constant 0 : index
    %281 = vector.load %arg10[%c0_129, %c0_130] : memref<8x32xf32, #tpu.memory_space<vmem>>, vector<8x32xf32>
    %282 = vector.shape_cast %265 : vector<8x1xi1> to vector<8x1xi1>
    %283 = vector.broadcast %282 : vector<8x1xi1> to vector<8x32xi1>
    %284 = arith.select %283, %255, %281 : vector<8x32xi1>, vector<8x32xf32>
    %c0_131 = arith.constant 0 : index
    %c0_132 = arith.constant 0 : index
    %285 = vector.load %arg10[%c0_131, %c0_132] : memref<8x32xf32, #tpu.memory_space<vmem>>, vector<8x32xf32>
    tpu.vector_store %arg10[%c0_131, %c0_132], %284 {strides = array<i32>} : memref<8x32xf32, #tpu.memory_space<vmem>>, vector<8x32xf32>,
    %cst_133 = arith.constant 0.000000e+00 : f32
    %286 = vector.shape_cast %260 : vector<8x1xi1> to vector<8x1xi1>
    %287 = vector.broadcast %286 : vector<8x1xi1> to vector<8x32xi1>
    %288 = vector.broadcast %cst_133 : f32 to vector<8x32xf32>
    %289 = arith.select %287, %252, %288 : vector<8x32xi1>, vector<8x32xf32>
    %290 = arith.truncf %289 : vector<8x32xf32> to vector<8x32xbf16>
    %291 = arith.index_cast %c2_i32 : i32 to index
    %c0_134 = arith.constant 0 : index
    %c0_135 = arith.constant 0 : index
    %292 = vector.load %arg6[%291, %c0_134, %c0_135] : memref<8x8x32xbf16, #tpu.memory_space<vmem>>, vector<1x8x32xbf16>
    %293 = vector.shape_cast %292 : vector<1x8x32xbf16> to vector<8x32xbf16>
    %294 = vector.shape_cast %290 : vector<8x32xbf16> to vector<1x8x32xbf16>
    tpu.vector_store %arg6[%291, %c0_134, %c0_135], %294 {strides = array<i32>} : memref<8x8x32xbf16, #tpu.memory_space<vmem>>, vector<1x8x32xbf16>,
    %cst_136 = arith.constant 0.000000e+00 : f32
    %295 = vector.shape_cast %265 : vector<8x1xi1> to vector<8x1xi1>
    %296 = vector.broadcast %295 : vector<8x1xi1> to vector<8x32xi1>
    %297 = vector.broadcast %cst_136 : f32 to vector<8x32xf32>
    %298 = arith.select %296, %255, %297 : vector<8x32xi1>, vector<8x32xf32>
    %299 = arith.truncf %298 : vector<8x32xf32> to vector<8x32xbf16>
    %300 = arith.index_cast %205 : i32 to index
    %c0_137 = arith.constant 0 : index
    %c0_138 = arith.constant 0 : index
    %301 = vector.load %arg7[%300, %c0_137, %c0_138] : memref<8x8x32xbf16, #tpu.memory_space<vmem>>, vector<1x8x32xbf16>
    %302 = vector.shape_cast %301 : vector<1x8x32xbf16> to vector<8x32xbf16>
    %303 = vector.shape_cast %299 : vector<8x32xbf16> to vector<1x8x32xbf16>
    tpu.vector_store %arg7[%300, %c0_137, %c0_138], %303 {strides = array<i32>} : memref<8x8x32xbf16, #tpu.memory_space<vmem>>, vector<1x8x32xbf16>,
    %c3_i32 = arith.constant 3 : i32
    %c7_i32_139 = arith.constant 7 : i32
    %304 = arith.subi %c7_i32_139, %c3_i32 : i32
    %305 = arith.index_cast %c3_i32 : i32 to index
    %c0_140 = arith.constant 0 : index
    %c0_141 = arith.constant 0 : index
    %306 = vector.load %arg1[%305, %c0_140, %c0_141] : memref<8x8x128xbf16, #tpu.memory_space<vmem>>, vector<1x8x128xbf16>
    %307 = vector.shape_cast %306 : vector<1x8x128xbf16> to vector<8x128xbf16>
    %c0_142 = arith.constant 0 : index
    %c0_143 = arith.constant 0 : index
    %308 = vector.load %arg8[%c0_142, %c0_143] : memref<8x32xf32, #tpu.memory_space<vmem>>, vector<8x32xf32>
    %309 = arith.truncf %308 : vector<8x32xf32> to vector<8x32xbf16>
    %cst_144 = arith.constant dense<0.000000e+00> : vector<8x128xf32>
    %310 = tpu.matmul %309, %4, %cst_144 {dimension_numbers = #tpu.dot_dimension_numbers<[1], [0], [0], [1], [0, 0, 1, 1], [], []>} : vector<8x32xbf16>, vector<32x128xbf16>, vector<8x128xf32> -> vector<8x128xf32>
    %311 = arith.extf %307 : vector<8x128xbf16> to vector<8x128xf32>
    %312 = arith.addf %311, %310 : vector<8x128xf32>
    %313 = arith.index_cast %304 : i32 to index
    %c0_145 = arith.constant 0 : index
    %c0_146 = arith.constant 0 : index
    %314 = vector.load %arg2[%313, %c0_145, %c0_146] : memref<8x8x128xbf16, #tpu.memory_space<vmem>>, vector<1x8x128xbf16>
    %315 = vector.shape_cast %314 : vector<1x8x128xbf16> to vector<8x128xbf16>
    %c0_147 = arith.constant 0 : index
    %c0_148 = arith.constant 0 : index
    %316 = vector.load %arg10[%c0_147, %c0_148] : memref<8x32xf32, #tpu.memory_space<vmem>>, vector<8x32xf32>
    %317 = arith.truncf %316 : vector<8x32xf32> to vector<8x32xbf16>
    %cst_149 = arith.constant dense<0.000000e+00> : vector<8x128xf32>
    %318 = tpu.matmul %317, %6, %cst_149 {dimension_numbers = #tpu.dot_dimension_numbers<[1], [0], [0], [1], [0, 0, 1, 1], [], []>} : vector<8x32xbf16>, vector<32x128xbf16>, vector<8x128xf32> -> vector<8x128xf32>
    %319 = arith.extf %315 : vector<8x128xbf16> to vector<8x128xf32>
    %320 = arith.addf %319, %318 : vector<8x128xf32>
    %321 = vector.extract_strided_slice %312 {offsets = [0, 0], sizes = [8, 96], strides = [1, 1]} : vector<8x128xf32> to vector<8x96xf32>
    %322 = arith.negf %321 : vector<8x96xf32>
    %323 = math.exp %322 : vector<8x96xf32>
    %cst_150 = arith.constant 1.000000e+00 : f32
    %324 = vector.broadcast %cst_150 : f32 to vector<8x96xf32>
    %325 = arith.addf %324, %323 : vector<8x96xf32>
    %326 = arith.divf %324, %325 : vector<8x96xf32>
    %327 = vector.extract_strided_slice %320 {offsets = [0, 0], sizes = [8, 96], strides = [1, 1]} : vector<8x128xf32> to vector<8x96xf32>
    %328 = arith.negf %327 : vector<8x96xf32>
    %329 = math.exp %328 : vector<8x96xf32>
    %cst_151 = arith.constant 1.000000e+00 : f32
    %330 = vector.broadcast %cst_151 : f32 to vector<8x96xf32>
    %331 = arith.addf %330, %329 : vector<8x96xf32>
    %332 = arith.divf %330, %331 : vector<8x96xf32>
    %333 = vector.extract_strided_slice %312 {offsets = [0, 96], sizes = [8, 32], strides = [1, 1]} : vector<8x128xf32> to vector<8x32xf32>
    %334 = math.tanh %333 : vector<8x32xf32>
    %335 = vector.extract_strided_slice %320 {offsets = [0, 96], sizes = [8, 32], strides = [1, 1]} : vector<8x128xf32> to vector<8x32xf32>
    %336 = math.tanh %335 : vector<8x32xf32>
    %337 = vector.extract_strided_slice %326 {offsets = [0, 32], sizes = [8, 32], strides = [1, 1]} : vector<8x96xf32> to vector<8x32xf32>
    %c0_152 = arith.constant 0 : index
    %c0_153 = arith.constant 0 : index
    %338 = vector.load %arg9[%c0_152, %c0_153] : memref<8x32xf32, #tpu.memory_space<vmem>>, vector<8x32xf32>
    %339 = arith.mulf %337, %338 : vector<8x32xf32>
    %340 = vector.extract_strided_slice %326 {offsets = [0, 0], sizes = [8, 32], strides = [1, 1]} : vector<8x96xf32> to vector<8x32xf32>
    %341 = arith.mulf %340, %334 : vector<8x32xf32>
    %342 = arith.addf %339, %341 : vector<8x32xf32>
    %343 = vector.extract_strided_slice %332 {offsets = [0, 32], sizes = [8, 32], strides = [1, 1]} : vector<8x96xf32> to vector<8x32xf32>
    %c0_154 = arith.constant 0 : index
    %c0_155 = arith.constant 0 : index
    %344 = vector.load %arg11[%c0_154, %c0_155] : memref<8x32xf32, #tpu.memory_space<vmem>>, vector<8x32xf32>
    %345 = arith.mulf %343, %344 : vector<8x32xf32>
    %346 = vector.extract_strided_slice %332 {offsets = [0, 0], sizes = [8, 32], strides = [1, 1]} : vector<8x96xf32> to vector<8x32xf32>
    %347 = arith.mulf %346, %336 : vector<8x32xf32>
    %348 = arith.addf %345, %347 : vector<8x32xf32>
    %349 = vector.extract_strided_slice %326 {offsets = [0, 64], sizes = [8, 32], strides = [1, 1]} : vector<8x96xf32> to vector<8x32xf32>
    %350 = math.tanh %342 : vector<8x32xf32>
    %351 = arith.mulf %349, %350 : vector<8x32xf32>
    %352 = vector.extract_strided_slice %332 {offsets = [0, 64], sizes = [8, 32], strides = [1, 1]} : vector<8x96xf32> to vector<8x32xf32>
    %353 = math.tanh %348 : vector<8x32xf32>
    %354 = arith.mulf %352, %353 : vector<8x32xf32>
    %355 = arith.index_cast %c3_i32 : i32 to index
    %c0_156 = arith.constant 0 : index
    %c0_157 = arith.constant 0 : index
    %356 = vector.load %arg3[%355, %c0_156, %c0_157] : memref<8x8x1xf32, #tpu.memory_space<vmem>>, vector<1x8x1xf32>
    %357 = vector.shape_cast %356 : vector<1x8x1xf32> to vector<8x1xf32>
    %cst_158 = arith.constant 5.000000e-01 : f32
    %358 = vector.broadcast %cst_158 : f32 to vector<8x1xf32>
    %359 = arith.cmpf ogt, %357, %358 : vector<8x1xf32>
    %360 = arith.index_cast %304 : i32 to index
    %c0_159 = arith.constant 0 : index
    %c0_160 = arith.constant 0 : index
    %361 = vector.load %arg4[%360, %c0_159, %c0_160] : memref<8x8x1xf32, #tpu.memory_space<vmem>>, vector<1x8x1xf32>
    %362 = vector.shape_cast %361 : vector<1x8x1xf32> to vector<8x1xf32>
    %cst_161 = arith.constant 5.000000e-01 : f32
    %363 = vector.broadcast %cst_161 : f32 to vector<8x1xf32>
    %364 = arith.cmpf ogt, %362, %363 : vector<8x1xf32>
    %c0_162 = arith.constant 0 : index
    %c0_163 = arith.constant 0 : index
    %365 = vector.load %arg9[%c0_162, %c0_163] : memref<8x32xf32, #tpu.memory_space<vmem>>, vector<8x32xf32>
    %366 = vector.shape_cast %359 : vector<8x1xi1> to vector<8x1xi1>
    %367 = vector.broadcast %366 : vector<8x1xi1> to vector<8x32xi1>
    %368 = arith.select %367, %342, %365 : vector<8x32xi1>, vector<8x32xf32>
    %c0_164 = arith.constant 0 : index
    %c0_165 = arith.constant 0 : index
    %369 = vector.load %arg9[%c0_164, %c0_165] : memref<8x32xf32, #tpu.memory_space<vmem>>, vector<8x32xf32>
    tpu.vector_store %arg9[%c0_164, %c0_165], %368 {strides = array<i32>} : memref<8x32xf32, #tpu.memory_space<vmem>>, vector<8x32xf32>,
    %c0_166 = arith.constant 0 : index
    %c0_167 = arith.constant 0 : index
    %370 = vector.load %arg11[%c0_166, %c0_167] : memref<8x32xf32, #tpu.memory_space<vmem>>, vector<8x32xf32>
    %371 = vector.shape_cast %364 : vector<8x1xi1> to vector<8x1xi1>
    %372 = vector.broadcast %371 : vector<8x1xi1> to vector<8x32xi1>
    %373 = arith.select %372, %348, %370 : vector<8x32xi1>, vector<8x32xf32>
    %c0_168 = arith.constant 0 : index
    %c0_169 = arith.constant 0 : index
    %374 = vector.load %arg11[%c0_168, %c0_169] : memref<8x32xf32, #tpu.memory_space<vmem>>, vector<8x32xf32>
    tpu.vector_store %arg11[%c0_168, %c0_169], %373 {strides = array<i32>} : memref<8x32xf32, #tpu.memory_space<vmem>>, vector<8x32xf32>,
    %c0_170 = arith.constant 0 : index
    %c0_171 = arith.constant 0 : index
    %375 = vector.load %arg8[%c0_170, %c0_171] : memref<8x32xf32, #tpu.memory_space<vmem>>, vector<8x32xf32>
    %376 = vector.shape_cast %359 : vector<8x1xi1> to vector<8x1xi1>
    %377 = vector.broadcast %376 : vector<8x1xi1> to vector<8x32xi1>
    %378 = arith.select %377, %351, %375 : vector<8x32xi1>, vector<8x32xf32>
    %c0_172 = arith.constant 0 : index
    %c0_173 = arith.constant 0 : index
    %379 = vector.load %arg8[%c0_172, %c0_173] : memref<8x32xf32, #tpu.memory_space<vmem>>, vector<8x32xf32>
    tpu.vector_store %arg8[%c0_172, %c0_173], %378 {strides = array<i32>} : memref<8x32xf32, #tpu.memory_space<vmem>>, vector<8x32xf32>,
    %c0_174 = arith.constant 0 : index
    %c0_175 = arith.constant 0 : index
    %380 = vector.load %arg10[%c0_174, %c0_175] : memref<8x32xf32, #tpu.memory_space<vmem>>, vector<8x32xf32>
    %381 = vector.shape_cast %364 : vector<8x1xi1> to vector<8x1xi1>
    %382 = vector.broadcast %381 : vector<8x1xi1> to vector<8x32xi1>
    %383 = arith.select %382, %354, %380 : vector<8x32xi1>, vector<8x32xf32>
    %c0_176 = arith.constant 0 : index
    %c0_177 = arith.constant 0 : index
    %384 = vector.load %arg10[%c0_176, %c0_177] : memref<8x32xf32, #tpu.memory_space<vmem>>, vector<8x32xf32>
    tpu.vector_store %arg10[%c0_176, %c0_177], %383 {strides = array<i32>} : memref<8x32xf32, #tpu.memory_space<vmem>>, vector<8x32xf32>,
    %cst_178 = arith.constant 0.000000e+00 : f32
    %385 = vector.shape_cast %359 : vector<8x1xi1> to vector<8x1xi1>
    %386 = vector.broadcast %385 : vector<8x1xi1> to vector<8x32xi1>
    %387 = vector.broadcast %cst_178 : f32 to vector<8x32xf32>
    %388 = arith.select %386, %351, %387 : vector<8x32xi1>, vector<8x32xf32>
    %389 = arith.truncf %388 : vector<8x32xf32> to vector<8x32xbf16>
    %390 = arith.index_cast %c3_i32 : i32 to index
    %c0_179 = arith.constant 0 : index
    %c0_180 = arith.constant 0 : index
    %391 = vector.load %arg6[%390, %c0_179, %c0_180] : memref<8x8x32xbf16, #tpu.memory_space<vmem>>, vector<1x8x32xbf16>
    %392 = vector.shape_cast %391 : vector<1x8x32xbf16> to vector<8x32xbf16>
    %393 = vector.shape_cast %389 : vector<8x32xbf16> to vector<1x8x32xbf16>
    tpu.vector_store %arg6[%390, %c0_179, %c0_180], %393 {strides = array<i32>} : memref<8x8x32xbf16, #tpu.memory_space<vmem>>, vector<1x8x32xbf16>,
    %cst_181 = arith.constant 0.000000e+00 : f32
    %394 = vector.shape_cast %364 : vector<8x1xi1> to vector<8x1xi1>
    %395 = vector.broadcast %394 : vector<8x1xi1> to vector<8x32xi1>
    %396 = vector.broadcast %cst_181 : f32 to vector<8x32xf32>
    %397 = arith.select %395, %354, %396 : vector<8x32xi1>, vector<8x32xf32>
    %398 = arith.truncf %397 : vector<8x32xf32> to vector<8x32xbf16>
    %399 = arith.index_cast %304 : i32 to index
    %c0_182 = arith.constant 0 : index
    %c0_183 = arith.constant 0 : index
    %400 = vector.load %arg7[%399, %c0_182, %c0_183] : memref<8x8x32xbf16, #tpu.memory_space<vmem>>, vector<1x8x32xbf16>
    %401 = vector.shape_cast %400 : vector<1x8x32xbf16> to vector<8x32xbf16>
    %402 = vector.shape_cast %398 : vector<8x32xbf16> to vector<1x8x32xbf16>
    tpu.vector_store %arg7[%399, %c0_182, %c0_183], %402 {strides = array<i32>} : memref<8x8x32xbf16, #tpu.memory_space<vmem>>, vector<1x8x32xbf16>,
    %c4_i32 = arith.constant 4 : i32
    %c7_i32_184 = arith.constant 7 : i32
    %403 = arith.subi %c7_i32_184, %c4_i32 : i32
    %404 = arith.index_cast %c4_i32 : i32 to index
    %c0_185 = arith.constant 0 : index
    %c0_186 = arith.constant 0 : index
    %405 = vector.load %arg1[%404, %c0_185, %c0_186] : memref<8x8x128xbf16, #tpu.memory_space<vmem>>, vector<1x8x128xbf16>
    %406 = vector.shape_cast %405 : vector<1x8x128xbf16> to vector<8x128xbf16>
    %c0_187 = arith.constant 0 : index
    %c0_188 = arith.constant 0 : index
    %407 = vector.load %arg8[%c0_187, %c0_188] : memref<8x32xf32, #tpu.memory_space<vmem>>, vector<8x32xf32>
    %408 = arith.truncf %407 : vector<8x32xf32> to vector<8x32xbf16>
    %cst_189 = arith.constant dense<0.000000e+00> : vector<8x128xf32>
    %409 = tpu.matmul %408, %4, %cst_189 {dimension_numbers = #tpu.dot_dimension_numbers<[1], [0], [0], [1], [0, 0, 1, 1], [], []>} : vector<8x32xbf16>, vector<32x128xbf16>, vector<8x128xf32> -> vector<8x128xf32>
    %410 = arith.extf %406 : vector<8x128xbf16> to vector<8x128xf32>
    %411 = arith.addf %410, %409 : vector<8x128xf32>
    %412 = arith.index_cast %403 : i32 to index
    %c0_190 = arith.constant 0 : index
    %c0_191 = arith.constant 0 : index
    %413 = vector.load %arg2[%412, %c0_190, %c0_191] : memref<8x8x128xbf16, #tpu.memory_space<vmem>>, vector<1x8x128xbf16>
    %414 = vector.shape_cast %413 : vector<1x8x128xbf16> to vector<8x128xbf16>
    %c0_192 = arith.constant 0 : index
    %c0_193 = arith.constant 0 : index
    %415 = vector.load %arg10[%c0_192, %c0_193] : memref<8x32xf32, #tpu.memory_space<vmem>>, vector<8x32xf32>
    %416 = arith.truncf %415 : vector<8x32xf32> to vector<8x32xbf16>
    %cst_194 = arith.constant dense<0.000000e+00> : vector<8x128xf32>
    %417 = tpu.matmul %416, %6, %cst_194 {dimension_numbers = #tpu.dot_dimension_numbers<[1], [0], [0], [1], [0, 0, 1, 1], [], []>} : vector<8x32xbf16>, vector<32x128xbf16>, vector<8x128xf32> -> vector<8x128xf32>
    %418 = arith.extf %414 : vector<8x128xbf16> to vector<8x128xf32>
    %419 = arith.addf %418, %417 : vector<8x128xf32>
    %420 = vector.extract_strided_slice %411 {offsets = [0, 0], sizes = [8, 96], strides = [1, 1]} : vector<8x128xf32> to vector<8x96xf32>
    %421 = arith.negf %420 : vector<8x96xf32>
    %422 = math.exp %421 : vector<8x96xf32>
    %cst_195 = arith.constant 1.000000e+00 : f32
    %423 = vector.broadcast %cst_195 : f32 to vector<8x96xf32>
    %424 = arith.addf %423, %422 : vector<8x96xf32>
    %425 = arith.divf %423, %424 : vector<8x96xf32>
    %426 = vector.extract_strided_slice %419 {offsets = [0, 0], sizes = [8, 96], strides = [1, 1]} : vector<8x128xf32> to vector<8x96xf32>
    %427 = arith.negf %426 : vector<8x96xf32>
    %428 = math.exp %427 : vector<8x96xf32>
    %cst_196 = arith.constant 1.000000e+00 : f32
    %429 = vector.broadcast %cst_196 : f32 to vector<8x96xf32>
    %430 = arith.addf %429, %428 : vector<8x96xf32>
    %431 = arith.divf %429, %430 : vector<8x96xf32>
    %432 = vector.extract_strided_slice %411 {offsets = [0, 96], sizes = [8, 32], strides = [1, 1]} : vector<8x128xf32> to vector<8x32xf32>
    %433 = math.tanh %432 : vector<8x32xf32>
    %434 = vector.extract_strided_slice %419 {offsets = [0, 96], sizes = [8, 32], strides = [1, 1]} : vector<8x128xf32> to vector<8x32xf32>
    %435 = math.tanh %434 : vector<8x32xf32>
    %436 = vector.extract_strided_slice %425 {offsets = [0, 32], sizes = [8, 32], strides = [1, 1]} : vector<8x96xf32> to vector<8x32xf32>
    %c0_197 = arith.constant 0 : index
    %c0_198 = arith.constant 0 : index
    %437 = vector.load %arg9[%c0_197, %c0_198] : memref<8x32xf32, #tpu.memory_space<vmem>>, vector<8x32xf32>
    %438 = arith.mulf %436, %437 : vector<8x32xf32>
    %439 = vector.extract_strided_slice %425 {offsets = [0, 0], sizes = [8, 32], strides = [1, 1]} : vector<8x96xf32> to vector<8x32xf32>
    %440 = arith.mulf %439, %433 : vector<8x32xf32>
    %441 = arith.addf %438, %440 : vector<8x32xf32>
    %442 = vector.extract_strided_slice %431 {offsets = [0, 32], sizes = [8, 32], strides = [1, 1]} : vector<8x96xf32> to vector<8x32xf32>
    %c0_199 = arith.constant 0 : index
    %c0_200 = arith.constant 0 : index
    %443 = vector.load %arg11[%c0_199, %c0_200] : memref<8x32xf32, #tpu.memory_space<vmem>>, vector<8x32xf32>
    %444 = arith.mulf %442, %443 : vector<8x32xf32>
    %445 = vector.extract_strided_slice %431 {offsets = [0, 0], sizes = [8, 32], strides = [1, 1]} : vector<8x96xf32> to vector<8x32xf32>
    %446 = arith.mulf %445, %435 : vector<8x32xf32>
    %447 = arith.addf %444, %446 : vector<8x32xf32>
    %448 = vector.extract_strided_slice %425 {offsets = [0, 64], sizes = [8, 32], strides = [1, 1]} : vector<8x96xf32> to vector<8x32xf32>
    %449 = math.tanh %441 : vector<8x32xf32>
    %450 = arith.mulf %448, %449 : vector<8x32xf32>
    %451 = vector.extract_strided_slice %431 {offsets = [0, 64], sizes = [8, 32], strides = [1, 1]} : vector<8x96xf32> to vector<8x32xf32>
    %452 = math.tanh %447 : vector<8x32xf32>
    %453 = arith.mulf %451, %452 : vector<8x32xf32>
    %454 = arith.index_cast %c4_i32 : i32 to index
    %c0_201 = arith.constant 0 : index
    %c0_202 = arith.constant 0 : index
    %455 = vector.load %arg3[%454, %c0_201, %c0_202] : memref<8x8x1xf32, #tpu.memory_space<vmem>>, vector<1x8x1xf32>
    %456 = vector.shape_cast %455 : vector<1x8x1xf32> to vector<8x1xf32>
    %cst_203 = arith.constant 5.000000e-01 : f32
    %457 = vector.broadcast %cst_203 : f32 to vector<8x1xf32>
    %458 = arith.cmpf ogt, %456, %457 : vector<8x1xf32>
    %459 = arith.index_cast %403 : i32 to index
    %c0_204 = arith.constant 0 : index
    %c0_205 = arith.constant 0 : index
    %460 = vector.load %arg4[%459, %c0_204, %c0_205] : memref<8x8x1xf32, #tpu.memory_space<vmem>>, vector<1x8x1xf32>
    %461 = vector.shape_cast %460 : vector<1x8x1xf32> to vector<8x1xf32>
    %cst_206 = arith.constant 5.000000e-01 : f32
    %462 = vector.broadcast %cst_206 : f32 to vector<8x1xf32>
    %463 = arith.cmpf ogt, %461, %462 : vector<8x1xf32>
    %c0_207 = arith.constant 0 : index
    %c0_208 = arith.constant 0 : index
    %464 = vector.load %arg9[%c0_207, %c0_208] : memref<8x32xf32, #tpu.memory_space<vmem>>, vector<8x32xf32>
    %465 = vector.shape_cast %458 : vector<8x1xi1> to vector<8x1xi1>
    %466 = vector.broadcast %465 : vector<8x1xi1> to vector<8x32xi1>
    %467 = arith.select %466, %441, %464 : vector<8x32xi1>, vector<8x32xf32>
    %c0_209 = arith.constant 0 : index
    %c0_210 = arith.constant 0 : index
    %468 = vector.load %arg9[%c0_209, %c0_210] : memref<8x32xf32, #tpu.memory_space<vmem>>, vector<8x32xf32>
    tpu.vector_store %arg9[%c0_209, %c0_210], %467 {strides = array<i32>} : memref<8x32xf32, #tpu.memory_space<vmem>>, vector<8x32xf32>,
    %c0_211 = arith.constant 0 : index
    %c0_212 = arith.constant 0 : index
    %469 = vector.load %arg11[%c0_211, %c0_212] : memref<8x32xf32, #tpu.memory_space<vmem>>, vector<8x32xf32>
    %470 = vector.shape_cast %463 : vector<8x1xi1> to vector<8x1xi1>
    %471 = vector.broadcast %470 : vector<8x1xi1> to vector<8x32xi1>
    %472 = arith.select %471, %447, %469 : vector<8x32xi1>, vector<8x32xf32>
    %c0_213 = arith.constant 0 : index
    %c0_214 = arith.constant 0 : index
    %473 = vector.load %arg11[%c0_213, %c0_214] : memref<8x32xf32, #tpu.memory_space<vmem>>, vector<8x32xf32>
    tpu.vector_store %arg11[%c0_213, %c0_214], %472 {strides = array<i32>} : memref<8x32xf32, #tpu.memory_space<vmem>>, vector<8x32xf32>,
    %c0_215 = arith.constant 0 : index
    %c0_216 = arith.constant 0 : index
    %474 = vector.load %arg8[%c0_215, %c0_216] : memref<8x32xf32, #tpu.memory_space<vmem>>, vector<8x32xf32>
    %475 = vector.shape_cast %458 : vector<8x1xi1> to vector<8x1xi1>
    %476 = vector.broadcast %475 : vector<8x1xi1> to vector<8x32xi1>
    %477 = arith.select %476, %450, %474 : vector<8x32xi1>, vector<8x32xf32>
    %c0_217 = arith.constant 0 : index
    %c0_218 = arith.constant 0 : index
    %478 = vector.load %arg8[%c0_217, %c0_218] : memref<8x32xf32, #tpu.memory_space<vmem>>, vector<8x32xf32>
    tpu.vector_store %arg8[%c0_217, %c0_218], %477 {strides = array<i32>} : memref<8x32xf32, #tpu.memory_space<vmem>>, vector<8x32xf32>,
    %c0_219 = arith.constant 0 : index
    %c0_220 = arith.constant 0 : index
    %479 = vector.load %arg10[%c0_219, %c0_220] : memref<8x32xf32, #tpu.memory_space<vmem>>, vector<8x32xf32>
    %480 = vector.shape_cast %463 : vector<8x1xi1> to vector<8x1xi1>
    %481 = vector.broadcast %480 : vector<8x1xi1> to vector<8x32xi1>
    %482 = arith.select %481, %453, %479 : vector<8x32xi1>, vector<8x32xf32>
    %c0_221 = arith.constant 0 : index
    %c0_222 = arith.constant 0 : index
    %483 = vector.load %arg10[%c0_221, %c0_222] : memref<8x32xf32, #tpu.memory_space<vmem>>, vector<8x32xf32>
    tpu.vector_store %arg10[%c0_221, %c0_222], %482 {strides = array<i32>} : memref<8x32xf32, #tpu.memory_space<vmem>>, vector<8x32xf32>,
    %cst_223 = arith.constant 0.000000e+00 : f32
    %484 = vector.shape_cast %458 : vector<8x1xi1> to vector<8x1xi1>
    %485 = vector.broadcast %484 : vector<8x1xi1> to vector<8x32xi1>
    %486 = vector.broadcast %cst_223 : f32 to vector<8x32xf32>
    %487 = arith.select %485, %450, %486 : vector<8x32xi1>, vector<8x32xf32>
    %488 = arith.truncf %487 : vector<8x32xf32> to vector<8x32xbf16>
    %489 = arith.index_cast %c4_i32 : i32 to index
    %c0_224 = arith.constant 0 : index
    %c0_225 = arith.constant 0 : index
    %490 = vector.load %arg6[%489, %c0_224, %c0_225] : memref<8x8x32xbf16, #tpu.memory_space<vmem>>, vector<1x8x32xbf16>
    %491 = vector.shape_cast %490 : vector<1x8x32xbf16> to vector<8x32xbf16>
    %492 = vector.shape_cast %488 : vector<8x32xbf16> to vector<1x8x32xbf16>
    tpu.vector_store %arg6[%489, %c0_224, %c0_225], %492 {strides = array<i32>} : memref<8x8x32xbf16, #tpu.memory_space<vmem>>, vector<1x8x32xbf16>,
    %cst_226 = arith.constant 0.000000e+00 : f32
    %493 = vector.shape_cast %463 : vector<8x1xi1> to vector<8x1xi1>
    %494 = vector.broadcast %493 : vector<8x1xi1> to vector<8x32xi1>
    %495 = vector.broadcast %cst_226 : f32 to vector<8x32xf32>
    %496 = arith.select %494, %453, %495 : vector<8x32xi1>, vector<8x32xf32>
    %497 = arith.truncf %496 : vector<8x32xf32> to vector<8x32xbf16>
    %498 = arith.index_cast %403 : i32 to index
    %c0_227 = arith.constant 0 : index
    %c0_228 = arith.constant 0 : index
    %499 = vector.load %arg7[%498, %c0_227, %c0_228] : memref<8x8x32xbf16, #tpu.memory_space<vmem>>, vector<1x8x32xbf16>
    %500 = vector.shape_cast %499 : vector<1x8x32xbf16> to vector<8x32xbf16>
    %501 = vector.shape_cast %497 : vector<8x32xbf16> to vector<1x8x32xbf16>
    tpu.vector_store %arg7[%498, %c0_227, %c0_228], %501 {strides = array<i32>} : memref<8x8x32xbf16, #tpu.memory_space<vmem>>, vector<1x8x32xbf16>,
    %c5_i32 = arith.constant 5 : i32
    %c7_i32_229 = arith.constant 7 : i32
    %502 = arith.subi %c7_i32_229, %c5_i32 : i32
    %503 = arith.index_cast %c5_i32 : i32 to index
    %c0_230 = arith.constant 0 : index
    %c0_231 = arith.constant 0 : index
    %504 = vector.load %arg1[%503, %c0_230, %c0_231] : memref<8x8x128xbf16, #tpu.memory_space<vmem>>, vector<1x8x128xbf16>
    %505 = vector.shape_cast %504 : vector<1x8x128xbf16> to vector<8x128xbf16>
    %c0_232 = arith.constant 0 : index
    %c0_233 = arith.constant 0 : index
    %506 = vector.load %arg8[%c0_232, %c0_233] : memref<8x32xf32, #tpu.memory_space<vmem>>, vector<8x32xf32>
    %507 = arith.truncf %506 : vector<8x32xf32> to vector<8x32xbf16>
    %cst_234 = arith.constant dense<0.000000e+00> : vector<8x128xf32>
    %508 = tpu.matmul %507, %4, %cst_234 {dimension_numbers = #tpu.dot_dimension_numbers<[1], [0], [0], [1], [0, 0, 1, 1], [], []>} : vector<8x32xbf16>, vector<32x128xbf16>, vector<8x128xf32> -> vector<8x128xf32>
    %509 = arith.extf %505 : vector<8x128xbf16> to vector<8x128xf32>
    %510 = arith.addf %509, %508 : vector<8x128xf32>
    %511 = arith.index_cast %502 : i32 to index
    %c0_235 = arith.constant 0 : index
    %c0_236 = arith.constant 0 : index
    %512 = vector.load %arg2[%511, %c0_235, %c0_236] : memref<8x8x128xbf16, #tpu.memory_space<vmem>>, vector<1x8x128xbf16>
    %513 = vector.shape_cast %512 : vector<1x8x128xbf16> to vector<8x128xbf16>
    %c0_237 = arith.constant 0 : index
    %c0_238 = arith.constant 0 : index
    %514 = vector.load %arg10[%c0_237, %c0_238] : memref<8x32xf32, #tpu.memory_space<vmem>>, vector<8x32xf32>
    %515 = arith.truncf %514 : vector<8x32xf32> to vector<8x32xbf16>
    %cst_239 = arith.constant dense<0.000000e+00> : vector<8x128xf32>
    %516 = tpu.matmul %515, %6, %cst_239 {dimension_numbers = #tpu.dot_dimension_numbers<[1], [0], [0], [1], [0, 0, 1, 1], [], []>} : vector<8x32xbf16>, vector<32x128xbf16>, vector<8x128xf32> -> vector<8x128xf32>
    %517 = arith.extf %513 : vector<8x128xbf16> to vector<8x128xf32>
    %518 = arith.addf %517, %516 : vector<8x128xf32>
    %519 = vector.extract_strided_slice %510 {offsets = [0, 0], sizes = [8, 96], strides = [1, 1]} : vector<8x128xf32> to vector<8x96xf32>
    %520 = arith.negf %519 : vector<8x96xf32>
    %521 = math.exp %520 : vector<8x96xf32>
    %cst_240 = arith.constant 1.000000e+00 : f32
    %522 = vector.broadcast %cst_240 : f32 to vector<8x96xf32>
    %523 = arith.addf %522, %521 : vector<8x96xf32>
    %524 = arith.divf %522, %523 : vector<8x96xf32>
    %525 = vector.extract_strided_slice %518 {offsets = [0, 0], sizes = [8, 96], strides = [1, 1]} : vector<8x128xf32> to vector<8x96xf32>
    %526 = arith.negf %525 : vector<8x96xf32>
    %527 = math.exp %526 : vector<8x96xf32>
    %cst_241 = arith.constant 1.000000e+00 : f32
    %528 = vector.broadcast %cst_241 : f32 to vector<8x96xf32>
    %529 = arith.addf %528, %527 : vector<8x96xf32>
    %530 = arith.divf %528, %529 : vector<8x96xf32>
    %531 = vector.extract_strided_slice %510 {offsets = [0, 96], sizes = [8, 32], strides = [1, 1]} : vector<8x128xf32> to vector<8x32xf32>
    %532 = math.tanh %531 : vector<8x32xf32>
    %533 = vector.extract_strided_slice %518 {offsets = [0, 96], sizes = [8, 32], strides = [1, 1]} : vector<8x128xf32> to vector<8x32xf32>
    %534 = math.tanh %533 : vector<8x32xf32>
    %535 = vector.extract_strided_slice %524 {offsets = [0, 32], sizes = [8, 32], strides = [1, 1]} : vector<8x96xf32> to vector<8x32xf32>
    %c0_242 = arith.constant 0 : index
    %c0_243 = arith.constant 0 : index
    %536 = vector.load %arg9[%c0_242, %c0_243] : memref<8x32xf32, #tpu.memory_space<vmem>>, vector<8x32xf32>
    %537 = arith.mulf %535, %536 : vector<8x32xf32>
    %538 = vector.extract_strided_slice %524 {offsets = [0, 0], sizes = [8, 32], strides = [1, 1]} : vector<8x96xf32> to vector<8x32xf32>
    %539 = arith.mulf %538, %532 : vector<8x32xf32>
    %540 = arith.addf %537, %539 : vector<8x32xf32>
    %541 = vector.extract_strided_slice %530 {offsets = [0, 32], sizes = [8, 32], strides = [1, 1]} : vector<8x96xf32> to vector<8x32xf32>
    %c0_244 = arith.constant 0 : index
    %c0_245 = arith.constant 0 : index
    %542 = vector.load %arg11[%c0_244, %c0_245] : memref<8x32xf32, #tpu.memory_space<vmem>>, vector<8x32xf32>
    %543 = arith.mulf %541, %542 : vector<8x32xf32>
    %544 = vector.extract_strided_slice %530 {offsets = [0, 0], sizes = [8, 32], strides = [1, 1]} : vector<8x96xf32> to vector<8x32xf32>
    %545 = arith.mulf %544, %534 : vector<8x32xf32>
    %546 = arith.addf %543, %545 : vector<8x32xf32>
    %547 = vector.extract_strided_slice %524 {offsets = [0, 64], sizes = [8, 32], strides = [1, 1]} : vector<8x96xf32> to vector<8x32xf32>
    %548 = math.tanh %540 : vector<8x32xf32>
    %549 = arith.mulf %547, %548 : vector<8x32xf32>
    %550 = vector.extract_strided_slice %530 {offsets = [0, 64], sizes = [8, 32], strides = [1, 1]} : vector<8x96xf32> to vector<8x32xf32>
    %551 = math.tanh %546 : vector<8x32xf32>
    %552 = arith.mulf %550, %551 : vector<8x32xf32>
    %553 = arith.index_cast %c5_i32 : i32 to index
    %c0_246 = arith.constant 0 : index
    %c0_247 = arith.constant 0 : index
    %554 = vector.load %arg3[%553, %c0_246, %c0_247] : memref<8x8x1xf32, #tpu.memory_space<vmem>>, vector<1x8x1xf32>
    %555 = vector.shape_cast %554 : vector<1x8x1xf32> to vector<8x1xf32>
    %cst_248 = arith.constant 5.000000e-01 : f32
    %556 = vector.broadcast %cst_248 : f32 to vector<8x1xf32>
    %557 = arith.cmpf ogt, %555, %556 : vector<8x1xf32>
    %558 = arith.index_cast %502 : i32 to index
    %c0_249 = arith.constant 0 : index
    %c0_250 = arith.constant 0 : index
    %559 = vector.load %arg4[%558, %c0_249, %c0_250] : memref<8x8x1xf32, #tpu.memory_space<vmem>>, vector<1x8x1xf32>
    %560 = vector.shape_cast %559 : vector<1x8x1xf32> to vector<8x1xf32>
    %cst_251 = arith.constant 5.000000e-01 : f32
    %561 = vector.broadcast %cst_251 : f32 to vector<8x1xf32>
    %562 = arith.cmpf ogt, %560, %561 : vector<8x1xf32>
    %c0_252 = arith.constant 0 : index
    %c0_253 = arith.constant 0 : index
    %563 = vector.load %arg9[%c0_252, %c0_253] : memref<8x32xf32, #tpu.memory_space<vmem>>, vector<8x32xf32>
    %564 = vector.shape_cast %557 : vector<8x1xi1> to vector<8x1xi1>
    %565 = vector.broadcast %564 : vector<8x1xi1> to vector<8x32xi1>
    %566 = arith.select %565, %540, %563 : vector<8x32xi1>, vector<8x32xf32>
    %c0_254 = arith.constant 0 : index
    %c0_255 = arith.constant 0 : index
    %567 = vector.load %arg9[%c0_254, %c0_255] : memref<8x32xf32, #tpu.memory_space<vmem>>, vector<8x32xf32>
    tpu.vector_store %arg9[%c0_254, %c0_255], %566 {strides = array<i32>} : memref<8x32xf32, #tpu.memory_space<vmem>>, vector<8x32xf32>,
    %c0_256 = arith.constant 0 : index
    %c0_257 = arith.constant 0 : index
    %568 = vector.load %arg11[%c0_256, %c0_257] : memref<8x32xf32, #tpu.memory_space<vmem>>, vector<8x32xf32>
    %569 = vector.shape_cast %562 : vector<8x1xi1> to vector<8x1xi1>
    %570 = vector.broadcast %569 : vector<8x1xi1> to vector<8x32xi1>
    %571 = arith.select %570, %546, %568 : vector<8x32xi1>, vector<8x32xf32>
    %c0_258 = arith.constant 0 : index
    %c0_259 = arith.constant 0 : index
    %572 = vector.load %arg11[%c0_258, %c0_259] : memref<8x32xf32, #tpu.memory_space<vmem>>, vector<8x32xf32>
    tpu.vector_store %arg11[%c0_258, %c0_259], %571 {strides = array<i32>} : memref<8x32xf32, #tpu.memory_space<vmem>>, vector<8x32xf32>,
    %c0_260 = arith.constant 0 : index
    %c0_261 = arith.constant 0 : index
    %573 = vector.load %arg8[%c0_260, %c0_261] : memref<8x32xf32, #tpu.memory_space<vmem>>, vector<8x32xf32>
    %574 = vector.shape_cast %557 : vector<8x1xi1> to vector<8x1xi1>
    %575 = vector.broadcast %574 : vector<8x1xi1> to vector<8x32xi1>
    %576 = arith.select %575, %549, %573 : vector<8x32xi1>, vector<8x32xf32>
    %c0_262 = arith.constant 0 : index
    %c0_263 = arith.constant 0 : index
    %577 = vector.load %arg8[%c0_262, %c0_263] : memref<8x32xf32, #tpu.memory_space<vmem>>, vector<8x32xf32>
    tpu.vector_store %arg8[%c0_262, %c0_263], %576 {strides = array<i32>} : memref<8x32xf32, #tpu.memory_space<vmem>>, vector<8x32xf32>,
    %c0_264 = arith.constant 0 : index
    %c0_265 = arith.constant 0 : index
    %578 = vector.load %arg10[%c0_264, %c0_265] : memref<8x32xf32, #tpu.memory_space<vmem>>, vector<8x32xf32>
    %579 = vector.shape_cast %562 : vector<8x1xi1> to vector<8x1xi1>
    %580 = vector.broadcast %579 : vector<8x1xi1> to vector<8x32xi1>
    %581 = arith.select %580, %552, %578 : vector<8x32xi1>, vector<8x32xf32>
    %c0_266 = arith.constant 0 : index
    %c0_267 = arith.constant 0 : index
    %582 = vector.load %arg10[%c0_266, %c0_267] : memref<8x32xf32, #tpu.memory_space<vmem>>, vector<8x32xf32>
    tpu.vector_store %arg10[%c0_266, %c0_267], %581 {strides = array<i32>} : memref<8x32xf32, #tpu.memory_space<vmem>>, vector<8x32xf32>,
    %cst_268 = arith.constant 0.000000e+00 : f32
    %583 = vector.shape_cast %557 : vector<8x1xi1> to vector<8x1xi1>
    %584 = vector.broadcast %583 : vector<8x1xi1> to vector<8x32xi1>
    %585 = vector.broadcast %cst_268 : f32 to vector<8x32xf32>
    %586 = arith.select %584, %549, %585 : vector<8x32xi1>, vector<8x32xf32>
    %587 = arith.truncf %586 : vector<8x32xf32> to vector<8x32xbf16>
    %588 = arith.index_cast %c5_i32 : i32 to index
    %c0_269 = arith.constant 0 : index
    %c0_270 = arith.constant 0 : index
    %589 = vector.load %arg6[%588, %c0_269, %c0_270] : memref<8x8x32xbf16, #tpu.memory_space<vmem>>, vector<1x8x32xbf16>
    %590 = vector.shape_cast %589 : vector<1x8x32xbf16> to vector<8x32xbf16>
    %591 = vector.shape_cast %587 : vector<8x32xbf16> to vector<1x8x32xbf16>
    tpu.vector_store %arg6[%588, %c0_269, %c0_270], %591 {strides = array<i32>} : memref<8x8x32xbf16, #tpu.memory_space<vmem>>, vector<1x8x32xbf16>,
    %cst_271 = arith.constant 0.000000e+00 : f32
    %592 = vector.shape_cast %562 : vector<8x1xi1> to vector<8x1xi1>
    %593 = vector.broadcast %592 : vector<8x1xi1> to vector<8x32xi1>
    %594 = vector.broadcast %cst_271 : f32 to vector<8x32xf32>
    %595 = arith.select %593, %552, %594 : vector<8x32xi1>, vector<8x32xf32>
    %596 = arith.truncf %595 : vector<8x32xf32> to vector<8x32xbf16>
    %597 = arith.index_cast %502 : i32 to index
    %c0_272 = arith.constant 0 : index
    %c0_273 = arith.constant 0 : index
    %598 = vector.load %arg7[%597, %c0_272, %c0_273] : memref<8x8x32xbf16, #tpu.memory_space<vmem>>, vector<1x8x32xbf16>
    %599 = vector.shape_cast %598 : vector<1x8x32xbf16> to vector<8x32xbf16>
    %600 = vector.shape_cast %596 : vector<8x32xbf16> to vector<1x8x32xbf16>
    tpu.vector_store %arg7[%597, %c0_272, %c0_273], %600 {strides = array<i32>} : memref<8x8x32xbf16, #tpu.memory_space<vmem>>, vector<1x8x32xbf16>,
    %c6_i32 = arith.constant 6 : i32
    %c7_i32_274 = arith.constant 7 : i32
    %601 = arith.subi %c7_i32_274, %c6_i32 : i32
    %602 = arith.index_cast %c6_i32 : i32 to index
    %c0_275 = arith.constant 0 : index
    %c0_276 = arith.constant 0 : index
    %603 = vector.load %arg1[%602, %c0_275, %c0_276] : memref<8x8x128xbf16, #tpu.memory_space<vmem>>, vector<1x8x128xbf16>
    %604 = vector.shape_cast %603 : vector<1x8x128xbf16> to vector<8x128xbf16>
    %c0_277 = arith.constant 0 : index
    %c0_278 = arith.constant 0 : index
    %605 = vector.load %arg8[%c0_277, %c0_278] : memref<8x32xf32, #tpu.memory_space<vmem>>, vector<8x32xf32>
    %606 = arith.truncf %605 : vector<8x32xf32> to vector<8x32xbf16>
    %cst_279 = arith.constant dense<0.000000e+00> : vector<8x128xf32>
    %607 = tpu.matmul %606, %4, %cst_279 {dimension_numbers = #tpu.dot_dimension_numbers<[1], [0], [0], [1], [0, 0, 1, 1], [], []>} : vector<8x32xbf16>, vector<32x128xbf16>, vector<8x128xf32> -> vector<8x128xf32>
    %608 = arith.extf %604 : vector<8x128xbf16> to vector<8x128xf32>
    %609 = arith.addf %608, %607 : vector<8x128xf32>
    %610 = arith.index_cast %601 : i32 to index
    %c0_280 = arith.constant 0 : index
    %c0_281 = arith.constant 0 : index
    %611 = vector.load %arg2[%610, %c0_280, %c0_281] : memref<8x8x128xbf16, #tpu.memory_space<vmem>>, vector<1x8x128xbf16>
    %612 = vector.shape_cast %611 : vector<1x8x128xbf16> to vector<8x128xbf16>
    %c0_282 = arith.constant 0 : index
    %c0_283 = arith.constant 0 : index
    %613 = vector.load %arg10[%c0_282, %c0_283] : memref<8x32xf32, #tpu.memory_space<vmem>>, vector<8x32xf32>
    %614 = arith.truncf %613 : vector<8x32xf32> to vector<8x32xbf16>
    %cst_284 = arith.constant dense<0.000000e+00> : vector<8x128xf32>
    %615 = tpu.matmul %614, %6, %cst_284 {dimension_numbers = #tpu.dot_dimension_numbers<[1], [0], [0], [1], [0, 0, 1, 1], [], []>} : vector<8x32xbf16>, vector<32x128xbf16>, vector<8x128xf32> -> vector<8x128xf32>
    %616 = arith.extf %612 : vector<8x128xbf16> to vector<8x128xf32>
    %617 = arith.addf %616, %615 : vector<8x128xf32>
    %618 = vector.extract_strided_slice %609 {offsets = [0, 0], sizes = [8, 96], strides = [1, 1]} : vector<8x128xf32> to vector<8x96xf32>
    %619 = arith.negf %618 : vector<8x96xf32>
    %620 = math.exp %619 : vector<8x96xf32>
    %cst_285 = arith.constant 1.000000e+00 : f32
    %621 = vector.broadcast %cst_285 : f32 to vector<8x96xf32>
    %622 = arith.addf %621, %620 : vector<8x96xf32>
    %623 = arith.divf %621, %622 : vector<8x96xf32>
    %624 = vector.extract_strided_slice %617 {offsets = [0, 0], sizes = [8, 96], strides = [1, 1]} : vector<8x128xf32> to vector<8x96xf32>
    %625 = arith.negf %624 : vector<8x96xf32>
    %626 = math.exp %625 : vector<8x96xf32>
    %cst_286 = arith.constant 1.000000e+00 : f32
    %627 = vector.broadcast %cst_286 : f32 to vector<8x96xf32>
    %628 = arith.addf %627, %626 : vector<8x96xf32>
    %629 = arith.divf %627, %628 : vector<8x96xf32>
    %630 = vector.extract_strided_slice %609 {offsets = [0, 96], sizes = [8, 32], strides = [1, 1]} : vector<8x128xf32> to vector<8x32xf32>
    %631 = math.tanh %630 : vector<8x32xf32>
    %632 = vector.extract_strided_slice %617 {offsets = [0, 96], sizes = [8, 32], strides = [1, 1]} : vector<8x128xf32> to vector<8x32xf32>
    %633 = math.tanh %632 : vector<8x32xf32>
    %634 = vector.extract_strided_slice %623 {offsets = [0, 32], sizes = [8, 32], strides = [1, 1]} : vector<8x96xf32> to vector<8x32xf32>
    %c0_287 = arith.constant 0 : index
    %c0_288 = arith.constant 0 : index
    %635 = vector.load %arg9[%c0_287, %c0_288] : memref<8x32xf32, #tpu.memory_space<vmem>>, vector<8x32xf32>
    %636 = arith.mulf %634, %635 : vector<8x32xf32>
    %637 = vector.extract_strided_slice %623 {offsets = [0, 0], sizes = [8, 32], strides = [1, 1]} : vector<8x96xf32> to vector<8x32xf32>
    %638 = arith.mulf %637, %631 : vector<8x32xf32>
    %639 = arith.addf %636, %638 : vector<8x32xf32>
    %640 = vector.extract_strided_slice %629 {offsets = [0, 32], sizes = [8, 32], strides = [1, 1]} : vector<8x96xf32> to vector<8x32xf32>
    %c0_289 = arith.constant 0 : index
    %c0_290 = arith.constant 0 : index
    %641 = vector.load %arg11[%c0_289, %c0_290] : memref<8x32xf32, #tpu.memory_space<vmem>>, vector<8x32xf32>
    %642 = arith.mulf %640, %641 : vector<8x32xf32>
    %643 = vector.extract_strided_slice %629 {offsets = [0, 0], sizes = [8, 32], strides = [1, 1]} : vector<8x96xf32> to vector<8x32xf32>
    %644 = arith.mulf %643, %633 : vector<8x32xf32>
    %645 = arith.addf %642, %644 : vector<8x32xf32>
    %646 = vector.extract_strided_slice %623 {offsets = [0, 64], sizes = [8, 32], strides = [1, 1]} : vector<8x96xf32> to vector<8x32xf32>
    %647 = math.tanh %639 : vector<8x32xf32>
    %648 = arith.mulf %646, %647 : vector<8x32xf32>
    %649 = vector.extract_strided_slice %629 {offsets = [0, 64], sizes = [8, 32], strides = [1, 1]} : vector<8x96xf32> to vector<8x32xf32>
    %650 = math.tanh %645 : vector<8x32xf32>
    %651 = arith.mulf %649, %650 : vector<8x32xf32>
    %652 = arith.index_cast %c6_i32 : i32 to index
    %c0_291 = arith.constant 0 : index
    %c0_292 = arith.constant 0 : index
    %653 = vector.load %arg3[%652, %c0_291, %c0_292] : memref<8x8x1xf32, #tpu.memory_space<vmem>>, vector<1x8x1xf32>
    %654 = vector.shape_cast %653 : vector<1x8x1xf32> to vector<8x1xf32>
    %cst_293 = arith.constant 5.000000e-01 : f32
    %655 = vector.broadcast %cst_293 : f32 to vector<8x1xf32>
    %656 = arith.cmpf ogt, %654, %655 : vector<8x1xf32>
    %657 = arith.index_cast %601 : i32 to index
    %c0_294 = arith.constant 0 : index
    %c0_295 = arith.constant 0 : index
    %658 = vector.load %arg4[%657, %c0_294, %c0_295] : memref<8x8x1xf32, #tpu.memory_space<vmem>>, vector<1x8x1xf32>
    %659 = vector.shape_cast %658 : vector<1x8x1xf32> to vector<8x1xf32>
    %cst_296 = arith.constant 5.000000e-01 : f32
    %660 = vector.broadcast %cst_296 : f32 to vector<8x1xf32>
    %661 = arith.cmpf ogt, %659, %660 : vector<8x1xf32>
    %c0_297 = arith.constant 0 : index
    %c0_298 = arith.constant 0 : index
    %662 = vector.load %arg9[%c0_297, %c0_298] : memref<8x32xf32, #tpu.memory_space<vmem>>, vector<8x32xf32>
    %663 = vector.shape_cast %656 : vector<8x1xi1> to vector<8x1xi1>
    %664 = vector.broadcast %663 : vector<8x1xi1> to vector<8x32xi1>
    %665 = arith.select %664, %639, %662 : vector<8x32xi1>, vector<8x32xf32>
    %c0_299 = arith.constant 0 : index
    %c0_300 = arith.constant 0 : index
    %666 = vector.load %arg9[%c0_299, %c0_300] : memref<8x32xf32, #tpu.memory_space<vmem>>, vector<8x32xf32>
    tpu.vector_store %arg9[%c0_299, %c0_300], %665 {strides = array<i32>} : memref<8x32xf32, #tpu.memory_space<vmem>>, vector<8x32xf32>,
    %c0_301 = arith.constant 0 : index
    %c0_302 = arith.constant 0 : index
    %667 = vector.load %arg11[%c0_301, %c0_302] : memref<8x32xf32, #tpu.memory_space<vmem>>, vector<8x32xf32>
    %668 = vector.shape_cast %661 : vector<8x1xi1> to vector<8x1xi1>
    %669 = vector.broadcast %668 : vector<8x1xi1> to vector<8x32xi1>
    %670 = arith.select %669, %645, %667 : vector<8x32xi1>, vector<8x32xf32>
    %c0_303 = arith.constant 0 : index
    %c0_304 = arith.constant 0 : index
    %671 = vector.load %arg11[%c0_303, %c0_304] : memref<8x32xf32, #tpu.memory_space<vmem>>, vector<8x32xf32>
    tpu.vector_store %arg11[%c0_303, %c0_304], %670 {strides = array<i32>} : memref<8x32xf32, #tpu.memory_space<vmem>>, vector<8x32xf32>,
    %c0_305 = arith.constant 0 : index
    %c0_306 = arith.constant 0 : index
    %672 = vector.load %arg8[%c0_305, %c0_306] : memref<8x32xf32, #tpu.memory_space<vmem>>, vector<8x32xf32>
    %673 = vector.shape_cast %656 : vector<8x1xi1> to vector<8x1xi1>
    %674 = vector.broadcast %673 : vector<8x1xi1> to vector<8x32xi1>
    %675 = arith.select %674, %648, %672 : vector<8x32xi1>, vector<8x32xf32>
    %c0_307 = arith.constant 0 : index
    %c0_308 = arith.constant 0 : index
    %676 = vector.load %arg8[%c0_307, %c0_308] : memref<8x32xf32, #tpu.memory_space<vmem>>, vector<8x32xf32>
    tpu.vector_store %arg8[%c0_307, %c0_308], %675 {strides = array<i32>} : memref<8x32xf32, #tpu.memory_space<vmem>>, vector<8x32xf32>,
    %c0_309 = arith.constant 0 : index
    %c0_310 = arith.constant 0 : index
    %677 = vector.load %arg10[%c0_309, %c0_310] : memref<8x32xf32, #tpu.memory_space<vmem>>, vector<8x32xf32>
    %678 = vector.shape_cast %661 : vector<8x1xi1> to vector<8x1xi1>
    %679 = vector.broadcast %678 : vector<8x1xi1> to vector<8x32xi1>
    %680 = arith.select %679, %651, %677 : vector<8x32xi1>, vector<8x32xf32>
    %c0_311 = arith.constant 0 : index
    %c0_312 = arith.constant 0 : index
    %681 = vector.load %arg10[%c0_311, %c0_312] : memref<8x32xf32, #tpu.memory_space<vmem>>, vector<8x32xf32>
    tpu.vector_store %arg10[%c0_311, %c0_312], %680 {strides = array<i32>} : memref<8x32xf32, #tpu.memory_space<vmem>>, vector<8x32xf32>,
    %cst_313 = arith.constant 0.000000e+00 : f32
    %682 = vector.shape_cast %656 : vector<8x1xi1> to vector<8x1xi1>
    %683 = vector.broadcast %682 : vector<8x1xi1> to vector<8x32xi1>
    %684 = vector.broadcast %cst_313 : f32 to vector<8x32xf32>
    %685 = arith.select %683, %648, %684 : vector<8x32xi1>, vector<8x32xf32>
    %686 = arith.truncf %685 : vector<8x32xf32> to vector<8x32xbf16>
    %687 = arith.index_cast %c6_i32 : i32 to index
    %c0_314 = arith.constant 0 : index
    %c0_315 = arith.constant 0 : index
    %688 = vector.load %arg6[%687, %c0_314, %c0_315] : memref<8x8x32xbf16, #tpu.memory_space<vmem>>, vector<1x8x32xbf16>
    %689 = vector.shape_cast %688 : vector<1x8x32xbf16> to vector<8x32xbf16>
    %690 = vector.shape_cast %686 : vector<8x32xbf16> to vector<1x8x32xbf16>
    tpu.vector_store %arg6[%687, %c0_314, %c0_315], %690 {strides = array<i32>} : memref<8x8x32xbf16, #tpu.memory_space<vmem>>, vector<1x8x32xbf16>,
    %cst_316 = arith.constant 0.000000e+00 : f32
    %691 = vector.shape_cast %661 : vector<8x1xi1> to vector<8x1xi1>
    %692 = vector.broadcast %691 : vector<8x1xi1> to vector<8x32xi1>
    %693 = vector.broadcast %cst_316 : f32 to vector<8x32xf32>
    %694 = arith.select %692, %651, %693 : vector<8x32xi1>, vector<8x32xf32>
    %695 = arith.truncf %694 : vector<8x32xf32> to vector<8x32xbf16>
    %696 = arith.index_cast %601 : i32 to index
    %c0_317 = arith.constant 0 : index
    %c0_318 = arith.constant 0 : index
    %697 = vector.load %arg7[%696, %c0_317, %c0_318] : memref<8x8x32xbf16, #tpu.memory_space<vmem>>, vector<1x8x32xbf16>
    %698 = vector.shape_cast %697 : vector<1x8x32xbf16> to vector<8x32xbf16>
    %699 = vector.shape_cast %695 : vector<8x32xbf16> to vector<1x8x32xbf16>
    tpu.vector_store %arg7[%696, %c0_317, %c0_318], %699 {strides = array<i32>} : memref<8x8x32xbf16, #tpu.memory_space<vmem>>, vector<1x8x32xbf16>,
    %c7_i32_319 = arith.constant 7 : i32
    %c7_i32_320 = arith.constant 7 : i32
    %700 = arith.subi %c7_i32_320, %c7_i32_319 : i32
    %701 = arith.index_cast %c7_i32_319 : i32 to index
    %c0_321 = arith.constant 0 : index
    %c0_322 = arith.constant 0 : index
    %702 = vector.load %arg1[%701, %c0_321, %c0_322] : memref<8x8x128xbf16, #tpu.memory_space<vmem>>, vector<1x8x128xbf16>
    %703 = vector.shape_cast %702 : vector<1x8x128xbf16> to vector<8x128xbf16>
    %c0_323 = arith.constant 0 : index
    %c0_324 = arith.constant 0 : index
    %704 = vector.load %arg8[%c0_323, %c0_324] : memref<8x32xf32, #tpu.memory_space<vmem>>, vector<8x32xf32>
    %705 = arith.truncf %704 : vector<8x32xf32> to vector<8x32xbf16>
    %cst_325 = arith.constant dense<0.000000e+00> : vector<8x128xf32>
    %706 = tpu.matmul %705, %4, %cst_325 {dimension_numbers = #tpu.dot_dimension_numbers<[1], [0], [0], [1], [0, 0, 1, 1], [], []>} : vector<8x32xbf16>, vector<32x128xbf16>, vector<8x128xf32> -> vector<8x128xf32>
    %707 = arith.extf %703 : vector<8x128xbf16> to vector<8x128xf32>
    %708 = arith.addf %707, %706 : vector<8x128xf32>
    %709 = arith.index_cast %700 : i32 to index
    %c0_326 = arith.constant 0 : index
    %c0_327 = arith.constant 0 : index
    %710 = vector.load %arg2[%709, %c0_326, %c0_327] : memref<8x8x128xbf16, #tpu.memory_space<vmem>>, vector<1x8x128xbf16>
    %711 = vector.shape_cast %710 : vector<1x8x128xbf16> to vector<8x128xbf16>
    %c0_328 = arith.constant 0 : index
    %c0_329 = arith.constant 0 : index
    %712 = vector.load %arg10[%c0_328, %c0_329] : memref<8x32xf32, #tpu.memory_space<vmem>>, vector<8x32xf32>
    %713 = arith.truncf %712 : vector<8x32xf32> to vector<8x32xbf16>
    %cst_330 = arith.constant dense<0.000000e+00> : vector<8x128xf32>
    %714 = tpu.matmul %713, %6, %cst_330 {dimension_numbers = #tpu.dot_dimension_numbers<[1], [0], [0], [1], [0, 0, 1, 1], [], []>} : vector<8x32xbf16>, vector<32x128xbf16>, vector<8x128xf32> -> vector<8x128xf32>
    %715 = arith.extf %711 : vector<8x128xbf16> to vector<8x128xf32>
    %716 = arith.addf %715, %714 : vector<8x128xf32>
    %717 = vector.extract_strided_slice %708 {offsets = [0, 0], sizes = [8, 96], strides = [1, 1]} : vector<8x128xf32> to vector<8x96xf32>
    %718 = arith.negf %717 : vector<8x96xf32>
    %719 = math.exp %718 : vector<8x96xf32>
    %cst_331 = arith.constant 1.000000e+00 : f32
    %720 = vector.broadcast %cst_331 : f32 to vector<8x96xf32>
    %721 = arith.addf %720, %719 : vector<8x96xf32>
    %722 = arith.divf %720, %721 : vector<8x96xf32>
    %723 = vector.extract_strided_slice %716 {offsets = [0, 0], sizes = [8, 96], strides = [1, 1]} : vector<8x128xf32> to vector<8x96xf32>
    %724 = arith.negf %723 : vector<8x96xf32>
    %725 = math.exp %724 : vector<8x96xf32>
    %cst_332 = arith.constant 1.000000e+00 : f32
    %726 = vector.broadcast %cst_332 : f32 to vector<8x96xf32>
    %727 = arith.addf %726, %725 : vector<8x96xf32>
    %728 = arith.divf %726, %727 : vector<8x96xf32>
    %729 = vector.extract_strided_slice %708 {offsets = [0, 96], sizes = [8, 32], strides = [1, 1]} : vector<8x128xf32> to vector<8x32xf32>
    %730 = math.tanh %729 : vector<8x32xf32>
    %731 = vector.extract_strided_slice %716 {offsets = [0, 96], sizes = [8, 32], strides = [1, 1]} : vector<8x128xf32> to vector<8x32xf32>
    %732 = math.tanh %731 : vector<8x32xf32>
    %733 = vector.extract_strided_slice %722 {offsets = [0, 32], sizes = [8, 32], strides = [1, 1]} : vector<8x96xf32> to vector<8x32xf32>
    %c0_333 = arith.constant 0 : index
    %c0_334 = arith.constant 0 : index
    %734 = vector.load %arg9[%c0_333, %c0_334] : memref<8x32xf32, #tpu.memory_space<vmem>>, vector<8x32xf32>
    %735 = arith.mulf %733, %734 : vector<8x32xf32>
    %736 = vector.extract_strided_slice %722 {offsets = [0, 0], sizes = [8, 32], strides = [1, 1]} : vector<8x96xf32> to vector<8x32xf32>
    %737 = arith.mulf %736, %730 : vector<8x32xf32>
    %738 = arith.addf %735, %737 : vector<8x32xf32>
    %739 = vector.extract_strided_slice %728 {offsets = [0, 32], sizes = [8, 32], strides = [1, 1]} : vector<8x96xf32> to vector<8x32xf32>
    %c0_335 = arith.constant 0 : index
    %c0_336 = arith.constant 0 : index
    %740 = vector.load %arg11[%c0_335, %c0_336] : memref<8x32xf32, #tpu.memory_space<vmem>>, vector<8x32xf32>
    %741 = arith.mulf %739, %740 : vector<8x32xf32>
    %742 = vector.extract_strided_slice %728 {offsets = [0, 0], sizes = [8, 32], strides = [1, 1]} : vector<8x96xf32> to vector<8x32xf32>
    %743 = arith.mulf %742, %732 : vector<8x32xf32>
    %744 = arith.addf %741, %743 : vector<8x32xf32>
    %745 = vector.extract_strided_slice %722 {offsets = [0, 64], sizes = [8, 32], strides = [1, 1]} : vector<8x96xf32> to vector<8x32xf32>
    %746 = math.tanh %738 : vector<8x32xf32>
    %747 = arith.mulf %745, %746 : vector<8x32xf32>
    %748 = vector.extract_strided_slice %728 {offsets = [0, 64], sizes = [8, 32], strides = [1, 1]} : vector<8x96xf32> to vector<8x32xf32>
    %749 = math.tanh %744 : vector<8x32xf32>
    %750 = arith.mulf %748, %749 : vector<8x32xf32>
    %751 = arith.index_cast %c7_i32_319 : i32 to index
    %c0_337 = arith.constant 0 : index
    %c0_338 = arith.constant 0 : index
    %752 = vector.load %arg3[%751, %c0_337, %c0_338] : memref<8x8x1xf32, #tpu.memory_space<vmem>>, vector<1x8x1xf32>
    %753 = vector.shape_cast %752 : vector<1x8x1xf32> to vector<8x1xf32>
    %cst_339 = arith.constant 5.000000e-01 : f32
    %754 = vector.broadcast %cst_339 : f32 to vector<8x1xf32>
    %755 = arith.cmpf ogt, %753, %754 : vector<8x1xf32>
    %756 = arith.index_cast %700 : i32 to index
    %c0_340 = arith.constant 0 : index
    %c0_341 = arith.constant 0 : index
    %757 = vector.load %arg4[%756, %c0_340, %c0_341] : memref<8x8x1xf32, #tpu.memory_space<vmem>>, vector<1x8x1xf32>
    %758 = vector.shape_cast %757 : vector<1x8x1xf32> to vector<8x1xf32>
    %cst_342 = arith.constant 5.000000e-01 : f32
    %759 = vector.broadcast %cst_342 : f32 to vector<8x1xf32>
    %760 = arith.cmpf ogt, %758, %759 : vector<8x1xf32>
    %c0_343 = arith.constant 0 : index
    %c0_344 = arith.constant 0 : index
    %761 = vector.load %arg9[%c0_343, %c0_344] : memref<8x32xf32, #tpu.memory_space<vmem>>, vector<8x32xf32>
    %762 = vector.shape_cast %755 : vector<8x1xi1> to vector<8x1xi1>
    %763 = vector.broadcast %762 : vector<8x1xi1> to vector<8x32xi1>
    %764 = arith.select %763, %738, %761 : vector<8x32xi1>, vector<8x32xf32>
    %c0_345 = arith.constant 0 : index
    %c0_346 = arith.constant 0 : index
    %765 = vector.load %arg9[%c0_345, %c0_346] : memref<8x32xf32, #tpu.memory_space<vmem>>, vector<8x32xf32>
    tpu.vector_store %arg9[%c0_345, %c0_346], %764 {strides = array<i32>} : memref<8x32xf32, #tpu.memory_space<vmem>>, vector<8x32xf32>,
    %c0_347 = arith.constant 0 : index
    %c0_348 = arith.constant 0 : index
    %766 = vector.load %arg11[%c0_347, %c0_348] : memref<8x32xf32, #tpu.memory_space<vmem>>, vector<8x32xf32>
    %767 = vector.shape_cast %760 : vector<8x1xi1> to vector<8x1xi1>
    %768 = vector.broadcast %767 : vector<8x1xi1> to vector<8x32xi1>
    %769 = arith.select %768, %744, %766 : vector<8x32xi1>, vector<8x32xf32>
    %c0_349 = arith.constant 0 : index
    %c0_350 = arith.constant 0 : index
    %770 = vector.load %arg11[%c0_349, %c0_350] : memref<8x32xf32, #tpu.memory_space<vmem>>, vector<8x32xf32>
    tpu.vector_store %arg11[%c0_349, %c0_350], %769 {strides = array<i32>} : memref<8x32xf32, #tpu.memory_space<vmem>>, vector<8x32xf32>,
    %c0_351 = arith.constant 0 : index
    %c0_352 = arith.constant 0 : index
    %771 = vector.load %arg8[%c0_351, %c0_352] : memref<8x32xf32, #tpu.memory_space<vmem>>, vector<8x32xf32>
    %772 = vector.shape_cast %755 : vector<8x1xi1> to vector<8x1xi1>
    %773 = vector.broadcast %772 : vector<8x1xi1> to vector<8x32xi1>
    %774 = arith.select %773, %747, %771 : vector<8x32xi1>, vector<8x32xf32>
    %c0_353 = arith.constant 0 : index
    %c0_354 = arith.constant 0 : index
    %775 = vector.load %arg8[%c0_353, %c0_354] : memref<8x32xf32, #tpu.memory_space<vmem>>, vector<8x32xf32>
    tpu.vector_store %arg8[%c0_353, %c0_354], %774 {strides = array<i32>} : memref<8x32xf32, #tpu.memory_space<vmem>>, vector<8x32xf32>,
    %c0_355 = arith.constant 0 : index
    %c0_356 = arith.constant 0 : index
    %776 = vector.load %arg10[%c0_355, %c0_356] : memref<8x32xf32, #tpu.memory_space<vmem>>, vector<8x32xf32>
    %777 = vector.shape_cast %760 : vector<8x1xi1> to vector<8x1xi1>
    %778 = vector.broadcast %777 : vector<8x1xi1> to vector<8x32xi1>
    %779 = arith.select %778, %750, %776 : vector<8x32xi1>, vector<8x32xf32>
    %c0_357 = arith.constant 0 : index
    %c0_358 = arith.constant 0 : index
    %780 = vector.load %arg10[%c0_357, %c0_358] : memref<8x32xf32, #tpu.memory_space<vmem>>, vector<8x32xf32>
    tpu.vector_store %arg10[%c0_357, %c0_358], %779 {strides = array<i32>} : memref<8x32xf32, #tpu.memory_space<vmem>>, vector<8x32xf32>,
    %cst_359 = arith.constant 0.000000e+00 : f32
    %781 = vector.shape_cast %755 : vector<8x1xi1> to vector<8x1xi1>
    %782 = vector.broadcast %781 : vector<8x1xi1> to vector<8x32xi1>
    %783 = vector.broadcast %cst_359 : f32 to vector<8x32xf32>
    %784 = arith.select %782, %747, %783 : vector<8x32xi1>, vector<8x32xf32>
    %785 = arith.truncf %784 : vector<8x32xf32> to vector<8x32xbf16>
    %786 = arith.index_cast %c7_i32_319 : i32 to index
    %c0_360 = arith.constant 0 : index
    %c0_361 = arith.constant 0 : index
    %787 = vector.load %arg6[%786, %c0_360, %c0_361] : memref<8x8x32xbf16, #tpu.memory_space<vmem>>, vector<1x8x32xbf16>
    %788 = vector.shape_cast %787 : vector<1x8x32xbf16> to vector<8x32xbf16>
    %789 = vector.shape_cast %785 : vector<8x32xbf16> to vector<1x8x32xbf16>
    tpu.vector_store %arg6[%786, %c0_360, %c0_361], %789 {strides = array<i32>} : memref<8x8x32xbf16, #tpu.memory_space<vmem>>, vector<1x8x32xbf16>,
    %cst_362 = arith.constant 0.000000e+00 : f32
    %790 = vector.shape_cast %760 : vector<8x1xi1> to vector<8x1xi1>
    %791 = vector.broadcast %790 : vector<8x1xi1> to vector<8x32xi1>
    %792 = vector.broadcast %cst_362 : f32 to vector<8x32xf32>
    %793 = arith.select %791, %750, %792 : vector<8x32xi1>, vector<8x32xf32>
    %794 = arith.truncf %793 : vector<8x32xf32> to vector<8x32xbf16>
    %795 = arith.index_cast %700 : i32 to index
    %c0_363 = arith.constant 0 : index
    %c0_364 = arith.constant 0 : index
    %796 = vector.load %arg7[%795, %c0_363, %c0_364] : memref<8x8x32xbf16, #tpu.memory_space<vmem>>, vector<1x8x32xbf16>
    %797 = vector.shape_cast %796 : vector<1x8x32xbf16> to vector<8x32xbf16>
    %798 = vector.shape_cast %794 : vector<8x32xbf16> to vector<1x8x32xbf16>
    tpu.vector_store %arg7[%795, %c0_363, %c0_364], %798 {strides = array<i32>} : memref<8x8x32xbf16, #tpu.memory_space<vmem>>, vector<1x8x32xbf16>,
    %c8_i32 = arith.constant 8 : i32
    return
  }
  func.func @transform_0(%arg0: i32) -> (i32, i32, i32) {
    %c0_i32 = arith.constant 0 : i32
    %c0_i32_0 = arith.constant 0 : i32
    %c0_i32_1 = arith.constant 0 : i32
    return %arg0, %c0_i32, %c0_i32_0 : i32, i32, i32
  }
  func.func @transform_1(%arg0: i32) -> (i32, i32, i32) {
    %c0_i32 = arith.constant 0 : i32
    %0 = arith.subi %c0_i32, %arg0 : i32
    %c0_i32_0 = arith.constant 0 : i32
    %c1_i32 = arith.constant 1 : i32
    %c0_i32_1 = arith.constant 0 : i32
    return %0, %c0_i32_0, %c1_i32 : i32, i32, i32
  }
  func.func @transform_2(%arg0: i32) -> (i32, i32, i32) {
    %c0_i32 = arith.constant 0 : i32
    %c0_i32_0 = arith.constant 0 : i32
    %c0_i32_1 = arith.constant 0 : i32
    return %arg0, %c0_i32, %c0_i32_0 : i32, i32, i32
  }
  func.func @transform_3(%arg0: i32) -> (i32, i32, i32) {
    %c0_i32 = arith.constant 0 : i32
    %0 = arith.subi %c0_i32, %arg0 : i32
    %c0_i32_0 = arith.constant 0 : i32
    %c0_i32_1 = arith.constant 0 : i32
    %c0_i32_2 = arith.constant 0 : i32
    return %0, %c0_i32_0, %c0_i32_1 : i32, i32, i32
  }
  func.func @transform_4(%arg0: i32) -> (i32, i32, i32) {
    %c0_i32 = arith.constant 0 : i32
    %c0_i32_0 = arith.constant 0 : i32
    %c0_i32_1 = arith.constant 0 : i32
    %c0_i32_2 = arith.constant 0 : i32
    return %c0_i32, %c0_i32_0, %c0_i32_1 : i32, i32, i32
  }
  func.func @transform_5(%arg0: i32) -> (i32, i32, i32) {
    %c0_i32 = arith.constant 0 : i32
    %c0_i32_0 = arith.constant 0 : i32
    %c0_i32_1 = arith.constant 0 : i32
    return %arg0, %c0_i32, %c0_i32_0 : i32, i32, i32
  }
  func.func @transform_6(%arg0: i32) -> (i32, i32, i32) {
    %c0_i32 = arith.constant 0 : i32
    %0 = arith.subi %c0_i32, %arg0 : i32
    %c0_i32_0 = arith.constant 0 : i32
    %c0_i32_1 = arith.constant 0 : i32
    %c0_i32_2 = arith.constant 0 : i32
    return %0, %c0_i32_0, %c0_i32_1 : i32, i32, i32
  }
}

module attributes {stable_mosaic.version = 11 : i64} {
  func.func @kernel(%arg0: i32, %arg1: i32, %arg2: memref<64x32xbf16, #tpu.memory_space<vmem>>, %arg3: memref<64x32xbf16, #tpu.memory_space<vmem>>, %arg4: memref<32x256xbf16, #tpu.memory_space<vmem>>, %arg5: memref<32x256xbf16, #tpu.memory_space<vmem>>, %arg6: memref<1x256xf32, #tpu.memory_space<vmem>>, %arg7: memref<64x256xbf16, #tpu.memory_space<vmem>>) attributes {dimension_semantics = [#tpu.dimension_semantics<parallel>, #tpu.dimension_semantics<parallel>], iteration_bounds = array<i64: 1, 1>, scalar_prefetch = 0 : i64, scratch_operands = 0 : i64, tpu.core_type = #tpu.core_type<tc>, window_params = [{transform_indices = @transform_0, window_bounds = array<i64: 64, 32>}, {transform_indices = @transform_1, window_bounds = array<i64: 64, 32>}, {transform_indices = @transform_2, window_bounds = array<i64: 32, 256>}, {transform_indices = @transform_3, window_bounds = array<i64: 32, 256>}, {transform_indices = @transform_4, window_bounds = array<i64: 1, 256>}, {transform_indices = @transform_5, window_bounds = array<i64: 64, 256>}]} {
    %c0 = arith.constant 0 : index
    %c0_0 = arith.constant 0 : index
    %0 = vector.load %arg2[%c0, %c0_0] : memref<64x32xbf16, #tpu.memory_space<vmem>>, vector<64x32xbf16>
    %c0_1 = arith.constant 0 : index
    %c0_2 = arith.constant 0 : index
    %1 = vector.load %arg4[%c0_1, %c0_2] : memref<32x256xbf16, #tpu.memory_space<vmem>>, vector<32x256xbf16>
    %cst = arith.constant dense<0.000000e+00> : vector<64x256xf32>
    %2 = tpu.matmul %0, %1, %cst {dimension_numbers = #tpu.dot_dimension_numbers<[1], [0], [0], [1], [0, 0, 1, 1], [], []>} : vector<64x32xbf16>, vector<32x256xbf16>, vector<64x256xf32> -> vector<64x256xf32>
    %c0_3 = arith.constant 0 : index
    %c0_4 = arith.constant 0 : index
    %3 = vector.load %arg3[%c0_3, %c0_4] : memref<64x32xbf16, #tpu.memory_space<vmem>>, vector<64x32xbf16>
    %c0_5 = arith.constant 0 : index
    %c0_6 = arith.constant 0 : index
    %4 = vector.load %arg5[%c0_5, %c0_6] : memref<32x256xbf16, #tpu.memory_space<vmem>>, vector<32x256xbf16>
    %cst_7 = arith.constant dense<0.000000e+00> : vector<64x256xf32>
    %5 = tpu.matmul %3, %4, %cst_7 {dimension_numbers = #tpu.dot_dimension_numbers<[1], [0], [0], [1], [0, 0, 1, 1], [], []>} : vector<64x32xbf16>, vector<32x256xbf16>, vector<64x256xf32> -> vector<64x256xf32>
    %6 = arith.addf %2, %5 : vector<64x256xf32>
    %c0_8 = arith.constant 0 : index
    %c0_9 = arith.constant 0 : index
    %7 = vector.load %arg6[%c0_8, %c0_9] : memref<1x256xf32, #tpu.memory_space<vmem>>, vector<1x256xf32>
    %8 = vector.broadcast %7 : vector<1x256xf32> to vector<64x256xf32>
    %9 = arith.addf %6, %8 : vector<64x256xf32>
    %10 = arith.truncf %9 : vector<64x256xf32> to vector<64x256xbf16>
    %c0_10 = arith.constant 0 : index
    %c0_11 = arith.constant 0 : index
    %11 = vector.load %arg7[%c0_10, %c0_11] : memref<64x256xbf16, #tpu.memory_space<vmem>>, vector<64x256xbf16>
    tpu.vector_store %arg7[%c0_10, %c0_11], %10 {strides = array<i32>} : memref<64x256xbf16, #tpu.memory_space<vmem>>, vector<64x256xbf16>,
    return
  }
  func.func @transform_0(%arg0: i32, %arg1: i32) -> (i32, i32) {
    %c0_i32 = arith.constant 0 : i32
    %c0_i32_0 = arith.constant 0 : i32
    return %arg1, %c0_i32 : i32, i32
  }
  func.func @transform_1(%arg0: i32, %arg1: i32) -> (i32, i32) {
    %c0_i32 = arith.constant 0 : i32
    %c0_i32_0 = arith.constant 0 : i32
    return %arg1, %c0_i32 : i32, i32
  }
  func.func @transform_2(%arg0: i32, %arg1: i32) -> (i32, i32) {
    %c0_i32 = arith.constant 0 : i32
    %c0_i32_0 = arith.constant 0 : i32
    return %c0_i32, %arg0 : i32, i32
  }
  func.func @transform_3(%arg0: i32, %arg1: i32) -> (i32, i32) {
    %c0_i32 = arith.constant 0 : i32
    %c0_i32_0 = arith.constant 0 : i32
    return %c0_i32, %arg0 : i32, i32
  }
  func.func @transform_4(%arg0: i32, %arg1: i32) -> (i32, i32) {
    %c0_i32 = arith.constant 0 : i32
    %c0_i32_0 = arith.constant 0 : i32
    return %c0_i32, %arg0 : i32, i32
  }
  func.func @transform_5(%arg0: i32, %arg1: i32) -> (i32, i32) {
    %c0_i32 = arith.constant 0 : i32
    return %arg1, %arg0 : i32, i32
  }
}

module attributes {stable_mosaic.version = 11 : i64} {
  func.func @kernel(%arg0: i32, %arg1: i32, %arg2: memref<64x32xbf16, #tpu.memory_space<vmem>>, %arg3: memref<64x32xbf16, #tpu.memory_space<vmem>>, %arg4: memref<32x128xbf16, #tpu.memory_space<vmem>>, %arg5: memref<32x128xbf16, #tpu.memory_space<vmem>>, %arg6: memref<1x128xf32, #tpu.memory_space<vmem>>, %arg7: memref<64x128xf32, #tpu.memory_space<vmem>>) attributes {dimension_semantics = [#tpu.dimension_semantics<parallel>, #tpu.dimension_semantics<parallel>], iteration_bounds = array<i64: 1, 1>, scalar_prefetch = 0 : i64, scratch_operands = 0 : i64, tpu.core_type = #tpu.core_type<tc>, window_params = [{transform_indices = @transform_0, window_bounds = array<i64: 64, 32>}, {transform_indices = @transform_1, window_bounds = array<i64: 64, 32>}, {transform_indices = @transform_2, window_bounds = array<i64: 32, 128>}, {transform_indices = @transform_3, window_bounds = array<i64: 32, 128>}, {transform_indices = @transform_4, window_bounds = array<i64: 1, 128>}, {transform_indices = @transform_5, window_bounds = array<i64: 64, 128>}]} {
    %c0 = arith.constant 0 : index
    %c0_0 = arith.constant 0 : index
    %0 = vector.load %arg2[%c0, %c0_0] : memref<64x32xbf16, #tpu.memory_space<vmem>>, vector<64x32xbf16>
    %c0_1 = arith.constant 0 : index
    %c0_2 = arith.constant 0 : index
    %1 = vector.load %arg4[%c0_1, %c0_2] : memref<32x128xbf16, #tpu.memory_space<vmem>>, vector<32x128xbf16>
    %cst = arith.constant dense<0.000000e+00> : vector<64x128xf32>
    %2 = tpu.matmul %0, %1, %cst {dimension_numbers = #tpu.dot_dimension_numbers<[1], [0], [0], [1], [0, 0, 1, 1], [], []>} : vector<64x32xbf16>, vector<32x128xbf16>, vector<64x128xf32> -> vector<64x128xf32>
    %c0_3 = arith.constant 0 : index
    %c0_4 = arith.constant 0 : index
    %3 = vector.load %arg3[%c0_3, %c0_4] : memref<64x32xbf16, #tpu.memory_space<vmem>>, vector<64x32xbf16>
    %c0_5 = arith.constant 0 : index
    %c0_6 = arith.constant 0 : index
    %4 = vector.load %arg5[%c0_5, %c0_6] : memref<32x128xbf16, #tpu.memory_space<vmem>>, vector<32x128xbf16>
    %cst_7 = arith.constant dense<0.000000e+00> : vector<64x128xf32>
    %5 = tpu.matmul %3, %4, %cst_7 {dimension_numbers = #tpu.dot_dimension_numbers<[1], [0], [0], [1], [0, 0, 1, 1], [], []>} : vector<64x32xbf16>, vector<32x128xbf16>, vector<64x128xf32> -> vector<64x128xf32>
    %6 = arith.addf %2, %5 : vector<64x128xf32>
    %c0_8 = arith.constant 0 : index
    %c0_9 = arith.constant 0 : index
    %7 = vector.load %arg6[%c0_8, %c0_9] : memref<1x128xf32, #tpu.memory_space<vmem>>, vector<1x128xf32>
    %8 = vector.broadcast %7 : vector<1x128xf32> to vector<64x128xf32>
    %9 = arith.addf %6, %8 : vector<64x128xf32>
    %c0_10 = arith.constant 0 : index
    %c0_11 = arith.constant 0 : index
    %10 = vector.load %arg7[%c0_10, %c0_11] : memref<64x128xf32, #tpu.memory_space<vmem>>, vector<64x128xf32>
    tpu.vector_store %arg7[%c0_10, %c0_11], %9 {strides = array<i32>} : memref<64x128xf32, #tpu.memory_space<vmem>>, vector<64x128xf32>,
    return
  }
  func.func @transform_0(%arg0: i32, %arg1: i32) -> (i32, i32) {
    %c0_i32 = arith.constant 0 : i32
    %c0_i32_0 = arith.constant 0 : i32
    return %arg1, %c0_i32 : i32, i32
  }
  func.func @transform_1(%arg0: i32, %arg1: i32) -> (i32, i32) {
    %c0_i32 = arith.constant 0 : i32
    %c0_i32_0 = arith.constant 0 : i32
    return %arg1, %c0_i32 : i32, i32
  }
  func.func @transform_2(%arg0: i32, %arg1: i32) -> (i32, i32) {
    %c0_i32 = arith.constant 0 : i32
    %c0_i32_0 = arith.constant 0 : i32
    return %c0_i32, %arg0 : i32, i32
  }
  func.func @transform_3(%arg0: i32, %arg1: i32) -> (i32, i32) {
    %c0_i32 = arith.constant 0 : i32
    %c0_i32_0 = arith.constant 0 : i32
    return %c0_i32, %arg0 : i32, i32
  }
  func.func @transform_4(%arg0: i32, %arg1: i32) -> (i32, i32) {
    %c0_i32 = arith.constant 0 : i32
    %c0_i32_0 = arith.constant 0 : i32
    return %c0_i32, %arg0 : i32, i32
  }
  func.func @transform_5(%arg0: i32, %arg1: i32) -> (i32, i32) {
    %c0_i32 = arith.constant 0 : i32
    return %arg1, %arg0 : i32, i32
  }
}

</mosaic_0001>

<llo_original>
// kernel: blstmn_forward.5
$region0: #{blstmn_forward.5}
  #allocation0 [shape = 'u32[]', space=smem, size = 0x4, offset = 0x4, fixed_abs, tag = 'smem constant byte address 0x4 - core index']
  #allocation1 [shape = 'u32[144,128]{1,0:T(1,128)}', space=vmem, size = 0x12000, scoped, tag = 'internal scratch']
  %s0 = inlined_call_operand.vmem [shape: bf16[64,64], index: 0, kind: input, shape index: {}]
  %s1 = inlined_call_operand.vmem [shape: bf16[64,256], index: 1, kind: input, shape index: {}]
  %s2 = inlined_call_operand.vmem [shape: f32[1,256], index: 2, kind: input, shape index: {}]
  %s3 = inlined_call_operand.vmem [shape: bf16[64,256], index: 3, kind: output, shape index: {}]
  %s4 = sld [smem:[#allocation0]]
  $region22: #{blstmn_forward.5} parent=0
    _
  %s6 = ssub.s32 1, %s4
  %s7 = scalar_select 0, %s6, %s4
  // Predicated region
  $region2: #{blstmn_forward.5} parent=0 // pred_check
    _
  $region3: #{blstmn_forward.5} parent=0 // pred_check_branch
    %9 = sbr.rel (0) target = $region5
  $region4: #{blstmn_forward.5} parent=0 // pred_region
    _
  $region5: #{blstmn_forward.5} parent=0 // pred_fallthru
    _
  // Predicated region
  $region6: #{blstmn_forward.5} parent=0 // pred_check
    _
  $region7: #{blstmn_forward.5} parent=0 // pred_check_branch
    %11 = sbr.rel (0) target = $region9
  $region8: #{blstmn_forward.5} parent=0 // pred_region
    _
  $region9: #{blstmn_forward.5} parent=0 // pred_fallthru
    _
  // Predicated region
  $region10: #{blstmn_forward.5} parent=0 // pred_check
    _
  $region11: #{blstmn_forward.5} parent=0 // pred_check_branch
    %13 = sbr.rel (0) target = $region13
  $region12: #{blstmn_forward.5} parent=0 // pred_region
    _
  $region13: #{blstmn_forward.5} parent=0 // pred_fallthru
    _
  %v15 = vld [vmem:[%s0] sm:$0xf]
  %v16 = vld [vmem:[%s0 + $0x4] sm:$0xf]
  %v17 = vld [vmem:[%s0 + $0x8] sm:$0xf]
  %v18 = vld [vmem:[%s0 + $0xc] sm:$0xf]
  %v19 = vld [vmem:[%s0 + $0x10] sm:$0xf]
  %v20 = vld [vmem:[%s0 + $0x14] sm:$0xf]
  %v21 = vld [vmem:[%s0 + $0x18] sm:$0xf]
  %v22 = vld [vmem:[%s0 + $0x1c] sm:$0xf]
  %v23 = vld [vmem:[%s1] sm:$0xff]
  %v24 = vld [vmem:[%s1 + $0x8] sm:$0xff]
  %v25 = vld [vmem:[%s1 + $0x10] sm:$0xff]
  %v26 = vld [vmem:[%s1 + $0x18] sm:$0xff]
  %v27 = vld [vmem:[%s1 + $0x20] sm:$0xff]
  %v28 = vld [vmem:[%s1 + $0x28] sm:$0xff]
  %v29 = vld [vmem:[%s1 + $0x30] sm:$0xff]
  %v30 = vld [vmem:[%s1 + $0x38] sm:$0xff]
  %v31 = vld [vmem:[%s2] sm:$0x3]
  %v33 = vlaneseq
  %v34 = vshrl.u32 %v33, 7
  %v35 = vsub.s32 0, %v34
  %v36 = vrot.slane %v31, %v35
  %v37 = vlaneseq
  %v38 = vshrl.u32 %v37, 7
  %v39 = vsub.s32 1, %v38
  %v40 = vrot.slane %v31, %v39
  %v51 = vunpack.c.l.b16 %v15
  %v52 = vunpack.c.l.b16 %v16
  %v53 = vunpack.c.l.b16 %v17
  %v54 = vunpack.c.l.b16 %v18
  %v55 = vunpack.c.l.b16 %v19
  %v56 = vunpack.c.l.b16 %v20
  %v57 = vunpack.c.l.b16 %v21
  %v58 = vunpack.c.l.b16 %v22
  %v59 = vpack.c.b16 %v52, %v51
  %v60 = vpack.c.b16 %v54, %v53
  %v61 = vpack.c.b16 %v56, %v55
  %v62 = vpack.c.b16 %v58, %v57
  %v71 = vunpack.c.l.b16 %v23
  %v72 = vunpack.c.h.b16 %v23
  %v73 = vunpack.c.l.b16 %v24
  %v74 = vunpack.c.h.b16 %v24
  %v75 = vunpack.c.l.b16 %v25
  %v76 = vunpack.c.h.b16 %v25
  %v77 = vunpack.c.l.b16 %v26
  %v78 = vunpack.c.h.b16 %v26
  %v79 = vunpack.c.l.b16 %v27
  %v80 = vunpack.c.h.b16 %v27
  %v81 = vunpack.c.l.b16 %v28
  %v82 = vunpack.c.h.b16 %v28
  %v83 = vunpack.c.l.b16 %v29
  %v84 = vunpack.c.h.b16 %v29
  %v85 = vunpack.c.l.b16 %v30
  %v86 = vunpack.c.h.b16 %v30
  %v87 = vpack.c.b16 %v73, %v71
  %v88 = vpack.c.b16 %v74, %v72
  %v89 = vpack.c.b16 %v77, %v75
  %v90 = vpack.c.b16 %v78, %v76
  %v91 = vpack.c.b16 %v81, %v79
  %v92 = vpack.c.b16 %v82, %v80
  %v93 = vpack.c.b16 %v85, %v83
  %v94 = vpack.c.b16 %v86, %v84
  %vm103 = vcmask 523264
  %v105 = vsel %vm103, %v59, 0
  %v108 = vsel %vm103, %v60, 0
  %v111 = vsel %vm103, %v61, 0
  %v114 = vsel %vm103, %v62, 0
  %116 = vmatprep.subr.bf16.mxu0 %v88
  %117 = vmatpush1.bf16.msra.mxu0 %v87
  %118 = vmatprep.subr.bf16.mxu0 %v90
  %119 = vmatpush1.bf16.msra.mxu0 %v89
  %120 = vmatprep.subr.bf16.mxu0 %v92
  %121 = vmatpush1.bf16.msra.mxu0 %v91
  %122 = vmatprep.subr.bf16.mxu0 %v94
  %123 = vmatpush1.bf16.msra.mxu0 %v93
  %124 = vmatprep.subr.bf16.mxu0 0
  %125 = vmatpush1.bf16.msra.mxu0 0
  %126 = vmatprep.subr.bf16.mxu0 0
  %127 = vmatpush1.bf16.msra.mxu0 0
  %128 = vmatprep.subr.bf16.mxu0 0
  %129 = vmatpush1.bf16.msra.mxu0 0
  %130 = vmatprep.subr.bf16.mxu0 0
  %131 = vmatpush1.bf16.msra.mxu0 0
  %132 = vmatprep.subr.bf16.mxu0 0
  %133 = vmatpush1.bf16.msra.mxu0 0
  %134 = vmatprep.subr.bf16.mxu0 0
  %135 = vmatpush1.bf16.msra.mxu0 0
  %136 = vmatprep.subr.bf16.mxu0 0
  %137 = vmatpush1.bf16.msra.mxu0 0
  %138 = vmatprep.subr.bf16.mxu0 0
  %139 = vmatpush1.bf16.msra.mxu0 0
  %140 = vmatprep.subr.bf16.mxu0 0
  %141 = vmatpush1.bf16.msra.mxu0 0
  %142 = vmatprep.subr.bf16.mxu0 0
  %143 = vmatpush1.bf16.msra.mxu0 0
  %144 = vmatprep.subr.bf16.mxu0 0
  %145 = vmatpush1.bf16.msra.mxu0 0
  %146 = vmatprep.subr.bf16.mxu0 0
  %147 = vmatpush1.bf16.msra.mxu0 0
  %148 = vmatprep.mubr.bf16.mxu0 0
  %149 = vmatmul.mubr.bf16.gmra.mrb[0].mxu0 %v105
  %v150 = vpop.f32.mrb[0].mxu0
  %v151 = vadd.f32 %v36, %v150
  %v152 = vpop.f32.mrb[0].mxu0
  %v153 = vadd.f32 %v40, %v152
  %v154 = vpop.f32.mrb[0].mxu0
  %v155 = vadd.f32 %v36, %v154
  %v156 = vpop.f32.mrb[0].mxu0
  %v157 = vadd.f32 %v40, %v156
  %158 = vmatprep.mubr.bf16.mxu0 0
  %159 = vmatmul.mubr.bf16.gmra.mrb[0].mxu0 %v108
  %v160 = vpop.f32.mrb[0].mxu0
  %v161 = vadd.f32 %v36, %v160
  %v162 = vpop.f32.mrb[0].mxu0
  %v163 = vadd.f32 %v40, %v162
  %v164 = vpop.f32.mrb[0].mxu0
  %v165 = vadd.f32 %v36, %v164
  %v166 = vpop.f32.mrb[0].mxu0
  %v167 = vadd.f32 %v40, %v166
  %168 = vmatprep.mubr.bf16.mxu0 0
  %169 = vmatmul.mubr.bf16.gmra.mrb[0].mxu0 %v111
  %v170 = vpop.f32.mrb[0].mxu0
  %v171 = vadd.f32 %v36, %v170
  %v172 = vpop.f32.mrb[0].mxu0
  %v173 = vadd.f32 %v40, %v172
  %v174 = vpop.f32.mrb[0].mxu0
  %v175 = vadd.f32 %v36, %v174
  %v176 = vpop.f32.mrb[0].mxu0
  %v177 = vadd.f32 %v40, %v176
  %178 = vmatprep.mubr.bf16.mxu0 0
  %179 = vmatmul.mubr.bf16.gmra.mrb[0].mxu0 %v114
  %v180 = vpop.f32.mrb[0].mxu0
  %v181 = vadd.f32 %v36, %v180
  %v182 = vpop.f32.mrb[0].mxu0
  %v183 = vadd.f32 %v40, %v182
  %v184 = vpop.f32.mrb[0].mxu0
  %v185 = vadd.f32 %v36, %v184
  %v186 = vpop.f32.mrb[0].mxu0
  %v187 = vadd.f32 %v40, %v186
  %188 = vdwg.mxu0
  %v189 = vpack.c.bf16 %v155, %v151
  %v190 = vpack.c.bf16 %v157, %v153
  %v191 = vpack.c.bf16 %v165, %v161
  %v192 = vpack.c.bf16 %v167, %v163
  %v193 = vpack.c.bf16 %v175, %v171
  %v194 = vpack.c.bf16 %v177, %v173
  %v195 = vpack.c.bf16 %v185, %v181
  %v196 = vpack.c.bf16 %v187, %v183
  %v205 = vunpack.c.l.b16 %v189
  %v206 = vunpack.c.l.b16 %v190
  %v207 = vunpack.c.h.b16 %v189
  %v208 = vunpack.c.h.b16 %v190
  %v209 = vunpack.c.l.b16 %v191
  %v210 = vunpack.c.l.b16 %v192
  %v211 = vunpack.c.h.b16 %v191
  %v212 = vunpack.c.h.b16 %v192
  %v213 = vunpack.c.l.b16 %v193
  %v214 = vunpack.c.l.b16 %v194
  %v215 = vunpack.c.h.b16 %v193
  %v216 = vunpack.c.h.b16 %v194
  %v217 = vunpack.c.l.b16 %v195
  %v218 = vunpack.c.l.b16 %v196
  %v219 = vunpack.c.h.b16 %v195
  %v220 = vunpack.c.h.b16 %v196
  %v221 = vpack.c.b16 %v206, %v205
  %v222 = vpack.c.b16 %v208, %v207
  %v223 = vpack.c.b16 %v210, %v209
  %v224 = vpack.c.b16 %v212, %v211
  %v225 = vpack.c.b16 %v214, %v213
  %v226 = vpack.c.b16 %v216, %v215
  %v227 = vpack.c.b16 %v218, %v217
  %v228 = vpack.c.b16 %v220, %v219
  %237 = vst [vmem:[%s3] sm:$0xff] %v221
  %238 = vst [vmem:[%s3 + $0x8] sm:$0xff] %v222
  %239 = vst [vmem:[%s3 + $0x10] sm:$0xff] %v223
  %240 = vst [vmem:[%s3 + $0x18] sm:$0xff] %v224
  %241 = vst [vmem:[%s3 + $0x20] sm:$0xff] %v225
  %242 = vst [vmem:[%s3 + $0x28] sm:$0xff] %v226
  %243 = vst [vmem:[%s3 + $0x30] sm:$0xff] %v227
  %244 = vst [vmem:[%s3 + $0x38] sm:$0xff] %v228
  // Predicated region
  $region14: #{blstmn_forward.5} parent=0 // pred_check
    _
  $region15: #{blstmn_forward.5} parent=0 // pred_check_branch
    %246 = sbr.rel (0) target = $region17
  $region16: #{blstmn_forward.5} parent=0 // pred_region
    _
  $region17: #{blstmn_forward.5} parent=0 // pred_fallthru
    _
  // Predicated region
  $region18: #{blstmn_forward.5} parent=0 // pred_check
    _
  $region19: #{blstmn_forward.5} parent=0 // pred_check_branch
    %248 = sbr.rel (0) target = $region21
  $region20: #{blstmn_forward.5} parent=0 // pred_region
    _
  $region21: #{blstmn_forward.5} parent=0 // pred_fallthru
    _

// kernel: blstmn_forward.7
$region0: #{blstmn_forward.7}
  #allocation0 [shape = 'u32[]', space=smem, size = 0x4, offset = 0x4, fixed_abs, tag = 'smem constant byte address 0x4 - core index']
  #allocation1 [shape = 'u32[144,128]{1,0:T(1,128)}', space=vmem, size = 0x12000, scoped, tag = 'internal scratch']
  %s0 = inlined_call_operand.vmem [shape: bf16[64,32], index: 0, kind: input, shape index: {}]
  %s1 = inlined_call_operand.vmem [shape: bf16[64,32], index: 1, kind: input, shape index: {}]
  %s2 = inlined_call_operand.vmem [shape: bf16[32,256], index: 2, kind: input, shape index: {}]
  %s3 = inlined_call_operand.vmem [shape: bf16[32,256], index: 3, kind: input, shape index: {}]
  %s4 = inlined_call_operand.vmem [shape: f32[1,256], index: 4, kind: input, shape index: {}]
  %s5 = inlined_call_operand.vmem [shape: bf16[64,256], index: 5, kind: output, shape index: {}]
  %s6 = sld [smem:[#allocation0]]
  $region30: #{blstmn_forward.7} parent=0
    _
  %s8 = ssub.s32 1, %s6
  %s9 = scalar_select 0, %s8, %s6
  // Predicated region
  $region2: #{blstmn_forward.7} parent=0 // pred_check
    _
  $region3: #{blstmn_forward.7} parent=0 // pred_check_branch
    %11 = sbr.rel (0) target = $region5
  $region4: #{blstmn_forward.7} parent=0 // pred_region
    _
  $region5: #{blstmn_forward.7} parent=0 // pred_fallthru
    _
  // Predicated region
  $region6: #{blstmn_forward.7} parent=0 // pred_check
    _
  $region7: #{blstmn_forward.7} parent=0 // pred_check_branch
    %13 = sbr.rel (0) target = $region9
  $region8: #{blstmn_forward.7} parent=0 // pred_region
    _
  $region9: #{blstmn_forward.7} parent=0 // pred_fallthru
    _
  // Predicated region
  $region10: #{blstmn_forward.7} parent=0 // pred_check
    _
  $region11: #{blstmn_forward.7} parent=0 // pred_check_branch
    %15 = sbr.rel (0) target = $region13
  $region12: #{blstmn_forward.7} parent=0 // pred_region
    _
  $region13: #{blstmn_forward.7} parent=0 // pred_fallthru
    _
  // Predicated region
  $region14: #{blstmn_forward.7} parent=0 // pred_check
    _
  $region15: #{blstmn_forward.7} parent=0 // pred_check_branch
    %17 = sbr.rel (0) target = $region17
  $region16: #{blstmn_forward.7} parent=0 // pred_region
    _
  $region17: #{blstmn_forward.7} parent=0 // pred_fallthru
    _
  // Predicated region
  $region18: #{blstmn_forward.7} parent=0 // pred_check
    _
  $region19: #{blstmn_forward.7} parent=0 // pred_check_branch
    %19 = sbr.rel (0) target = $region21
  $region20: #{blstmn_forward.7} parent=0 // pred_region
    _
  $region21: #{blstmn_forward.7} parent=0 // pred_fallthru
    _
  %v21 = vld [vmem:[%s0] sm:$0xf]
  %v22 = vld [vmem:[%s0 + $0x4] sm:$0xf]
  %v23 = vld [vmem:[%s0 + $0x8] sm:$0xf]
  %v24 = vld [vmem:[%s0 + $0xc] sm:$0xf]
  %v25 = vld [vmem:[%s0 + $0x10] sm:$0xf]
  %v26 = vld [vmem:[%s0 + $0x14] sm:$0xf]
  %v27 = vld [vmem:[%s0 + $0x18] sm:$0xf]
  %v28 = vld [vmem:[%s0 + $0x1c] sm:$0xf]
  %v29 = vld [vmem:[%s2] sm:$0xff]
  %v30 = vld [vmem:[%s2 + $0x8] sm:$0xff]
  %v31 = vld [vmem:[%s2 + $0x10] sm:$0xff]
  %v32 = vld [vmem:[%s2 + $0x18] sm:$0xff]
  %v33 = vld [vmem:[%s1] sm:$0xf]
  %v34 = vld [vmem:[%s1 + $0x4] sm:$0xf]
  %v35 = vld [vmem:[%s1 + $0x8] sm:$0xf]
  %v36 = vld [vmem:[%s1 + $0xc] sm:$0xf]
  %v37 = vld [vmem:[%s1 + $0x10] sm:$0xf]
  %v38 = vld [vmem:[%s1 + $0x14] sm:$0xf]
  %v39 = vld [vmem:[%s1 + $0x18] sm:$0xf]
  %v40 = vld [vmem:[%s1 + $0x1c] sm:$0xf]
  %v41 = vld [vmem:[%s3] sm:$0xff]
  %v42 = vld [vmem:[%s3 + $0x8] sm:$0xff]
  %v43 = vld [vmem:[%s3 + $0x10] sm:$0xff]
  %v44 = vld [vmem:[%s3 + $0x18] sm:$0xff]
  %v53 = vunpack.c.l.b16 %v33
  %v54 = vunpack.c.l.b16 %v34
  %v55 = vunpack.c.l.b16 %v35
  %v56 = vunpack.c.l.b16 %v36
  %v57 = vunpack.c.l.b16 %v37
  %v58 = vunpack.c.l.b16 %v38
  %v59 = vunpack.c.l.b16 %v39
  %v60 = vunpack.c.l.b16 %v40
  %v61 = vpack.c.b16 %v54, %v53
  %v62 = vpack.c.b16 %v56, %v55
  %v63 = vpack.c.b16 %v58, %v57
  %v64 = vpack.c.b16 %v60, %v59
  %v69 = vunpack.c.l.b16 %v41
  %v70 = vunpack.c.h.b16 %v41
  %v71 = vunpack.c.l.b16 %v42
  %v72 = vunpack.c.h.b16 %v42
  %v73 = vunpack.c.l.b16 %v43
  %v74 = vunpack.c.h.b16 %v43
  %v75 = vunpack.c.l.b16 %v44
  %v76 = vunpack.c.h.b16 %v44
  %v77 = vpack.c.b16 %v71, %v69
  %v78 = vpack.c.b16 %v72, %v70
  %v79 = vpack.c.b16 %v75, %v73
  %v80 = vpack.c.b16 %v76, %v74
  %vm85 = vcmask 261120
  %v87 = vsel %vm85, %v61, 0
  %v90 = vsel %vm85, %v62, 0
  %v93 = vsel %vm85, %v63, 0
  %v96 = vsel %vm85, %v64, 0
  %98 = vmatprep.subr.bf16.mxu0 %v78
  %99 = vmatpush1.bf16.msra.mxu0 %v77
  %100 = vmatprep.subr.bf16.mxu0 %v80
  %101 = vmatpush1.bf16.msra.mxu0 %v79
  %102 = vmatprep.subr.bf16.mxu0 0
  %103 = vmatpush1.bf16.msra.mxu0 0
  %104 = vmatprep.subr.bf16.mxu0 0
  %105 = vmatpush1.bf16.msra.mxu0 0
  %106 = vmatprep.subr.bf16.mxu0 0
  %107 = vmatpush1.bf16.msra.mxu0 0
  %108 = vmatprep.subr.bf16.mxu0 0
  %109 = vmatpush1.bf16.msra.mxu0 0
  %110 = vmatprep.subr.bf16.mxu0 0
  %111 = vmatpush1.bf16.msra.mxu0 0
  %112 = vmatprep.subr.bf16.mxu0 0
  %113 = vmatpush1.bf16.msra.mxu0 0
  %114 = vmatprep.subr.bf16.mxu0 0
  %115 = vmatpush1.bf16.msra.mxu0 0
  %116 = vmatprep.subr.bf16.mxu0 0
  %117 = vmatpush1.bf16.msra.mxu0 0
  %118 = vmatprep.subr.bf16.mxu0 0
  %119 = vmatpush1.bf16.msra.mxu0 0
  %120 = vmatprep.subr.bf16.mxu0 0
  %121 = vmatpush1.bf16.msra.mxu0 0
  %122 = vmatprep.subr.bf16.mxu0 0
  %123 = vmatpush1.bf16.msra.mxu0 0
  %124 = vmatprep.subr.bf16.mxu0 0
  %125 = vmatpush1.bf16.msra.mxu0 0
  %126 = vmatprep.subr.bf16.mxu0 0
  %127 = vmatpush1.bf16.msra.mxu0 0
  %128 = vmatprep.subr.bf16.mxu0 0
  %129 = vmatpush1.bf16.msra.mxu0 0
  %130 = vmatprep.mubr.bf16.mxu0 0
  %131 = vmatmul.mubr.bf16.gmra.mrb[0].mxu0 %v87
  %v132 = vpop.f32.mrb[0].mxu0
  %v133 = vadd.f32 0.0, %v132
  %v134 = vpop.f32.mrb[0].mxu0
  %v135 = vadd.f32 0.0, %v134
  %v136 = vpop.f32.mrb[0].mxu0
  %v137 = vadd.f32 0.0, %v136
  %v138 = vpop.f32.mrb[0].mxu0
  %v139 = vadd.f32 0.0, %v138
  %140 = vmatprep.mubr.bf16.mxu0 0
  %141 = vmatmul.mubr.bf16.gmra.mrb[0].mxu0 %v90
  %v142 = vpop.f32.mrb[0].mxu0
  %v143 = vadd.f32 0.0, %v142
  %v144 = vpop.f32.mrb[0].mxu0
  %v145 = vadd.f32 0.0, %v144
  %v146 = vpop.f32.mrb[0].mxu0
  %v147 = vadd.f32 0.0, %v146
  %v148 = vpop.f32.mrb[0].mxu0
  %v149 = vadd.f32 0.0, %v148
  %150 = vmatprep.mubr.bf16.mxu0 0
  %151 = vmatmul.mubr.bf16.gmra.mrb[0].mxu0 %v93
  %v152 = vpop.f32.mrb[0].mxu0
  %v153 = vadd.f32 0.0, %v152
  %v154 = vpop.f32.mrb[0].mxu0
  %v155 = vadd.f32 0.0, %v154
  %v156 = vpop.f32.mrb[0].mxu0
  %v157 = vadd.f32 0.0, %v156
  %v158 = vpop.f32.mrb[0].mxu0
  %v159 = vadd.f32 0.0, %v158
  %160 = vmatprep.mubr.bf16.mxu0 0
  %161 = vmatmul.mubr.bf16.gmra.mrb[0].mxu0 %v96
  %v162 = vpop.f32.mrb[0].mxu0
  %v163 = vadd.f32 0.0, %v162
  %v164 = vpop.f32.mrb[0].mxu0
  %v165 = vadd.f32 0.0, %v164
  %v166 = vpop.f32.mrb[0].mxu0
  %v167 = vadd.f32 0.0, %v166
  %v168 = vpop.f32.mrb[0].mxu0
  %v169 = vadd.f32 0.0, %v168
  %170 = vdwg.mxu0
  %v179 = vunpack.c.l.b16 %v21
  %v180 = vunpack.c.l.b16 %v22
  %v181 = vunpack.c.l.b16 %v23
  %v182 = vunpack.c.l.b16 %v24
  %v183 = vunpack.c.l.b16 %v25
  %v184 = vunpack.c.l.b16 %v26
  %v185 = vunpack.c.l.b16 %v27
  %v186 = vunpack.c.l.b16 %v28
  %v187 = vpack.c.b16 %v180, %v179
  %v188 = vpack.c.b16 %v182, %v181
  %v189 = vpack.c.b16 %v184, %v183
  %v190 = vpack.c.b16 %v186, %v185
  %v195 = vunpack.c.l.b16 %v29
  %v196 = vunpack.c.h.b16 %v29
  %v197 = vunpack.c.l.b16 %v30
  %v198 = vunpack.c.h.b16 %v30
  %v199 = vunpack.c.l.b16 %v31
  %v200 = vunpack.c.h.b16 %v31
  %v201 = vunpack.c.l.b16 %v32
  %v202 = vunpack.c.h.b16 %v32
  %v203 = vpack.c.b16 %v197, %v195
  %v204 = vpack.c.b16 %v198, %v196
  %v205 = vpack.c.b16 %v201, %v199
  %v206 = vpack.c.b16 %v202, %v200
  %v212 = vsel %vm85, %v187, 0
  %v215 = vsel %vm85, %v188, 0
  %v218 = vsel %vm85, %v189, 0
  %v221 = vsel %vm85, %v190, 0
  %223 = vmatprep.subr.bf16.mxu0 %v204
  %224 = vmatpush1.bf16.msra.mxu0 %v203
  %225 = vmatprep.subr.bf16.mxu0 %v206
  %226 = vmatpush1.bf16.msra.mxu0 %v205
  %227 = vmatprep.subr.bf16.mxu0 0
  %228 = vmatpush1.bf16.msra.mxu0 0
  %229 = vmatprep.subr.bf16.mxu0 0
  %230 = vmatpush1.bf16.msra.mxu0 0
  %231 = vmatprep.subr.bf16.mxu0 0
  %232 = vmatpush1.bf16.msra.mxu0 0
  %233 = vmatprep.subr.bf16.mxu0 0
  %234 = vmatpush1.bf16.msra.mxu0 0
  %235 = vmatprep.subr.bf16.mxu0 0
  %236 = vmatpush1.bf16.msra.mxu0 0
  %237 = vmatprep.subr.bf16.mxu0 0
  %238 = vmatpush1.bf16.msra.mxu0 0
  %239 = vmatprep.subr.bf16.mxu0 0
  %240 = vmatpush1.bf16.msra.mxu0 0
  %241 = vmatprep.subr.bf16.mxu0 0
  %242 = vmatpush1.bf16.msra.mxu0 0
  %243 = vmatprep.subr.bf16.mxu0 0
  %244 = vmatpush1.bf16.msra.mxu0 0
  %245 = vmatprep.subr.bf16.mxu0 0
  %246 = vmatpush1.bf16.msra.mxu0 0
  %247 = vmatprep.subr.bf16.mxu0 0
  %248 = vmatpush1.bf16.msra.mxu0 0
  %249 = vmatprep.subr.bf16.mxu0 0
  %250 = vmatpush1.bf16.msra.mxu0 0
  %251 = vmatprep.subr.bf16.mxu0 0
  %252 = vmatpush1.bf16.msra.mxu0 0
  %253 = vmatprep.subr.bf16.mxu0 0
  %254 = vmatpush1.bf16.msra.mxu0 0
  %255 = vmatprep.mubr.bf16.mxu0 0
  %256 = vmatmul.mubr.bf16.gmra.mrb[0].mxu0 %v212
  %v257 = vpop.f32.mrb[0].mxu0
  %v258 = vadd.f32 %v133, %v257
  %v259 = vpop.f32.mrb[0].mxu0
  %v260 = vadd.f32 %v135, %v259
  %v261 = vpop.f32.mrb[0].mxu0
  %v262 = vadd.f32 %v137, %v261
  %v263 = vpop.f32.mrb[0].mxu0
  %v264 = vadd.f32 %v139, %v263
  %265 = vmatprep.mubr.bf16.mxu0 0
  %266 = vmatmul.mubr.bf16.gmra.mrb[0].mxu0 %v215
  %v267 = vpop.f32.mrb[0].mxu0
  %v268 = vadd.f32 %v143, %v267
  %v269 = vpop.f32.mrb[0].mxu0
  %v270 = vadd.f32 %v145, %v269
  %v271 = vpop.f32.mrb[0].mxu0
  %v272 = vadd.f32 %v147, %v271
  %v273 = vpop.f32.mrb[0].mxu0
  %v274 = vadd.f32 %v149, %v273
  %275 = vmatprep.mubr.bf16.mxu0 0
  %276 = vmatmul.mubr.bf16.gmra.mrb[0].mxu0 %v218
  %v277 = vpop.f32.mrb[0].mxu0
  %v278 = vadd.f32 %v153, %v277
  %v279 = vpop.f32.mrb[0].mxu0
  %v280 = vadd.f32 %v155, %v279
  %v281 = vpop.f32.mrb[0].mxu0
  %v282 = vadd.f32 %v157, %v281
  %v283 = vpop.f32.mrb[0].mxu0
  %v284 = vadd.f32 %v159, %v283
  %285 = vmatprep.mubr.bf16.mxu0 0
  %286 = vmatmul.mubr.bf16.gmra.mrb[0].mxu0 %v221
  %v287 = vpop.f32.mrb[0].mxu0
  %v288 = vadd.f32 %v163, %v287
  %v289 = vpop.f32.mrb[0].mxu0
  %v290 = vadd.f32 %v165, %v289
  %v291 = vpop.f32.mrb[0].mxu0
  %v292 = vadd.f32 %v167, %v291
  %v293 = vpop.f32.mrb[0].mxu0
  %v294 = vadd.f32 %v169, %v293
  %295 = vdwg.mxu0
  %v296 = vld [vmem:[%s4] sm:$0x3]
  %v298 = vlaneseq
  %v299 = vshrl.u32 %v298, 7
  %v300 = vsub.s32 0, %v299
  %v301 = vrot.slane %v296, %v300
  %v302 = vlaneseq
  %v303 = vshrl.u32 %v302, 7
  %v304 = vsub.s32 1, %v303
  %v305 = vrot.slane %v296, %v304
  %v308 = vadd.f32 %v258, %v301
  %v309 = vadd.f32 %v260, %v305
  %v310 = vadd.f32 %v262, %v301
  %v311 = vadd.f32 %v264, %v305
  %v312 = vadd.f32 %v268, %v301
  %v313 = vadd.f32 %v270, %v305
  %v314 = vadd.f32 %v272, %v301
  %v315 = vadd.f32 %v274, %v305
  %v316 = vadd.f32 %v278, %v301
  %v317 = vadd.f32 %v280, %v305
  %v318 = vadd.f32 %v282, %v301
  %v319 = vadd.f32 %v284, %v305
  %v320 = vadd.f32 %v288, %v301
  %v321 = vadd.f32 %v290, %v305
  %v322 = vadd.f32 %v292, %v301
  %v323 = vadd.f32 %v294, %v305
  %v324 = vpack.c.bf16 %v310, %v308
  %v325 = vpack.c.bf16 %v311, %v309
  %v326 = vpack.c.bf16 %v314, %v312
  %v327 = vpack.c.bf16 %v315, %v313
  %v328 = vpack.c.bf16 %v318, %v316
  %v329 = vpack.c.bf16 %v319, %v317
  %v330 = vpack.c.bf16 %v322, %v320
  %v331 = vpack.c.bf16 %v323, %v321
  %v340 = vunpack.c.l.b16 %v324
  %v341 = vunpack.c.l.b16 %v325
  %v342 = vunpack.c.h.b16 %v324
  %v343 = vunpack.c.h.b16 %v325
  %v344 = vunpack.c.l.b16 %v326
  %v345 = vunpack.c.l.b16 %v327
  %v346 = vunpack.c.h.b16 %v326
  %v347 = vunpack.c.h.b16 %v327
  %v348 = vunpack.c.l.b16 %v328
  %v349 = vunpack.c.l.b16 %v329
  %v350 = vunpack.c.h.b16 %v328
  %v351 = vunpack.c.h.b16 %v329
  %v352 = vunpack.c.l.b16 %v330
  %v353 = vunpack.c.l.b16 %v331
  %v354 = vunpack.c.h.b16 %v330
  %v355 = vunpack.c.h.b16 %v331
  %v356 = vpack.c.b16 %v341, %v340
  %v357 = vpack.c.b16 %v343, %v342
  %v358 = vpack.c.b16 %v345, %v344
  %v359 = vpack.c.b16 %v347, %v346
  %v360 = vpack.c.b16 %v349, %v348
  %v361 = vpack.c.b16 %v351, %v350
  %v362 = vpack.c.b16 %v353, %v352
  %v363 = vpack.c.b16 %v355, %v354
  %372 = vst [vmem:[%s5] sm:$0xff] %v356
  %373 = vst [vmem:[%s5 + $0x8] sm:$0xff] %v357
  %374 = vst [vmem:[%s5 + $0x10] sm:$0xff] %v358
  %375 = vst [vmem:[%s5 + $0x18] sm:$0xff] %v359
  %376 = vst [vmem:[%s5 + $0x20] sm:$0xff] %v360
  %377 = vst [vmem:[%s5 + $0x28] sm:$0xff] %v361
  %378 = vst [vmem:[%s5 + $0x30] sm:$0xff] %v362
  %379 = vst [vmem:[%s5 + $0x38] sm:$0xff] %v363
  // Predicated region
  $region22: #{blstmn_forward.7} parent=0 // pred_check
    _
  $region23: #{blstmn_forward.7} parent=0 // pred_check_branch
    %381 = sbr.rel (0) target = $region25
  $region24: #{blstmn_forward.7} parent=0 // pred_region
    _
  $region25: #{blstmn_forward.7} parent=0 // pred_fallthru
    _
  // Predicated region
  $region26: #{blstmn_forward.7} parent=0 // pred_check
    _
  $region27: #{blstmn_forward.7} parent=0 // pred_check_branch
    %383 = sbr.rel (0) target = $region29
  $region28: #{blstmn_forward.7} parent=0 // pred_region
    _
  $region29: #{blstmn_forward.7} parent=0 // pred_fallthru
    _

// kernel: blstmn_forward.9
$region0: #{blstmn_forward.9}
  #allocation0 [shape = 'u32[]', space=smem, size = 0x4, offset = 0x4, fixed_abs, tag = 'smem constant byte address 0x4 - core index']
  #allocation1 [shape = 'u32[144,128]{1,0:T(1,128)}', space=vmem, size = 0x12000, scoped, tag = 'internal scratch']
  %s0 = inlined_call_operand.vmem [shape: bf16[64,32], index: 0, kind: input, shape index: {}]
  %s1 = inlined_call_operand.vmem [shape: bf16[64,32], index: 1, kind: input, shape index: {}]
  %s2 = inlined_call_operand.vmem [shape: bf16[32,128], index: 2, kind: input, shape index: {}]
  %s3 = inlined_call_operand.vmem [shape: bf16[32,128], index: 3, kind: input, shape index: {}]
  %s4 = inlined_call_operand.vmem [shape: f32[1,128], index: 4, kind: input, shape index: {}]
  %s5 = inlined_call_operand.vmem [shape: f32[64,128], index: 5, kind: output, shape index: {}]
  %s6 = sld [smem:[#allocation0]]
  $region30: #{blstmn_forward.9} parent=0
    _
  %s8 = ssub.s32 1, %s6
  %s9 = scalar_select 0, %s8, %s6
  // Predicated region
  $region2: #{blstmn_forward.9} parent=0 // pred_check
    _
  $region3: #{blstmn_forward.9} parent=0 // pred_check_branch
    %11 = sbr.rel (0) target = $region5
  $region4: #{blstmn_forward.9} parent=0 // pred_region
    _
  $region5: #{blstmn_forward.9} parent=0 // pred_fallthru
    _
  // Predicated region
  $region6: #{blstmn_forward.9} parent=0 // pred_check
    _
  $region7: #{blstmn_forward.9} parent=0 // pred_check_branch
    %13 = sbr.rel (0) target = $region9
  $region8: #{blstmn_forward.9} parent=0 // pred_region
    _
  $region9: #{blstmn_forward.9} parent=0 // pred_fallthru
    _
  // Predicated region
  $region10: #{blstmn_forward.9} parent=0 // pred_check
    _
  $region11: #{blstmn_forward.9} parent=0 // pred_check_branch
    %15 = sbr.rel (0) target = $region13
  $region12: #{blstmn_forward.9} parent=0 // pred_region
    _
  $region13: #{blstmn_forward.9} parent=0 // pred_fallthru
    _
  // Predicated region
  $region14: #{blstmn_forward.9} parent=0 // pred_check
    _
  $region15: #{blstmn_forward.9} parent=0 // pred_check_branch
    %17 = sbr.rel (0) target = $region17
  $region16: #{blstmn_forward.9} parent=0 // pred_region
    _
  $region17: #{blstmn_forward.9} parent=0 // pred_fallthru
    _
  // Predicated region
  $region18: #{blstmn_forward.9} parent=0 // pred_check
    _
  $region19: #{blstmn_forward.9} parent=0 // pred_check_branch
    %19 = sbr.rel (0) target = $region21
  $region20: #{blstmn_forward.9} parent=0 // pred_region
    _
  $region21: #{blstmn_forward.9} parent=0 // pred_fallthru
    _
  %v21 = vld [vmem:[%s0] sm:$0xf]
  %v22 = vld [vmem:[%s0 + $0x4] sm:$0xf]
  %v23 = vld [vmem:[%s0 + $0x8] sm:$0xf]
  %v24 = vld [vmem:[%s0 + $0xc] sm:$0xf]
  %v25 = vld [vmem:[%s0 + $0x10] sm:$0xf]
  %v26 = vld [vmem:[%s0 + $0x14] sm:$0xf]
  %v27 = vld [vmem:[%s0 + $0x18] sm:$0xf]
  %v28 = vld [vmem:[%s0 + $0x1c] sm:$0xf]
  %v29 = vld [vmem:[%s2] sm:$0xf]
  %v30 = vld [vmem:[%s2 + $0x4] sm:$0xf]
  %v31 = vld [vmem:[%s2 + $0x8] sm:$0xf]
  %v32 = vld [vmem:[%s2 + $0xc] sm:$0xf]
  %v33 = vld [vmem:[%s1] sm:$0xf]
  %v34 = vld [vmem:[%s1 + $0x4] sm:$0xf]
  %v35 = vld [vmem:[%s1 + $0x8] sm:$0xf]
  %v36 = vld [vmem:[%s1 + $0xc] sm:$0xf]
  %v37 = vld [vmem:[%s1 + $0x10] sm:$0xf]
  %v38 = vld [vmem:[%s1 + $0x14] sm:$0xf]
  %v39 = vld [vmem:[%s1 + $0x18] sm:$0xf]
  %v40 = vld [vmem:[%s1 + $0x1c] sm:$0xf]
  %v41 = vld [vmem:[%s3] sm:$0xf]
  %v42 = vld [vmem:[%s3 + $0x4] sm:$0xf]
  %v43 = vld [vmem:[%s3 + $0x8] sm:$0xf]
  %v44 = vld [vmem:[%s3 + $0xc] sm:$0xf]
  %v53 = vunpack.c.l.b16 %v33
  %v54 = vunpack.c.l.b16 %v34
  %v55 = vunpack.c.l.b16 %v35
  %v56 = vunpack.c.l.b16 %v36
  %v57 = vunpack.c.l.b16 %v37
  %v58 = vunpack.c.l.b16 %v38
  %v59 = vunpack.c.l.b16 %v39
  %v60 = vunpack.c.l.b16 %v40
  %v61 = vpack.c.b16 %v54, %v53
  %v62 = vpack.c.b16 %v56, %v55
  %v63 = vpack.c.b16 %v58, %v57
  %v64 = vpack.c.b16 %v60, %v59
  %v69 = vunpack.c.l.b16 %v41
  %v70 = vunpack.c.l.b16 %v42
  %v71 = vunpack.c.l.b16 %v43
  %v72 = vunpack.c.l.b16 %v44
  %v73 = vpack.c.b16 %v70, %v69
  %v74 = vpack.c.b16 %v72, %v71
  %vm77 = vcmask 261120
  %v79 = vsel %vm77, %v61, 0
  %v82 = vsel %vm77, %v62, 0
  %v85 = vsel %vm77, %v63, 0
  %v88 = vsel %vm77, %v64, 0
  %90 = vmatprep.subr.bf16.mxu0 0
  %91 = vmatpush1.bf16.msra.mxu0 %v73
  %92 = vmatprep.subr.bf16.mxu0 0
  %93 = vmatpush1.bf16.msra.mxu0 %v74
  %94 = vmatprep.subr.bf16.mxu0 0
  %95 = vmatpush1.bf16.msra.mxu0 0
  %96 = vmatprep.subr.bf16.mxu0 0
  %97 = vmatpush1.bf16.msra.mxu0 0
  %98 = vmatprep.subr.bf16.mxu0 0
  %99 = vmatpush1.bf16.msra.mxu0 0
  %100 = vmatprep.subr.bf16.mxu0 0
  %101 = vmatpush1.bf16.msra.mxu0 0
  %102 = vmatprep.subr.bf16.mxu0 0
  %103 = vmatpush1.bf16.msra.mxu0 0
  %104 = vmatprep.subr.bf16.mxu0 0
  %105 = vmatpush1.bf16.msra.mxu0 0
  %106 = vmatprep.subr.bf16.mxu0 0
  %107 = vmatpush1.bf16.msra.mxu0 0
  %108 = vmatprep.subr.bf16.mxu0 0
  %109 = vmatpush1.bf16.msra.mxu0 0
  %110 = vmatprep.subr.bf16.mxu0 0
  %111 = vmatpush1.bf16.msra.mxu0 0
  %112 = vmatprep.subr.bf16.mxu0 0
  %113 = vmatpush1.bf16.msra.mxu0 0
  %114 = vmatprep.subr.bf16.mxu0 0
  %115 = vmatpush1.bf16.msra.mxu0 0
  %116 = vmatprep.subr.bf16.mxu0 0
  %117 = vmatpush1.bf16.msra.mxu0 0
  %118 = vmatprep.subr.bf16.mxu0 0
  %119 = vmatpush1.bf16.msra.mxu0 0
  %120 = vmatprep.subr.bf16.mxu0 0
  %121 = vmatpush1.bf16.msra.mxu0 0
  %122 = vmatprep.mubr.bf16.mxu0 0
  %123 = vmatmul.mubr.bf16.gmra.mrb[0].mxu0 %v79
  %v124 = vpop.f32.mrb[0].mxu0
  %v125 = vadd.f32 0.0, %v124
  %v126 = vpop.f32.mrb[0].mxu0
  %v127 = vpop.f32.mrb[0].mxu0
  %v128 = vadd.f32 0.0, %v127
  %v129 = vpop.f32.mrb[0].mxu0
  %130 = vmatprep.mubr.bf16.mxu0 0
  %131 = vmatmul.mubr.bf16.gmra.mrb[0].mxu0 %v82
  %v132 = vpop.f32.mrb[0].mxu0
  %v133 = vadd.f32 0.0, %v132
  %v134 = vpop.f32.mrb[0].mxu0
  %v135 = vpop.f32.mrb[0].mxu0
  %v136 = vadd.f32 0.0, %v135
  %v137 = vpop.f32.mrb[0].mxu0
  %138 = vmatprep.mubr.bf16.mxu0 0
  %139 = vmatmul.mubr.bf16.gmra.mrb[0].mxu0 %v85
  %v140 = vpop.f32.mrb[0].mxu0
  %v141 = vadd.f32 0.0, %v140
  %v142 = vpop.f32.mrb[0].mxu0
  %v143 = vpop.f32.mrb[0].mxu0
  %v144 = vadd.f32 0.0, %v143
  %v145 = vpop.f32.mrb[0].mxu0
  %146 = vmatprep.mubr.bf16.mxu0 0
  %147 = vmatmul.mubr.bf16.gmra.mrb[0].mxu0 %v88
  %v148 = vpop.f32.mrb[0].mxu0
  %v149 = vadd.f32 0.0, %v148
  %v150 = vpop.f32.mrb[0].mxu0
  %v151 = vpop.f32.mrb[0].mxu0
  %v152 = vadd.f32 0.0, %v151
  %v153 = vpop.f32.mrb[0].mxu0
  %154 = vdwg.mxu0
  %v163 = vunpack.c.l.b16 %v21
  %v164 = vunpack.c.l.b16 %v22
  %v165 = vunpack.c.l.b16 %v23
  %v166 = vunpack.c.l.b16 %v24
  %v167 = vunpack.c.l.b16 %v25
  %v168 = vunpack.c.l.b16 %v26
  %v169 = vunpack.c.l.b16 %v27
  %v170 = vunpack.c.l.b16 %v28
  %v171 = vpack.c.b16 %v164, %v163
  %v172 = vpack.c.b16 %v166, %v165
  %v173 = vpack.c.b16 %v168, %v167
  %v174 = vpack.c.b16 %v170, %v169
  %v179 = vunpack.c.l.b16 %v29
  %v180 = vunpack.c.l.b16 %v30
  %v181 = vunpack.c.l.b16 %v31
  %v182 = vunpack.c.l.b16 %v32
  %v183 = vpack.c.b16 %v180, %v179
  %v184 = vpack.c.b16 %v182, %v181
  %v188 = vsel %vm77, %v171, 0
  %v191 = vsel %vm77, %v172, 0
  %v194 = vsel %vm77, %v173, 0
  %v197 = vsel %vm77, %v174, 0
  %199 = vmatprep.subr.bf16.mxu0 0
  %200 = vmatpush1.bf16.msra.mxu0 %v183
  %201 = vmatprep.subr.bf16.mxu0 0
  %202 = vmatpush1.bf16.msra.mxu0 %v184
  %203 = vmatprep.subr.bf16.mxu0 0
  %204 = vmatpush1.bf16.msra.mxu0 0
  %205 = vmatprep.subr.bf16.mxu0 0
  %206 = vmatpush1.bf16.msra.mxu0 0
  %207 = vmatprep.subr.bf16.mxu0 0
  %208 = vmatpush1.bf16.msra.mxu0 0
  %209 = vmatprep.subr.bf16.mxu0 0
  %210 = vmatpush1.bf16.msra.mxu0 0
  %211 = vmatprep.subr.bf16.mxu0 0
  %212 = vmatpush1.bf16.msra.mxu0 0
  %213 = vmatprep.subr.bf16.mxu0 0
  %214 = vmatpush1.bf16.msra.mxu0 0
  %215 = vmatprep.subr.bf16.mxu0 0
  %216 = vmatpush1.bf16.msra.mxu0 0
  %217 = vmatprep.subr.bf16.mxu0 0
  %218 = vmatpush1.bf16.msra.mxu0 0
  %219 = vmatprep.subr.bf16.mxu0 0
  %220 = vmatpush1.bf16.msra.mxu0 0
  %221 = vmatprep.subr.bf16.mxu0 0
  %222 = vmatpush1.bf16.msra.mxu0 0
  %223 = vmatprep.subr.bf16.mxu0 0
  %224 = vmatpush1.bf16.msra.mxu0 0
  %225 = vmatprep.subr.bf16.mxu0 0
  %226 = vmatpush1.bf16.msra.mxu0 0
  %227 = vmatprep.subr.bf16.mxu0 0
  %228 = vmatpush1.bf16.msra.mxu0 0
  %229 = vmatprep.subr.bf16.mxu0 0
  %230 = vmatpush1.bf16.msra.mxu0 0
  %231 = vmatprep.mubr.bf16.mxu0 0
  %232 = vmatmul.mubr.bf16.gmra.mrb[0].mxu0 %v188
  %v233 = vpop.f32.mrb[0].mxu0
  %v234 = vadd.f32 %v125, %v233
  %v235 = vpop.f32.mrb[0].mxu0
  %v236 = vpop.f32.mrb[0].mxu0
  %v237 = vadd.f32 %v128, %v236
  %v238 = vpop.f32.mrb[0].mxu0
  %239 = vmatprep.mubr.bf16.mxu0 0
  %240 = vmatmul.mubr.bf16.gmra.mrb[0].mxu0 %v191
  %v241 = vpop.f32.mrb[0].mxu0
  %v242 = vadd.f32 %v133, %v241
  %v243 = vpop.f32.mrb[0].mxu0
  %v244 = vpop.f32.mrb[0].mxu0
  %v245 = vadd.f32 %v136, %v244
  %v246 = vpop.f32.mrb[0].mxu0
  %247 = vmatprep.mubr.bf16.mxu0 0
  %248 = vmatmul.mubr.bf16.gmra.mrb[0].mxu0 %v194
  %v249 = vpop.f32.mrb[0].mxu0
  %v250 = vadd.f32 %v141, %v249
  %v251 = vpop.f32.mrb[0].mxu0
  %v252 = vpop.f32.mrb[0].mxu0
  %v253 = vadd.f32 %v144, %v252
  %v254 = vpop.f32.mrb[0].mxu0
  %255 = vmatprep.mubr.bf16.mxu0 0
  %256 = vmatmul.mubr.bf16.gmra.mrb[0].mxu0 %v197
  %v257 = vpop.f32.mrb[0].mxu0
  %v258 = vadd.f32 %v149, %v257
  %v259 = vpop.f32.mrb[0].mxu0
  %v260 = vpop.f32.mrb[0].mxu0
  %v261 = vadd.f32 %v152, %v260
  %v262 = vpop.f32.mrb[0].mxu0
  %263 = vdwg.mxu0
  %v264 = vld [vmem:[%s4] sm:$0x1]
  %v266 = vlaneseq
  %v267 = vshrl.u32 %v266, 7
  %v268 = vsub.s32 0, %v267
  %v269 = vrot.slane %v264, %v268
  %v271 = vadd.f32 %v234, %v269
  %v272 = vadd.f32 %v237, %v269
  %v273 = vadd.f32 %v242, %v269
  %v274 = vadd.f32 %v245, %v269
  %v275 = vadd.f32 %v250, %v269
  %v276 = vadd.f32 %v253, %v269
  %v277 = vadd.f32 %v258, %v269
  %v278 = vadd.f32 %v261, %v269
  %279 = vst [vmem:[%s5] sm:$0xff] %v271
  %280 = vst [vmem:[%s5 + $0x8] sm:$0xff] %v272
  %281 = vst [vmem:[%s5 + $0x10] sm:$0xff] %v273
  %282 = vst [vmem:[%s5 + $0x18] sm:$0xff] %v274
  %283 = vst [vmem:[%s5 + $0x20] sm:$0xff] %v275
  %284 = vst [vmem:[%s5 + $0x28] sm:$0xff] %v276
  %285 = vst [vmem:[%s5 + $0x30] sm:$0xff] %v277
  %286 = vst [vmem:[%s5 + $0x38] sm:$0xff] %v278
  // Predicated region
  $region22: #{blstmn_forward.9} parent=0 // pred_check
    _
  $region23: #{blstmn_forward.9} parent=0 // pred_check_branch
    %288 = sbr.rel (0) target = $region25
  $region24: #{blstmn_forward.9} parent=0 // pred_region
    _
  $region25: #{blstmn_forward.9} parent=0 // pred_fallthru
    _
  // Predicated region
  $region26: #{blstmn_forward.9} parent=0 // pred_check
    _
  $region27: #{blstmn_forward.9} parent=0 // pred_check_branch
    %290 = sbr.rel (0) target = $region29
  $region28: #{blstmn_forward.9} parent=0 // pred_region
    _
  $region29: #{blstmn_forward.9} parent=0 // pred_fallthru
    _

// kernel: blstmn_forward.6
$region0: #{blstmn_forward.6}
  #allocation0 [shape = 'u32[]', space=smem, size = 0x4, offset = 0x4, fixed_abs, tag = 'smem constant byte address 0x4 - core index']
  #allocation1 [shape = 'u32[144,128]{1,0:T(1,128)}', space=vmem, size = 0x12000, scoped, tag = 'internal scratch']
  #allocation2 [shape = 'f32[8,32]{1,0:T(8,128)}', space=vmem, size = 0x1000, scoped, tag = 'scratch operand']
  #allocation3 [shape = 'f32[8,32]{1,0:T(8,128)}', space=vmem, size = 0x1000, scoped, tag = 'scratch operand']
  #allocation4 [shape = 'f32[8,32]{1,0:T(8,128)}', space=vmem, size = 0x1000, scoped, tag = 'scratch operand']
  #allocation5 [shape = 'f32[8,32]{1,0:T(8,128)}', space=vmem, size = 0x1000, scoped, tag = 'scratch operand']
  %s0 = inlined_call_operand.vmem [shape: bf16[8,8,256], index: 0, kind: input, shape index: {}, may-alias: {0,1}]
  %s1 = inlined_call_operand.vmem [shape: bf16[8,8,256], index: 1, kind: input, shape index: {}, may-alias: {0,1}]
  %s2 = inlined_call_operand.vmem [shape: f32[8,8,1], index: 2, kind: input, shape index: {}, may-alias: {2,3}]
  %s3 = inlined_call_operand.vmem [shape: f32[8,8,1], index: 3, kind: input, shape index: {}, may-alias: {2,3}]
  %s4 = inlined_call_operand.vmem [shape: bf16[2,32,128], index: 4, kind: input, shape index: {}]
  %s5 = inlined_call_operand.vmem [shape: bf16[8,8,32], index: 5, kind: output, shape index: {0}]
  %s6 = inlined_call_operand.vmem [shape: bf16[8,8,32], index: 6, kind: output, shape index: {1}]
  %7 = xla_tuple %s5, %s6
  %s8 = sld [smem:[#allocation0]]
  $region124: #{blstmn_forward.6} parent=0
    _
  %s10 = ssub.s32 1, %s8
  %s11 = scalar_select 0, %s10, %s8
  $region1: #{blstmn_forward.6} parent=0
    #allocation6 [shape = 'u8[16384]{0}', space=vmem, size = 0x4000, scoped, tag = 'input window, operand 0, single buffered']
    #allocation7 [shape = 'u8[16384]{0}', space=vmem, size = 0x4000, scoped, tag = 'input window, operand 1, single buffered']
    // Predicated region
    $region2: #{blstmn_forward.6} parent=1 // pred_check
      _
    $region3: #{blstmn_forward.6} parent=1 // pred_check_branch
      %13 = sbr.rel (0) target = $region5
    $region4: #{blstmn_forward.6} parent=1 // pred_region
      // Predicated region
      $region6: #{blstmn_forward.6} parent=4 // pred_check
        _
      $region7: #{blstmn_forward.6} parent=4 // pred_check_branch
        %15 = sbr.rel (0) target = $region9
      $region8: #{blstmn_forward.6} parent=4 // pred_region
        // Predicated region
        $region10: #{blstmn_forward.6} parent=8 // pred_check
          _
        $region11: #{blstmn_forward.6} parent=8 // pred_check_branch
          %17 = sbr.rel target = $region13
        $region12: #{blstmn_forward.6} parent=8 // pred_region
          // Predicated region
          $region25: #{blstmn_forward.6} parent=12 // pred_check
            _
          $region26: #{blstmn_forward.6} parent=12 // pred_check_branch
            %46 = sbr.rel (0) target = $region28
          $region27: #{blstmn_forward.6} parent=12 // pred_region
            loop: start=0, step=1, limit=1
            $region29: #{blstmn_forward.6} parent=27 // loop_pre_header
              _
            $region30: #{blstmn_forward.6} parent=27 // loop_header
              %s48 = sphi 0, %s52
              %p49 = scmp.ge.s32.totalorder %s48, 1
              %s53 = sphi %s0, %s0
              %s54 = sphi [#allocation6], [#allocation6]
            $region31: #{blstmn_forward.6} parent=27 // loop_header_branch
              %51 = sbr.rel (%p49) target = $region35
            $region32: #{blstmn_forward.6} parent=27 // loop_body
              _
            $region33: #{blstmn_forward.6} parent=27 // loop_footer
              %s52 = sadd.s32 1, %s48
            $region34: #{blstmn_forward.6} parent=27 // loop_footer_branch
              %47 = sbr.rel target = $region30
            $region35: #{blstmn_forward.6} parent=27 // loop_exit
              _
            loop: start=0, step=1, limit=1
            $region36: #{blstmn_forward.6} parent=27 // loop_pre_header
              _
            $region37: #{blstmn_forward.6} parent=27 // loop_header
              %s57 = sphi 0, %s61
              %p58 = scmp.ge.s32.totalorder %s57, 1
              %s62 = sphi %s0, %s0
              %s63 = sphi [#allocation6], [#allocation6]
            $region38: #{blstmn_forward.6} parent=27 // loop_header_branch
              %60 = sbr.rel (%p58) target = $region42
            $region39: #{blstmn_forward.6} parent=27 // loop_body
              %v64 = vld [vmem:[%s62] sm:$0xf]
              %65 = vst [vmem:[%s63] sm:$0xf] %v64
              %v66 = vld [vmem:[%s62 + $0x8] sm:$0xf]
              %67 = vst [vmem:[%s63 + $0x4] sm:$0xf] %v66
              %v68 = vld [vmem:[%s62 + $0x10] sm:$0xf]
              %69 = vst [vmem:[%s63 + $0x8] sm:$0xf] %v68
              %v70 = vld [vmem:[%s62 + $0x18] sm:$0xf]
              %71 = vst [vmem:[%s63 + $0xc] sm:$0xf] %v70
              %v72 = vld [vmem:[%s62 + $0x20] sm:$0xf]
              %73 = vst [vmem:[%s63 + $0x10] sm:$0xf] %v72
              %v74 = vld [vmem:[%s62 + $0x28] sm:$0xf]
              %75 = vst [vmem:[%s63 + $0x14] sm:$0xf] %v74
              %v76 = vld [vmem:[%s62 + $0x30] sm:$0xf]
              %77 = vst [vmem:[%s63 + $0x18] sm:$0xf] %v76
              %v78 = vld [vmem:[%s62 + $0x38] sm:$0xf]
              %79 = vst [vmem:[%s63 + $0x1c] sm:$0xf] %v78
            $region40: #{blstmn_forward.6} parent=27 // loop_footer
              %s61 = sadd.s32 1, %s57
            $region41: #{blstmn_forward.6} parent=27 // loop_footer_branch
              %56 = sbr.rel target = $region37
            $region42: #{blstmn_forward.6} parent=27 // loop_exit
              _
          $region28: #{blstmn_forward.6} parent=12 // pred_fallthru
            _
        $region13: #{blstmn_forward.6} parent=8 // pred_fallthru
          _
        // Predicated region
        $region14: #{blstmn_forward.6} parent=8 // pred_check
          _
        $region15: #{blstmn_forward.6} parent=8 // pred_check_branch
          %19 = sbr.rel (0) target = $region17
        $region16: #{blstmn_forward.6} parent=8 // pred_region
          loop: start=0, step=1, limit=1
          $region18: #{blstmn_forward.6} parent=16 // loop_pre_header
            _
          $region19: #{blstmn_forward.6} parent=16 // loop_header
            %s22 = sphi 0, %s26
            %p23 = scmp.ge.s32.totalorder %s22, 1
            %s27 = sphi %s0, %s0
            %s28 = sphi [#allocation6], [#allocation6]
          $region20: #{blstmn_forward.6} parent=16 // loop_header_branch
            %25 = sbr.rel (%p23) target = $region24
          $region21: #{blstmn_forward.6} parent=16 // loop_body
            %v29 = vld [vmem:[%s27] sm:$0xf]
            %30 = vst [vmem:[%s28] sm:$0xf] %v29
            %v31 = vld [vmem:[%s27 + $0x8] sm:$0xf]
            %32 = vst [vmem:[%s28 + $0x4] sm:$0xf] %v31
            %v33 = vld [vmem:[%s27 + $0x10] sm:$0xf]
            %34 = vst [vmem:[%s28 + $0x8] sm:$0xf] %v33
            %v35 = vld [vmem:[%s27 + $0x18] sm:$0xf]
            %36 = vst [vmem:[%s28 + $0xc] sm:$0xf] %v35
            %v37 = vld [vmem:[%s27 + $0x20] sm:$0xf]
            %38 = vst [vmem:[%s28 + $0x10] sm:$0xf] %v37
            %v39 = vld [vmem:[%s27 + $0x28] sm:$0xf]
            %40 = vst [vmem:[%s28 + $0x14] sm:$0xf] %v39
            %v41 = vld [vmem:[%s27 + $0x30] sm:$0xf]
            %42 = vst [vmem:[%s28 + $0x18] sm:$0xf] %v41
            %v43 = vld [vmem:[%s27 + $0x38] sm:$0xf]
            %44 = vst [vmem:[%s28 + $0x1c] sm:$0xf] %v43
          $region22: #{blstmn_forward.6} parent=16 // loop_footer
            %s26 = sadd.s32 1, %s22
          $region23: #{blstmn_forward.6} parent=16 // loop_footer_branch
            %21 = sbr.rel target = $region19
          $region24: #{blstmn_forward.6} parent=16 // loop_exit
            _
        $region17: #{blstmn_forward.6} parent=8 // pred_fallthru
          _
      $region9: #{blstmn_forward.6} parent=4 // pred_fallthru
        _
      %80 = vnop
    $region5: #{blstmn_forward.6} parent=1 // pred_fallthru
      _
    // Predicated region
    $region43: #{blstmn_forward.6} parent=1 // pred_check
      _
    $region44: #{blstmn_forward.6} parent=1 // pred_check_branch
      %82 = sbr.rel (0) target = $region46
    $region45: #{blstmn_forward.6} parent=1 // pred_region
      %s83 = ssub.s32 0, 0
      %s84 = smul.u32 8, %s83
      %s85 = smul.addr %s84, 2
      %s86 = sadd.s32 1, %s85
      %s87 = smul.addr %s86, 4
      %s88 = scalar_lea.vmem %s1, %s87
      // Predicated region
      $region47: #{blstmn_forward.6} parent=45 // pred_check
        _
      $region48: #{blstmn_forward.6} parent=45 // pred_check_branch
        %90 = sbr.rel (0) target = $region50
      $region49: #{blstmn_forward.6} parent=45 // pred_region
        // Predicated region
        $region51: #{blstmn_forward.6} parent=49 // pred_check
          _
        $region52: #{blstmn_forward.6} parent=49 // pred_check_branch
          %92 = sbr.rel target = $region54
        $region53: #{blstmn_forward.6} parent=49 // pred_region
          // Predicated region
          $region66: #{blstmn_forward.6} parent=53 // pred_check
            _
          $region67: #{blstmn_forward.6} parent=53 // pred_check_branch
            %121 = sbr.rel (0) target = $region69
          $region68: #{blstmn_forward.6} parent=53 // pred_region
            loop: start=0, step=1, limit=1
            $region70: #{blstmn_forward.6} parent=68 // loop_pre_header
              _
            $region71: #{blstmn_forward.6} parent=68 // loop_header
              %s123 = sphi 0, %s127
              %p124 = scmp.ge.s32.totalorder %s123, 1
              %s128 = sphi %s88, %s88
              %s129 = sphi [#allocation7], [#allocation7]
            $region72: #{blstmn_forward.6} parent=68 // loop_header_branch
              %126 = sbr.rel (%p124) target = $region76
            $region73: #{blstmn_forward.6} parent=68 // loop_body
              _
            $region74: #{blstmn_forward.6} parent=68 // loop_footer
              %s127 = sadd.s32 1, %s123
            $region75: #{blstmn_forward.6} parent=68 // loop_footer_branch
              %122 = sbr.rel target = $region71
            $region76: #{blstmn_forward.6} parent=68 // loop_exit
              _
            loop: start=0, step=1, limit=1
            $region77: #{blstmn_forward.6} parent=68 // loop_pre_header
              _
            $region78: #{blstmn_forward.6} parent=68 // loop_header
              %s132 = sphi 0, %s136
              %p133 = scmp.ge.s32.totalorder %s132, 1
              %s137 = sphi %s88, %s88
              %s138 = sphi [#allocation7], [#allocation7]
            $region79: #{blstmn_forward.6} parent=68 // loop_header_branch
              %135 = sbr.rel (%p133) target = $region83
            $region80: #{blstmn_forward.6} parent=68 // loop_body
              %v139 = vld [vmem:[%s137] sm:$0xf]
              %140 = vst [vmem:[%s138] sm:$0xf] %v139
              %v141 = vld [vmem:[%s137 + $0x8] sm:$0xf]
              %142 = vst [vmem:[%s138 + $0x4] sm:$0xf] %v141
              %v143 = vld [vmem:[%s137 + $0x10] sm:$0xf]
              %144 = vst [vmem:[%s138 + $0x8] sm:$0xf] %v143
              %v145 = vld [vmem:[%s137 + $0x18] sm:$0xf]
              %146 = vst [vmem:[%s138 + $0xc] sm:$0xf] %v145
              %v147 = vld [vmem:[%s137 + $0x20] sm:$0xf]
              %148 = vst [vmem:[%s138 + $0x10] sm:$0xf] %v147
              %v149 = vld [vmem:[%s137 + $0x28] sm:$0xf]
              %150 = vst [vmem:[%s138 + $0x14] sm:$0xf] %v149
              %v151 = vld [vmem:[%s137 + $0x30] sm:$0xf]
              %152 = vst [vmem:[%s138 + $0x18] sm:$0xf] %v151
              %v153 = vld [vmem:[%s137 + $0x38] sm:$0xf]
              %154 = vst [vmem:[%s138 + $0x1c] sm:$0xf] %v153
            $region81: #{blstmn_forward.6} parent=68 // loop_footer
              %s136 = sadd.s32 1, %s132
            $region82: #{blstmn_forward.6} parent=68 // loop_footer_branch
              %131 = sbr.rel target = $region78
            $region83: #{blstmn_forward.6} parent=68 // loop_exit
              _
          $region69: #{blstmn_forward.6} parent=53 // pred_fallthru
            _
        $region54: #{blstmn_forward.6} parent=49 // pred_fallthru
          _
        // Predicated region
        $region55: #{blstmn_forward.6} parent=49 // pred_check
          _
        $region56: #{blstmn_forward.6} parent=49 // pred_check_branch
          %94 = sbr.rel (0) target = $region58
        $region57: #{blstmn_forward.6} parent=49 // pred_region
          loop: start=0, step=1, limit=1
          $region59: #{blstmn_forward.6} parent=57 // loop_pre_header
            _
          $region60: #{blstmn_forward.6} parent=57 // loop_header
            %s97 = sphi 0, %s101
            %p98 = scmp.ge.s32.totalorder %s97, 1
            %s102 = sphi %s88, %s88
            %s103 = sphi [#allocation7], [#allocation7]
          $region61: #{blstmn_forward.6} parent=57 // loop_header_branch
            %100 = sbr.rel (%p98) target = $region65
          $region62: #{blstmn_forward.6} parent=57 // loop_body
            %v104 = vld [vmem:[%s102] sm:$0xf]
            %105 = vst [vmem:[%s103] sm:$0xf] %v104
            %v106 = vld [vmem:[%s102 + $0x8] sm:$0xf]
            %107 = vst [vmem:[%s103 + $0x4] sm:$0xf] %v106
            %v108 = vld [vmem:[%s102 + $0x10] sm:$0xf]
            %109 = vst [vmem:[%s103 + $0x8] sm:$0xf] %v108
            %v110 = vld [vmem:[%s102 + $0x18] sm:$0xf]
            %111 = vst [vmem:[%s103 + $0xc] sm:$0xf] %v110
            %v112 = vld [vmem:[%s102 + $0x20] sm:$0xf]
            %113 = vst [vmem:[%s103 + $0x10] sm:$0xf] %v112
            %v114 = vld [vmem:[%s102 + $0x28] sm:$0xf]
            %115 = vst [vmem:[%s103 + $0x14] sm:$0xf] %v114
            %v116 = vld [vmem:[%s102 + $0x30] sm:$0xf]
            %117 = vst [vmem:[%s103 + $0x18] sm:$0xf] %v116
            %v118 = vld [vmem:[%s102 + $0x38] sm:$0xf]
            %119 = vst [vmem:[%s103 + $0x1c] sm:$0xf] %v118
          $region63: #{blstmn_forward.6} parent=57 // loop_footer
            %s101 = sadd.s32 1, %s97
          $region64: #{blstmn_forward.6} parent=57 // loop_footer_branch
            %96 = sbr.rel target = $region60
          $region65: #{blstmn_forward.6} parent=57 // loop_exit
            _
        $region58: #{blstmn_forward.6} parent=49 // pred_fallthru
          _
      $region50: #{blstmn_forward.6} parent=45 // pred_fallthru
        _
      %155 = vnop
    $region46: #{blstmn_forward.6} parent=1 // pred_fallthru
      _
    // Predicated region
    $region84: #{blstmn_forward.6} parent=1 // pred_check
      _
    $region85: #{blstmn_forward.6} parent=1 // pred_check_branch
      %157 = sbr.rel (0) target = $region87
    $region86: #{blstmn_forward.6} parent=1 // pred_region
      _
    $region87: #{blstmn_forward.6} parent=1 // pred_fallthru
      _
    // Predicated region
    $region88: #{blstmn_forward.6} parent=1 // pred_check
      _
    $region89: #{blstmn_forward.6} parent=1 // pred_check_branch
      %159 = sbr.rel (0) target = $region91
    $region90: #{blstmn_forward.6} parent=1 // pred_region
      %s160 = ssub.s32 0, 0
      %s161 = smul.u32 8, %s160
      %p162 = scmp.lt.s32.totalorder %s161, 7
      %s163 = scalar_select %p162, %s161, 7
      %s164 = smul.addr %s163, 8
      %s165 = scalar_lea.vmem %s3, %s164
      %s166 = ssub.s32 0, 0
      %s167 = smul.u32 8, %s166
    $region91: #{blstmn_forward.6} parent=1 // pred_fallthru
      _
    // Predicated region
    $region92: #{blstmn_forward.6} parent=1 // pred_check
      _
    $region93: #{blstmn_forward.6} parent=1 // pred_check_branch
      %169 = sbr.rel (0) target = $region95
    $region94: #{blstmn_forward.6} parent=1 // pred_region
      _
    $region95: #{blstmn_forward.6} parent=1 // pred_fallthru
      _
    // Predicated region
    $region96: #{blstmn_forward.6} parent=1 // pred_check
      _
    $region97: #{blstmn_forward.6} parent=1 // pred_check_branch
      %171 = sbr.rel (0) target = $region99
    $region98: #{blstmn_forward.6} parent=1 // pred_region
      _
    $region99: #{blstmn_forward.6} parent=1 // pred_fallthru
      _
    // Predicated region
    $region100: #{blstmn_forward.6} parent=1 // pred_check
      _
    $region101: #{blstmn_forward.6} parent=1 // pred_check_branch
      %173 = sbr.rel (0) target = $region103
    $region102: #{blstmn_forward.6} parent=1 // pred_region
      _
    $region103: #{blstmn_forward.6} parent=1 // pred_fallthru
      _
    %s174 = ssub.s32 0, 0
    %s175 = smul.u32 8, %s174
    %p176 = scmp.lt.s32.totalorder %s175, 7
    %s177 = scalar_select %p176, %s175, 7
    %s178 = smul.addr %s177, 8
    %s179 = scalar_lea.vmem %s3, %s178
    %s180 = ssub.s32 0, 0
    %s181 = smul.u32 8, %s180
    %p182 = scmp.lt.s32.totalorder %s181, 7
    %s183 = scalar_select %p182, %s181, 7
    %s184 = smul.addr %s183, 4
    %s185 = scalar_lea.vmem %s6, %s184
    %s186 = ssub.s32 0, 0
    %s187 = smul.u32 8, %s186
    %s188 = ssub.s32 0, 0
    %s189 = smul.u32 8, %s188
    %p190 = scmp.lt.s32.totalorder %s189, 7
    %s191 = scalar_select %p190, %s189, 7
    %s192 = smul.addr %s191, 8
    %s193 = scalar_lea.vmem %s3, %s192
    %s194 = ssub.s32 0, 0
    %s195 = smul.u32 8, %s194
    %s196 = ssub.s32 0, 0
    %s197 = smul.u32 8, %s196
    %p198 = scmp.lt.s32.totalorder %s197, 7
    %s199 = scalar_select %p198, %s197, 7
    %s200 = smul.addr %s199, 4
    %s201 = scalar_lea.vmem %s6, %s200
    %s202 = ssub.s32 0, 0
    %s203 = smul.u32 8, %s202
    %p205 = scmp.eq.s32.totalorder 0, 0
    // Predicated region
    $region104: #{blstmn_forward.6} parent=1 // pred_check
      %p206 = pneg %p205
    $region105: #{blstmn_forward.6} parent=1 // pred_check_branch
      %208 = sbr.rel (%p206) target = $region107
    $region106: #{blstmn_forward.6} parent=1 // pred_region
      %vm209 = vcmask 261120
      %210 = vst.msk [vmem:[#allocation2] sm:$0xff] %vm209, 0.0
      %211 = vst.msk [vmem:[#allocation3] sm:$0xff] %vm209, 0.0
      %212 = vst.msk [vmem:[#allocation4] sm:$0xff] %vm209, 0.0
      %213 = vst.msk [vmem:[#allocation5] sm:$0xff] %vm209, 0.0
    $region107: #{blstmn_forward.6} parent=1 // pred_fallthru
      _
    %v214 = vld [vmem:[%s4] sm:$0xf]
    %v215 = vld [vmem:[%s4 + $0x4] sm:$0xf]
    %v216 = vld [vmem:[%s4 + $0x8] sm:$0xf]
    %v217 = vld [vmem:[%s4 + $0xc] sm:$0xf]
    %s218 = scalar_lea.vmem %s4, 16
    %v219 = vld [vmem:[%s218] sm:$0xf]
    %v220 = vld [vmem:[%s218 + $0x4] sm:$0xf]
    %v221 = vld [vmem:[%s218 + $0x8] sm:$0xf]
    %v222 = vld [vmem:[%s218 + $0xc] sm:$0xf]
    %v223 = vld [vmem:[#allocation6] sm:$0xf]
    %v224 = vld [vmem:[#allocation2] sm:$0xff]
    %v225 = vpack.c.bf16 %v224, %v224
    %v230 = vunpack.c.l.b16 %v214
    %v231 = vunpack.c.l.b16 %v215
    %v232 = vunpack.c.l.b16 %v216
    %v233 = vunpack.c.l.b16 %v217
    %v234 = vpack.c.b16 %v231, %v230
    %v235 = vpack.c.b16 %v233, %v232
    %vm238 = vcmask 261120
    %v240 = vsel %vm238, %v225, 0
    %242 = vmatprep.subr.bf16.mxu0 0
    %243 = vmatpush1.bf16.msra.mxu0 %v234
    %244 = vmatprep.subr.bf16.mxu0 0
    %245 = vmatpush1.bf16.msra.mxu0 %v235
    %246 = vmatprep.subr.bf16.mxu0 0
    %247 = vmatpush1.bf16.msra.mxu0 0
    %248 = vmatprep.subr.bf16.mxu0 0
    %249 = vmatpush1.bf16.msra.mxu0 0
    %250 = vmatprep.subr.bf16.mxu0 0
    %251 = vmatpush1.bf16.msra.mxu0 0
    %252 = vmatprep.subr.bf16.mxu0 0
    %253 = vmatpush1.bf16.msra.mxu0 0
    %254 = vmatprep.subr.bf16.mxu0 0
    %255 = vmatpush1.bf16.msra.mxu0 0
    %256 = vmatprep.subr.bf16.mxu0 0
    %257 = vmatpush1.bf16.msra.mxu0 0
    %258 = vmatprep.subr.bf16.mxu0 0
    %259 = vmatpush1.bf16.msra.mxu0 0
    %260 = vmatprep.subr.bf16.mxu0 0
    %261 = vmatpush1.bf16.msra.mxu0 0
    %262 = vmatprep.subr.bf16.mxu0 0
    %263 = vmatpush1.bf16.msra.mxu0 0
    %264 = vmatprep.subr.bf16.mxu0 0
    %265 = vmatpush1.bf16.msra.mxu0 0
    %266 = vmatprep.subr.bf16.mxu0 0
    %267 = vmatpush1.bf16.msra.mxu0 0
    %268 = vmatprep.subr.bf16.mxu0 0
    %269 = vmatpush1.bf16.msra.mxu0 0
    %270 = vmatprep.subr.bf16.mxu0 0
    %271 = vmatpush1.bf16.msra.mxu0 0
    %272 = vmatprep.subr.bf16.mxu0 0
    %273 = vmatpush1.bf16.msra.mxu0 0
    %274 = vmatprep.mubr.bf16.mxu0 0
    %275 = vmatmul.mubr.bf16.gmra.mrb[0].mxu0 %v240
    %v276 = vpop.f32.mrb[0].mxu0
    %v277 = vadd.f32 0.0, %v276
    %v278 = vpop.f32.mrb[0].mxu0
    %v279 = vpop.f32.mrb[0].mxu0
    %v280 = vpop.f32.mrb[0].mxu0
    %281 = vdwg.mxu0
    %v282 = vunpack.c.l.bf16 %v223
    %v283 = vadd.f32 %v282, %v277
    %s284 = scalar_lea.vmem [#allocation7], 28
    %v285 = vld [vmem:[%s284] sm:$0xf]
    %v286 = vld [vmem:[#allocation4] sm:$0xff]
    %v287 = vpack.c.bf16 %v286, %v286
    %v292 = vunpack.c.l.b16 %v219
    %v293 = vunpack.c.l.b16 %v220
    %v294 = vunpack.c.l.b16 %v221
    %v295 = vunpack.c.l.b16 %v222
    %v296 = vpack.c.b16 %v293, %v292
    %v297 = vpack.c.b16 %v295, %v294
    %v301 = vsel %vm238, %v287, 0
    %303 = vmatprep.subr.bf16.mxu0 0
    %304 = vmatpush1.bf16.msra.mxu0 %v296
    %305 = vmatprep.subr.bf16.mxu0 0
    %306 = vmatpush1.bf16.msra.mxu0 %v297
    %307 = vmatprep.subr.bf16.mxu0 0
    %308 = vmatpush1.bf16.msra.mxu0 0
    %309 = vmatprep.subr.bf16.mxu0 0
    %310 = vmatpush1.bf16.msra.mxu0 0
    %311 = vmatprep.subr.bf16.mxu0 0
    %312 = vmatpush1.bf16.msra.mxu0 0
    %313 = vmatprep.subr.bf16.mxu0 0
    %314 = vmatpush1.bf16.msra.mxu0 0
    %315 = vmatprep.subr.bf16.mxu0 0
    %316 = vmatpush1.bf16.msra.mxu0 0
    %317 = vmatprep.subr.bf16.mxu0 0
    %318 = vmatpush1.bf16.msra.mxu0 0
    %319 = vmatprep.subr.bf16.mxu0 0
    %320 = vmatpush1.bf16.msra.mxu0 0
    %321 = vmatprep.subr.bf16.mxu0 0
    %322 = vmatpush1.bf16.msra.mxu0 0
    %323 = vmatprep.subr.bf16.mxu0 0
    %324 = vmatpush1.bf16.msra.mxu0 0
    %325 = vmatprep.subr.bf16.mxu0 0
    %326 = vmatpush1.bf16.msra.mxu0 0
    %327 = vmatprep.subr.bf16.mxu0 0
    %328 = vmatpush1.bf16.msra.mxu0 0
    %329 = vmatprep.subr.bf16.mxu0 0
    %330 = vmatpush1.bf16.msra.mxu0 0
    %331 = vmatprep.subr.bf16.mxu0 0
    %332 = vmatpush1.bf16.msra.mxu0 0
    %333 = vmatprep.subr.bf16.mxu0 0
    %334 = vmatpush1.bf16.msra.mxu0 0
    %335 = vmatprep.mubr.bf16.mxu0 0
    %336 = vmatmul.mubr.bf16.gmra.mrb[0].mxu0 %v301
    %v337 = vpop.f32.mrb[0].mxu0
    %v338 = vadd.f32 0.0, %v337
    %v339 = vpop.f32.mrb[0].mxu0
    %v340 = vpop.f32.mrb[0].mxu0
    %v341 = vpop.f32.mrb[0].mxu0
    %342 = vdwg.mxu0
    %v343 = vunpack.c.l.bf16 %v285
    %v344 = vadd.f32 %v343, %v338
    %v345 = vxor.u32 %v283, 2147483648
    %v346 = vmul.f32 %v345, 1.442695
    %v347 = vpow.pop %v346
    %v348 = vadd.f32 %v347, 1.0
    %v349 = vrcp.pop %v348
    %v350 = vmul.f32 1.0, %v349
    %v351 = vxor.u32 %v344, 2147483648
    %v352 = vmul.f32 %v351, 1.442695
    %v353 = vpow.pop %v352
    %v354 = vadd.f32 %v353, 1.0
    %v355 = vrcp.pop %v354
    %v356 = vmul.f32 1.0, %v355
    %v357 = vtanh.pop %v283
    %v358 = vtanh.pop %v344
    %v359 = vld [vmem:[#allocation3] sm:$0xff]
    %361 = vrot.lane.b32.xlu0 %v359, 32
    %v362 = vpop.permute.xlu0 %361
    %v364 = vmul.f32 %v350, %v362
    %366 = vrot.lane.b32.xlu0 %v357, 32
    %v367 = vpop.permute.xlu0 %366
    %v369 = vmul.f32 %v350, %v367
    %371 = vrot.lane.b32.xlu0 %v369, 32
    %v372 = vpop.permute.xlu0 %371
    %v374 = vadd.f32 %v364, %v372
    %v375 = vld [vmem:[#allocation5] sm:$0xff]
    %377 = vrot.lane.b32.xlu0 %v375, 32
    %v378 = vpop.permute.xlu0 %377
    %v380 = vmul.f32 %v356, %v378
    %382 = vrot.lane.b32.xlu0 %v358, 32
    %v383 = vpop.permute.xlu0 %382
    %v385 = vmul.f32 %v356, %v383
    %387 = vrot.lane.b32.xlu0 %v385, 32
    %v388 = vpop.permute.xlu0 %387
    %v390 = vadd.f32 %v380, %v388
    %v391 = vtanh.pop %v374
    %393 = vrot.lane.b32.xlu0 %v391, 32
    %v394 = vpop.permute.xlu0 %393
    %v396 = vmul.f32 %v350, %v394
    %v397 = vtanh.pop %v390
    %399 = vrot.lane.b32.xlu0 %v397, 32
    %v400 = vpop.permute.xlu0 %399
    %v402 = vmul.f32 %v356, %v400
    %v403 = vld [vmem:[%s2] sm:$0xff]
    %vm404 = vcmp.gt.f32.partialorder %v403, 0.5
    %s405 = scalar_lea.vmem %s193, 56
    %v406 = vld [vmem:[%s405] sm:$0xff]
    %vm407 = vcmp.gt.f32.partialorder %v406, 0.5
    %v408 = vsel %vm404, 1, 0
    %409 = vset.pattern.permute.xlu0 0
    %410 = vperm.xlu0 %409, %v408
    %v411 = vpop.permute.xlu0 %410
    %vm412 = vcmp.eq.s32.totalorder %v411, 1
    %v413 = vsel %vm412, %v374, %v362
    %415 = vrot.lane.b32.xlu0 %v413, 96
    %v416 = vpop.permute.xlu0 %415
    %418 = vst.msk [vmem:[#allocation3] sm:$0xff] %vm238, %v416
    %v419 = vld [vmem:[#allocation5] sm:$0xff]
    %v420 = vsel %vm407, 1, 0
    %421 = vset.pattern.permute.xlu0 0
    %422 = vperm.xlu0 %421, %v420
    %v423 = vpop.permute.xlu0 %422
    %vm424 = vcmp.eq.s32.totalorder %v423, 1
    %426 = vrot.lane.b32.xlu0 %v419, 32
    %v427 = vpop.permute.xlu0 %426
    %v429 = vsel %vm424, %v390, %v427
    %431 = vrot.lane.b32.xlu0 %v429, 96
    %v432 = vpop.permute.xlu0 %431
    %434 = vst.msk [vmem:[#allocation5] sm:$0xff] %vm238, %v432
    %v435 = vld [vmem:[#allocation2] sm:$0xff]
    %437 = vrot.lane.b32.xlu0 %v435, 64
    %v438 = vpop.permute.xlu0 %437
    %v440 = vsel %vm412, %v396, %v438
    %442 = vrot.lane.b32.xlu0 %v440, 64
    %v443 = vpop.permute.xlu0 %442
    %445 = vst.msk [vmem:[#allocation2] sm:$0xff] %vm238, %v443
    %v446 = vld [vmem:[#allocation4] sm:$0xff]
    %448 = vrot.lane.b32.xlu0 %v446, 64
    %v449 = vpop.permute.xlu0 %448
    %v451 = vsel %vm424, %v402, %v449
    %453 = vrot.lane.b32.xlu0 %v451, 64
    %v454 = vpop.permute.xlu0 %453
    %456 = vst.msk [vmem:[#allocation4] sm:$0xff] %vm238, %v454
    %v457 = vsel %vm412, %v396, 0.0
    %v458 = vpack.c.bf16 %v457, %v457
    %v460 = vunpack.c.l.b16 %v458
    %v461 = vpack.c.b16 %v460, %v460
    %462 = vrot.lane.b32.xlu0 %v461, 64
    %v463 = vpop.permute.xlu0 %462
    %vm465 = vcmask 257024
    %466 = vst.msk [vmem:[%s5] sm:$0xf] %vm465, %v463
    %v467 = vsel %vm424, %v402, 0.0
    %v468 = vpack.c.bf16 %v467, %v467
    %v470 = vunpack.c.l.b16 %v468
    %v471 = vpack.c.b16 %v470, %v470
    %472 = vrot.lane.b32.xlu0 %v471, 64
    %v473 = vpop.permute.xlu0 %472
    %s475 = scalar_lea.vmem %s201, 28
    %476 = vst.msk [vmem:[%s475] sm:$0xf] %vm465, %v473
    %s477 = scalar_lea.vmem [#allocation6], 4
    %v478 = vld [vmem:[%s477] sm:$0xf]
    %v479 = vld [vmem:[#allocation2] sm:$0xff]
    %v480 = vpack.c.bf16 %v479, %v479
    %v482 = vsel %vm238, %v480, 0
    %484 = vmatprep.subr.bf16.mxu0 0
    %485 = vmatpush1.bf16.msra.mxu0 %v234
    %486 = vmatprep.subr.bf16.mxu0 0
    %487 = vmatpush1.bf16.msra.mxu0 %v235
    %488 = vmatprep.subr.bf16.mxu0 0
    %489 = vmatpush1.bf16.msra.mxu0 0
    %490 = vmatprep.subr.bf16.mxu0 0
    %491 = vmatpush1.bf16.msra.mxu0 0
    %492 = vmatprep.subr.bf16.mxu0 0
    %493 = vmatpush1.bf16.msra.mxu0 0
    %494 = vmatprep.subr.bf16.mxu0 0
    %495 = vmatpush1.bf16.msra.mxu0 0
    %496 = vmatprep.subr.bf16.mxu0 0
    %497 = vmatpush1.bf16.msra.mxu0 0
    %498 = vmatprep.subr.bf16.mxu0 0
    %499 = vmatpush1.bf16.msra.mxu0 0
    %500 = vmatprep.subr.bf16.mxu0 0
    %501 = vmatpush1.bf16.msra.mxu0 0
    %502 = vmatprep.subr.bf16.mxu0 0
    %503 = vmatpush1.bf16.msra.mxu0 0
    %504 = vmatprep.subr.bf16.mxu0 0
    %505 = vmatpush1.bf16.msra.mxu0 0
    %506 = vmatprep.subr.bf16.mxu0 0
    %507 = vmatpush1.bf16.msra.mxu0 0
    %508 = vmatprep.subr.bf16.mxu0 0
    %509 = vmatpush1.bf16.msra.mxu0 0
    %510 = vmatprep.subr.bf16.mxu0 0
    %511 = vmatpush1.bf16.msra.mxu0 0
    %512 = vmatprep.subr.bf16.mxu0 0
    %513 = vmatpush1.bf16.msra.mxu0 0
    %514 = vmatprep.subr.bf16.mxu0 0
    %515 = vmatpush1.bf16.msra.mxu0 0
    %516 = vmatprep.mubr.bf16.mxu0 0
    %517 = vmatmul.mubr.bf16.gmra.mrb[0].mxu0 %v482
    %v518 = vpop.f32.mrb[0].mxu0
    %v519 = vadd.f32 0.0, %v518
    %v520 = vpop.f32.mrb[0].mxu0
    %v521 = vpop.f32.mrb[0].mxu0
    %v522 = vpop.f32.mrb[0].mxu0
    %523 = vdwg.mxu0
    %v524 = vunpack.c.l.bf16 %v478
    %v525 = vadd.f32 %v524, %v519
    %s526 = scalar_lea.vmem [#allocation7], 24
    %v527 = vld [vmem:[%s526] sm:$0xf]
    %v528 = vld [vmem:[#allocation4] sm:$0xff]
    %v529 = vpack.c.bf16 %v528, %v528
    %v531 = vsel %vm238, %v529, 0
    %533 = vmatprep.subr.bf16.mxu0 0
    %534 = vmatpush1.bf16.msra.mxu0 %v296
    %535 = vmatprep.subr.bf16.mxu0 0
    %536 = vmatpush1.bf16.msra.mxu0 %v297
    %537 = vmatprep.subr.bf16.mxu0 0
    %538 = vmatpush1.bf16.msra.mxu0 0
    %539 = vmatprep.subr.bf16.mxu0 0
    %540 = vmatpush1.bf16.msra.mxu0 0
    %541 = vmatprep.subr.bf16.mxu0 0
    %542 = vmatpush1.bf16.msra.mxu0 0
    %543 = vmatprep.subr.bf16.mxu0 0
    %544 = vmatpush1.bf16.msra.mxu0 0
    %545 = vmatprep.subr.bf16.mxu0 0
    %546 = vmatpush1.bf16.msra.mxu0 0
    %547 = vmatprep.subr.bf16.mxu0 0
    %548 = vmatpush1.bf16.msra.mxu0 0
    %549 = vmatprep.subr.bf16.mxu0 0
    %550 = vmatpush1.bf16.msra.mxu0 0
    %551 = vmatprep.subr.bf16.mxu0 0
    %552 = vmatpush1.bf16.msra.mxu0 0
    %553 = vmatprep.subr.bf16.mxu0 0
    %554 = vmatpush1.bf16.msra.mxu0 0
    %555 = vmatprep.subr.bf16.mxu0 0
    %556 = vmatpush1.bf16.msra.mxu0 0
    %557 = vmatprep.subr.bf16.mxu0 0
    %558 = vmatpush1.bf16.msra.mxu0 0
    %559 = vmatprep.subr.bf16.mxu0 0
    %560 = vmatpush1.bf16.msra.mxu0 0
    %561 = vmatprep.subr.bf16.mxu0 0
    %562 = vmatpush1.bf16.msra.mxu0 0
    %563 = vmatprep.subr.bf16.mxu0 0
    %564 = vmatpush1.bf16.msra.mxu0 0
    %565 = vmatprep.mubr.bf16.mxu0 0
    %566 = vmatmul.mubr.bf16.gmra.mrb[0].mxu0 %v531
    %v567 = vpop.f32.mrb[0].mxu0
    %v568 = vadd.f32 0.0, %v567
    %v569 = vpop.f32.mrb[0].mxu0
    %v570 = vpop.f32.mrb[0].mxu0
    %v571 = vpop.f32.mrb[0].mxu0
    %572 = vdwg.mxu0
    %v573 = vunpack.c.l.bf16 %v527
    %v574 = vadd.f32 %v573, %v568
    %v575 = vxor.u32 %v525, 2147483648
    %v576 = vmul.f32 %v575, 1.442695
    %v577 = vpow.pop %v576
    %v578 = vadd.f32 %v577, 1.0
    %v579 = vrcp.pop %v578
    %v580 = vmul.f32 1.0, %v579
    %v581 = vxor.u32 %v574, 2147483648
    %v582 = vmul.f32 %v581, 1.442695
    %v583 = vpow.pop %v582
    %v584 = vadd.f32 %v583, 1.0
    %v585 = vrcp.pop %v584
    %v586 = vmul.f32 1.0, %v585
    %v587 = vtanh.pop %v525
    %v588 = vtanh.pop %v574
    %v589 = vld [vmem:[#allocation3] sm:$0xff]
    %591 = vrot.lane.b32.xlu0 %v589, 32
    %v592 = vpop.permute.xlu0 %591
    %v594 = vmul.f32 %v580, %v592
    %596 = vrot.lane.b32.xlu0 %v587, 32
    %v597 = vpop.permute.xlu0 %596
    %v599 = vmul.f32 %v580, %v597
    %601 = vrot.lane.b32.xlu0 %v599, 32
    %v602 = vpop.permute.xlu0 %601
    %v604 = vadd.f32 %v594, %v602
    %v605 = vld [vmem:[#allocation5] sm:$0xff]
    %607 = vrot.lane.b32.xlu0 %v605, 32
    %v608 = vpop.permute.xlu0 %607
    %v610 = vmul.f32 %v586, %v608
    %612 = vrot.lane.b32.xlu0 %v588, 32
    %v613 = vpop.permute.xlu0 %612
    %v615 = vmul.f32 %v586, %v613
    %617 = vrot.lane.b32.xlu0 %v615, 32
    %v618 = vpop.permute.xlu0 %617
    %v620 = vadd.f32 %v610, %v618
    %v621 = vtanh.pop %v604
    %623 = vrot.lane.b32.xlu0 %v621, 32
    %v624 = vpop.permute.xlu0 %623
    %v626 = vmul.f32 %v580, %v624
    %v627 = vtanh.pop %v620
    %629 = vrot.lane.b32.xlu0 %v627, 32
    %v630 = vpop.permute.xlu0 %629
    %v632 = vmul.f32 %v586, %v630
    %s633 = scalar_lea.vmem %s2, 8
    %v634 = vld [vmem:[%s633] sm:$0xff]
    %vm635 = vcmp.gt.f32.partialorder %v634, 0.5
    %s636 = scalar_lea.vmem %s193, 48
    %v637 = vld [vmem:[%s636] sm:$0xff]
    %vm638 = vcmp.gt.f32.partialorder %v637, 0.5
    %v639 = vsel %vm635, 1, 0
    %640 = vset.pattern.permute.xlu0 0
    %641 = vperm.xlu0 %640, %v639
    %v642 = vpop.permute.xlu0 %641
    %vm643 = vcmp.eq.s32.totalorder %v642, 1
    %v644 = vsel %vm643, %v604, %v592
    %646 = vrot.lane.b32.xlu0 %v644, 96
    %v647 = vpop.permute.xlu0 %646
    %649 = vst.msk [vmem:[#allocation3] sm:$0xff] %vm238, %v647
    %v650 = vld [vmem:[#allocation5] sm:$0xff]
    %v651 = vsel %vm638, 1, 0
    %652 = vset.pattern.permute.xlu0 0
    %653 = vperm.xlu0 %652, %v651
    %v654 = vpop.permute.xlu0 %653
    %vm655 = vcmp.eq.s32.totalorder %v654, 1
    %657 = vrot.lane.b32.xlu0 %v650, 32
    %v658 = vpop.permute.xlu0 %657
    %v660 = vsel %vm655, %v620, %v658
    %662 = vrot.lane.b32.xlu0 %v660, 96
    %v663 = vpop.permute.xlu0 %662
    %665 = vst.msk [vmem:[#allocation5] sm:$0xff] %vm238, %v663
    %v666 = vld [vmem:[#allocation2] sm:$0xff]
    %668 = vrot.lane.b32.xlu0 %v666, 64
    %v669 = vpop.permute.xlu0 %668
    %v671 = vsel %vm643, %v626, %v669
    %673 = vrot.lane.b32.xlu0 %v671, 64
    %v674 = vpop.permute.xlu0 %673
    %676 = vst.msk [vmem:[#allocation2] sm:$0xff] %vm238, %v674
    %v677 = vld [vmem:[#allocation4] sm:$0xff]
    %679 = vrot.lane.b32.xlu0 %v677, 64
    %v680 = vpop.permute.xlu0 %679
    %v682 = vsel %vm655, %v632, %v680
    %684 = vrot.lane.b32.xlu0 %v682, 64
    %v685 = vpop.permute.xlu0 %684
    %687 = vst.msk [vmem:[#allocation4] sm:$0xff] %vm238, %v685
    %v688 = vsel %vm643, %v626, 0.0
    %v689 = vpack.c.bf16 %v688, %v688
    %v691 = vunpack.c.l.b16 %v689
    %v692 = vpack.c.b16 %v691, %v691
    %693 = vrot.lane.b32.xlu0 %v692, 64
    %v694 = vpop.permute.xlu0 %693
    %s696 = scalar_lea.vmem %s5, 4
    %697 = vst.msk [vmem:[%s696] sm:$0xf] %vm465, %v694
    %v698 = vsel %vm655, %v632, 0.0
    %v699 = vpack.c.bf16 %v698, %v698
    %v701 = vunpack.c.l.b16 %v699
    %v702 = vpack.c.b16 %v701, %v701
    %703 = vrot.lane.b32.xlu0 %v702, 64
    %v704 = vpop.permute.xlu0 %703
    %s706 = scalar_lea.vmem %s201, 24
    %707 = vst.msk [vmem:[%s706] sm:$0xf] %vm465, %v704
    %s708 = scalar_lea.vmem [#allocation6], 8
    %v709 = vld [vmem:[%s708] sm:$0xf]
    %v710 = vld [vmem:[#allocation2] sm:$0xff]
    %v711 = vpack.c.bf16 %v710, %v710
    %v713 = vsel %vm238, %v711, 0
    %715 = vmatprep.subr.bf16.mxu0 0
    %716 = vmatpush1.bf16.msra.mxu0 %v234
    %717 = vmatprep.subr.bf16.mxu0 0
    %718 = vmatpush1.bf16.msra.mxu0 %v235
    %719 = vmatprep.subr.bf16.mxu0 0
    %720 = vmatpush1.bf16.msra.mxu0 0
    %721 = vmatprep.subr.bf16.mxu0 0
    %722 = vmatpush1.bf16.msra.mxu0 0
    %723 = vmatprep.subr.bf16.mxu0 0
    %724 = vmatpush1.bf16.msra.mxu0 0
    %725 = vmatprep.subr.bf16.mxu0 0
    %726 = vmatpush1.bf16.msra.mxu0 0
    %727 = vmatprep.subr.bf16.mxu0 0
    %728 = vmatpush1.bf16.msra.mxu0 0
    %729 = vmatprep.subr.bf16.mxu0 0
    %730 = vmatpush1.bf16.msra.mxu0 0
    %731 = vmatprep.subr.bf16.mxu0 0
    %732 = vmatpush1.bf16.msra.mxu0 0
    %733 = vmatprep.subr.bf16.mxu0 0
    %734 = vmatpush1.bf16.msra.mxu0 0
    %735 = vmatprep.subr.bf16.mxu0 0
    %736 = vmatpush1.bf16.msra.mxu0 0
    %737 = vmatprep.subr.bf16.mxu0 0
    %738 = vmatpush1.bf16.msra.mxu0 0
    %739 = vmatprep.subr.bf16.mxu0 0
    %740 = vmatpush1.bf16.msra.mxu0 0
    %741 = vmatprep.subr.bf16.mxu0 0
    %742 = vmatpush1.bf16.msra.mxu0 0
    %743 = vmatprep.subr.bf16.mxu0 0
    %744 = vmatpush1.bf16.msra.mxu0 0
    %745 = vmatprep.subr.bf16.mxu0 0
    %746 = vmatpush1.bf16.msra.mxu0 0
    %747 = vmatprep.mubr.bf16.mxu0 0
    %748 = vmatmul.mubr.bf16.gmra.mrb[0].mxu0 %v713
    %v749 = vpop.f32.mrb[0].mxu0
    %v750 = vadd.f32 0.0, %v749
    %v751 = vpop.f32.mrb[0].mxu0
    %v752 = vpop.f32.mrb[0].mxu0
    %v753 = vpop.f32.mrb[0].mxu0
    %754 = vdwg.mxu0
    %v755 = vunpack.c.l.bf16 %v709
    %v756 = vadd.f32 %v755, %v750
    %s757 = scalar_lea.vmem [#allocation7], 20
    %v758 = vld [vmem:[%s757] sm:$0xf]
    %v759 = vld [vmem:[#allocation4] sm:$0xff]
    %v760 = vpack.c.bf16 %v759, %v759
    %v762 = vsel %vm238, %v760, 0
    %764 = vmatprep.subr.bf16.mxu0 0
    %765 = vmatpush1.bf16.msra.mxu0 %v296
    %766 = vmatprep.subr.bf16.mxu0 0
    %767 = vmatpush1.bf16.msra.mxu0 %v297
    %768 = vmatprep.subr.bf16.mxu0 0
    %769 = vmatpush1.bf16.msra.mxu0 0
    %770 = vmatprep.subr.bf16.mxu0 0
    %771 = vmatpush1.bf16.msra.mxu0 0
    %772 = vmatprep.subr.bf16.mxu0 0
    %773 = vmatpush1.bf16.msra.mxu0 0
    %774 = vmatprep.subr.bf16.mxu0 0
    %775 = vmatpush1.bf16.msra.mxu0 0
    %776 = vmatprep.subr.bf16.mxu0 0
    %777 = vmatpush1.bf16.msra.mxu0 0
    %778 = vmatprep.subr.bf16.mxu0 0
    %779 = vmatpush1.bf16.msra.mxu0 0
    %780 = vmatprep.subr.bf16.mxu0 0
    %781 = vmatpush1.bf16.msra.mxu0 0
    %782 = vmatprep.subr.bf16.mxu0 0
    %783 = vmatpush1.bf16.msra.mxu0 0
    %784 = vmatprep.subr.bf16.mxu0 0
    %785 = vmatpush1.bf16.msra.mxu0 0
    %786 = vmatprep.subr.bf16.mxu0 0
    %787 = vmatpush1.bf16.msra.mxu0 0
    %788 = vmatprep.subr.bf16.mxu0 0
    %789 = vmatpush1.bf16.msra.mxu0 0
    %790 = vmatprep.subr.bf16.mxu0 0
    %791 = vmatpush1.bf16.msra.mxu0 0
    %792 = vmatprep.subr.bf16.mxu0 0
    %793 = vmatpush1.bf16.msra.mxu0 0
    %794 = vmatprep.subr.bf16.mxu0 0
    %795 = vmatpush1.bf16.msra.mxu0 0
    %796 = vmatprep.mubr.bf16.mxu0 0
    %797 = vmatmul.mubr.bf16.gmra.mrb[0].mxu0 %v762
    %v798 = vpop.f32.mrb[0].mxu0
    %v799 = vadd.f32 0.0, %v798
    %v800 = vpop.f32.mrb[0].mxu0
    %v801 = vpop.f32.mrb[0].mxu0
    %v802 = vpop.f32.mrb[0].mxu0
    %803 = vdwg.mxu0
    %v804 = vunpack.c.l.bf16 %v758
    %v805 = vadd.f32 %v804, %v799
    %v806 = vxor.u32 %v756, 2147483648
    %v807 = vmul.f32 %v806, 1.442695
    %v808 = vpow.pop %v807
    %v809 = vadd.f32 %v808, 1.0
    %v810 = vrcp.pop %v809
    %v811 = vmul.f32 1.0, %v810
    %v812 = vxor.u32 %v805, 2147483648
    %v813 = vmul.f32 %v812, 1.442695
    %v814 = vpow.pop %v813
    %v815 = vadd.f32 %v814, 1.0
    %v816 = vrcp.pop %v815
    %v817 = vmul.f32 1.0, %v816
    %v818 = vtanh.pop %v756
    %v819 = vtanh.pop %v805
    %v820 = vld [vmem:[#allocation3] sm:$0xff]
    %822 = vrot.lane.b32.xlu0 %v820, 32
    %v823 = vpop.permute.xlu0 %822
    %v825 = vmul.f32 %v811, %v823
    %827 = vrot.lane.b32.xlu0 %v818, 32
    %v828 = vpop.permute.xlu0 %827
    %v830 = vmul.f32 %v811, %v828
    %832 = vrot.lane.b32.xlu0 %v830, 32
    %v833 = vpop.permute.xlu0 %832
    %v835 = vadd.f32 %v825, %v833
    %v836 = vld [vmem:[#allocation5] sm:$0xff]
    %838 = vrot.lane.b32.xlu0 %v836, 32
    %v839 = vpop.permute.xlu0 %838
    %v841 = vmul.f32 %v817, %v839
    %843 = vrot.lane.b32.xlu0 %v819, 32
    %v844 = vpop.permute.xlu0 %843
    %v846 = vmul.f32 %v817, %v844
    %848 = vrot.lane.b32.xlu0 %v846, 32
    %v849 = vpop.permute.xlu0 %848
    %v851 = vadd.f32 %v841, %v849
    %v852 = vtanh.pop %v835
    %854 = vrot.lane.b32.xlu0 %v852, 32
    %v855 = vpop.permute.xlu0 %854
    %v857 = vmul.f32 %v811, %v855
    %v858 = vtanh.pop %v851
    %860 = vrot.lane.b32.xlu0 %v858, 32
    %v861 = vpop.permute.xlu0 %860
    %v863 = vmul.f32 %v817, %v861
    %s864 = scalar_lea.vmem %s2, 16
    %v865 = vld [vmem:[%s864] sm:$0xff]
    %vm866 = vcmp.gt.f32.partialorder %v865, 0.5
    %s867 = scalar_lea.vmem %s193, 40
    %v868 = vld [vmem:[%s867] sm:$0xff]
    %vm869 = vcmp.gt.f32.partialorder %v868, 0.5
    %v870 = vsel %vm866, 1, 0
    %871 = vset.pattern.permute.xlu0 0
    %872 = vperm.xlu0 %871, %v870
    %v873 = vpop.permute.xlu0 %872
    %vm874 = vcmp.eq.s32.totalorder %v873, 1
    %v875 = vsel %vm874, %v835, %v823
    %877 = vrot.lane.b32.xlu0 %v875, 96
    %v878 = vpop.permute.xlu0 %877
    %880 = vst.msk [vmem:[#allocation3] sm:$0xff] %vm238, %v878
    %v881 = vld [vmem:[#allocation5] sm:$0xff]
    %v882 = vsel %vm869, 1, 0
    %883 = vset.pattern.permute.xlu0 0
    %884 = vperm.xlu0 %883, %v882
    %v885 = vpop.permute.xlu0 %884
    %vm886 = vcmp.eq.s32.totalorder %v885, 1
    %888 = vrot.lane.b32.xlu0 %v881, 32
    %v889 = vpop.permute.xlu0 %888
    %v891 = vsel %vm886, %v851, %v889
    %893 = vrot.lane.b32.xlu0 %v891, 96
    %v894 = vpop.permute.xlu0 %893
    %896 = vst.msk [vmem:[#allocation5] sm:$0xff] %vm238, %v894
    %v897 = vld [vmem:[#allocation2] sm:$0xff]
    %899 = vrot.lane.b32.xlu0 %v897, 64
    %v900 = vpop.permute.xlu0 %899
    %v902 = vsel %vm874, %v857, %v900
    %904 = vrot.lane.b32.xlu0 %v902, 64
    %v905 = vpop.permute.xlu0 %904
    %907 = vst.msk [vmem:[#allocation2] sm:$0xff] %vm238, %v905
    %v908 = vld [vmem:[#allocation4] sm:$0xff]
    %910 = vrot.lane.b32.xlu0 %v908, 64
    %v911 = vpop.permute.xlu0 %910
    %v913 = vsel %vm886, %v863, %v911
    %915 = vrot.lane.b32.xlu0 %v913, 64
    %v916 = vpop.permute.xlu0 %915
    %918 = vst.msk [vmem:[#allocation4] sm:$0xff] %vm238, %v916
    %v919 = vsel %vm874, %v857, 0.0
    %v920 = vpack.c.bf16 %v919, %v919
    %v922 = vunpack.c.l.b16 %v920
    %v923 = vpack.c.b16 %v922, %v922
    %924 = vrot.lane.b32.xlu0 %v923, 64
    %v925 = vpop.permute.xlu0 %924
    %s927 = scalar_lea.vmem %s5, 8
    %928 = vst.msk [vmem:[%s927] sm:$0xf] %vm465, %v925
    %v929 = vsel %vm886, %v863, 0.0
    %v930 = vpack.c.bf16 %v929, %v929
    %v932 = vunpack.c.l.b16 %v930
    %v933 = vpack.c.b16 %v932, %v932
    %934 = vrot.lane.b32.xlu0 %v933, 64
    %v935 = vpop.permute.xlu0 %934
    %s937 = scalar_lea.vmem %s201, 20
    %938 = vst.msk [vmem:[%s937] sm:$0xf] %vm465, %v935
    %s939 = scalar_lea.vmem [#allocation6], 12
    %v940 = vld [vmem:[%s939] sm:$0xf]
    %v941 = vld [vmem:[#allocation2] sm:$0xff]
    %v942 = vpack.c.bf16 %v941, %v941
    %v944 = vsel %vm238, %v942, 0
    %946 = vmatprep.subr.bf16.mxu0 0
    %947 = vmatpush1.bf16.msra.mxu0 %v234
    %948 = vmatprep.subr.bf16.mxu0 0
    %949 = vmatpush1.bf16.msra.mxu0 %v235
    %950 = vmatprep.subr.bf16.mxu0 0
    %951 = vmatpush1.bf16.msra.mxu0 0
    %952 = vmatprep.subr.bf16.mxu0 0
    %953 = vmatpush1.bf16.msra.mxu0 0
    %954 = vmatprep.subr.bf16.mxu0 0
    %955 = vmatpush1.bf16.msra.mxu0 0
    %956 = vmatprep.subr.bf16.mxu0 0
    %957 = vmatpush1.bf16.msra.mxu0 0
    %958 = vmatprep.subr.bf16.mxu0 0
    %959 = vmatpush1.bf16.msra.mxu0 0
    %960 = vmatprep.subr.bf16.mxu0 0
    %961 = vmatpush1.bf16.msra.mxu0 0
    %962 = vmatprep.subr.bf16.mxu0 0
    %963 = vmatpush1.bf16.msra.mxu0 0
    %964 = vmatprep.subr.bf16.mxu0 0
    %965 = vmatpush1.bf16.msra.mxu0 0
    %966 = vmatprep.subr.bf16.mxu0 0
    %967 = vmatpush1.bf16.msra.mxu0 0
    %968 = vmatprep.subr.bf16.mxu0 0
    %969 = vmatpush1.bf16.msra.mxu0 0
    %970 = vmatprep.subr.bf16.mxu0 0
    %971 = vmatpush1.bf16.msra.mxu0 0
    %972 = vmatprep.subr.bf16.mxu0 0
    %973 = vmatpush1.bf16.msra.mxu0 0
    %974 = vmatprep.subr.bf16.mxu0 0
    %975 = vmatpush1.bf16.msra.mxu0 0
    %976 = vmatprep.subr.bf16.mxu0 0
    %977 = vmatpush1.bf16.msra.mxu0 0
    %978 = vmatprep.mubr.bf16.mxu0 0
    %979 = vmatmul.mubr.bf16.gmra.mrb[0].mxu0 %v944
    %v980 = vpop.f32.mrb[0].mxu0
    %v981 = vadd.f32 0.0, %v980
    %v982 = vpop.f32.mrb[0].mxu0
    %v983 = vpop.f32.mrb[0].mxu0
    %v984 = vpop.f32.mrb[0].mxu0
    %985 = vdwg.mxu0
    %v986 = vunpack.c.l.bf16 %v940
    %v987 = vadd.f32 %v986, %v981
    %s988 = scalar_lea.vmem [#allocation7], 16
    %v989 = vld [vmem:[%s988] sm:$0xf]
    %v990 = vld [vmem:[#allocation4] sm:$0xff]
    %v991 = vpack.c.bf16 %v990, %v990
    %v993 = vsel %vm238, %v991, 0
    %995 = vmatprep.subr.bf16.mxu0 0
    %996 = vmatpush1.bf16.msra.mxu0 %v296
    %997 = vmatprep.subr.bf16.mxu0 0
    %998 = vmatpush1.bf16.msra.mxu0 %v297
    %999 = vmatprep.subr.bf16.mxu0 0
    %1000 = vmatpush1.bf16.msra.mxu0 0
    %1001 = vmatprep.subr.bf16.mxu0 0
    %1002 = vmatpush1.bf16.msra.mxu0 0
    %1003 = vmatprep.subr.bf16.mxu0 0
    %1004 = vmatpush1.bf16.msra.mxu0 0
    %1005 = vmatprep.subr.bf16.mxu0 0
    %1006 = vmatpush1.bf16.msra.mxu0 0
    %1007 = vmatprep.subr.bf16.mxu0 0
    %1008 = vmatpush1.bf16.msra.mxu0 0
    %1009 = vmatprep.subr.bf16.mxu0 0
    %1010 = vmatpush1.bf16.msra.mxu0 0
    %1011 = vmatprep.subr.bf16.mxu0 0
    %1012 = vmatpush1.bf16.msra.mxu0 0
    %1013 = vmatprep.subr.bf16.mxu0 0
    %1014 = vmatpush1.bf16.msra.mxu0 0
    %1015 = vmatprep.subr.bf16.mxu0 0
    %1016 = vmatpush1.bf16.msra.mxu0 0
    %1017 = vmatprep.subr.bf16.mxu0 0
    %1018 = vmatpush1.bf16.msra.mxu0 0
    %1019 = vmatprep.subr.bf16.mxu0 0
    %1020 = vmatpush1.bf16.msra.mxu0 0
    %1021 = vmatprep.subr.bf16.mxu0 0
    %1022 = vmatpush1.bf16.msra.mxu0 0
    %1023 = vmatprep.subr.bf16.mxu0 0
    %1024 = vmatpush1.bf16.msra.mxu0 0
    %1025 = vmatprep.subr.bf16.mxu0 0
    %1026 = vmatpush1.bf16.msra.mxu0 0
    %1027 = vmatprep.mubr.bf16.mxu0 0
    %1028 = vmatmul.mubr.bf16.gmra.mrb[0].mxu0 %v993
    %v1029 = vpop.f32.mrb[0].mxu0
    %v1030 = vadd.f32 0.0, %v1029
    %v1031 = vpop.f32.mrb[0].mxu0
    %v1032 = vpop.f32.mrb[0].mxu0
    %v1033 = vpop.f32.mrb[0].mxu0
    %1034 = vdwg.mxu0
    %v1035 = vunpack.c.l.bf16 %v989
    %v1036 = vadd.f32 %v1035, %v1030
    %v1037 = vxor.u32 %v987, 2147483648
    %v1038 = vmul.f32 %v1037, 1.442695
    %v1039 = vpow.pop %v1038
    %v1040 = vadd.f32 %v1039, 1.0
    %v1041 = vrcp.pop %v1040
    %v1042 = vmul.f32 1.0, %v1041
    %v1043 = vxor.u32 %v1036, 2147483648
    %v1044 = vmul.f32 %v1043, 1.442695
    %v1045 = vpow.pop %v1044
    %v1046 = vadd.f32 %v1045, 1.0
    %v1047 = vrcp.pop %v1046
    %v1048 = vmul.f32 1.0, %v1047
    %v1049 = vtanh.pop %v987
    %v1050 = vtanh.pop %v1036
    %v1051 = vld [vmem:[#allocation3] sm:$0xff]
    %1053 = vrot.lane.b32.xlu0 %v1051, 32
    %v1054 = vpop.permute.xlu0 %1053
    %v1056 = vmul.f32 %v1042, %v1054
    %1058 = vrot.lane.b32.xlu0 %v1049, 32
    %v1059 = vpop.permute.xlu0 %1058
    %v1061 = vmul.f32 %v1042, %v1059
    %1063 = vrot.lane.b32.xlu0 %v1061, 32
    %v1064 = vpop.permute.xlu0 %1063
    %v1066 = vadd.f32 %v1056, %v1064
    %v1067 = vld [vmem:[#allocation5] sm:$0xff]
    %1069 = vrot.lane.b32.xlu0 %v1067, 32
    %v1070 = vpop.permute.xlu0 %1069
    %v1072 = vmul.f32 %v1048, %v1070
    %1074 = vrot.lane.b32.xlu0 %v1050, 32
    %v1075 = vpop.permute.xlu0 %1074
    %v1077 = vmul.f32 %v1048, %v1075
    %1079 = vrot.lane.b32.xlu0 %v1077, 32
    %v1080 = vpop.permute.xlu0 %1079
    %v1082 = vadd.f32 %v1072, %v1080
    %v1083 = vtanh.pop %v1066
    %1085 = vrot.lane.b32.xlu0 %v1083, 32
    %v1086 = vpop.permute.xlu0 %1085
    %v1088 = vmul.f32 %v1042, %v1086
    %v1089 = vtanh.pop %v1082
    %1091 = vrot.lane.b32.xlu0 %v1089, 32
    %v1092 = vpop.permute.xlu0 %1091
    %v1094 = vmul.f32 %v1048, %v1092
    %s1095 = scalar_lea.vmem %s2, 24
    %v1096 = vld [vmem:[%s1095] sm:$0xff]
    %vm1097 = vcmp.gt.f32.partialorder %v1096, 0.5
    %s1098 = scalar_lea.vmem %s193, 32
    %v1099 = vld [vmem:[%s1098] sm:$0xff]
    %vm1100 = vcmp.gt.f32.partialorder %v1099, 0.5
    %v1101 = vsel %vm1097, 1, 0
    %1102 = vset.pattern.permute.xlu0 0
    %1103 = vperm.xlu0 %1102, %v1101
    %v1104 = vpop.permute.xlu0 %1103
    %vm1105 = vcmp.eq.s32.totalorder %v1104, 1
    %v1106 = vsel %vm1105, %v1066, %v1054
    %1108 = vrot.lane.b32.xlu0 %v1106, 96
    %v1109 = vpop.permute.xlu0 %1108
    %1111 = vst.msk [vmem:[#allocation3] sm:$0xff] %vm238, %v1109
    %v1112 = vld [vmem:[#allocation5] sm:$0xff]
    %v1113 = vsel %vm1100, 1, 0
    %1114 = vset.pattern.permute.xlu0 0
    %1115 = vperm.xlu0 %1114, %v1113
    %v1116 = vpop.permute.xlu0 %1115
    %vm1117 = vcmp.eq.s32.totalorder %v1116, 1
    %1119 = vrot.lane.b32.xlu0 %v1112, 32
    %v1120 = vpop.permute.xlu0 %1119
    %v1122 = vsel %vm1117, %v1082, %v1120
    %1124 = vrot.lane.b32.xlu0 %v1122, 96
    %v1125 = vpop.permute.xlu0 %1124
    %1127 = vst.msk [vmem:[#allocation5] sm:$0xff] %vm238, %v1125
    %v1128 = vld [vmem:[#allocation2] sm:$0xff]
    %1130 = vrot.lane.b32.xlu0 %v1128, 64
    %v1131 = vpop.permute.xlu0 %1130
    %v1133 = vsel %vm1105, %v1088, %v1131
    %1135 = vrot.lane.b32.xlu0 %v1133, 64
    %v1136 = vpop.permute.xlu0 %1135
    %1138 = vst.msk [vmem:[#allocation2] sm:$0xff] %vm238, %v1136
    %v1139 = vld [vmem:[#allocation4] sm:$0xff]
    %1141 = vrot.lane.b32.xlu0 %v1139, 64
    %v1142 = vpop.permute.xlu0 %1141
    %v1144 = vsel %vm1117, %v1094, %v1142
    %1146 = vrot.lane.b32.xlu0 %v1144, 64
    %v1147 = vpop.permute.xlu0 %1146
    %1149 = vst.msk [vmem:[#allocation4] sm:$0xff] %vm238, %v1147
    %v1150 = vsel %vm1105, %v1088, 0.0
    %v1151 = vpack.c.bf16 %v1150, %v1150
    %v1153 = vunpack.c.l.b16 %v1151
    %v1154 = vpack.c.b16 %v1153, %v1153
    %1155 = vrot.lane.b32.xlu0 %v1154, 64
    %v1156 = vpop.permute.xlu0 %1155
    %s1158 = scalar_lea.vmem %s5, 12
    %1159 = vst.msk [vmem:[%s1158] sm:$0xf] %vm465, %v1156
    %v1160 = vsel %vm1117, %v1094, 0.0
    %v1161 = vpack.c.bf16 %v1160, %v1160
    %v1163 = vunpack.c.l.b16 %v1161
    %v1164 = vpack.c.b16 %v1163, %v1163
    %1165 = vrot.lane.b32.xlu0 %v1164, 64
    %v1166 = vpop.permute.xlu0 %1165
    %s1168 = scalar_lea.vmem %s201, 16
    %1169 = vst.msk [vmem:[%s1168] sm:$0xf] %vm465, %v1166
    %s1170 = scalar_lea.vmem [#allocation6], 16
    %v1171 = vld [vmem:[%s1170] sm:$0xf]
    %v1172 = vld [vmem:[#allocation2] sm:$0xff]
    %v1173 = vpack.c.bf16 %v1172, %v1172
    %v1175 = vsel %vm238, %v1173, 0
    %1177 = vmatprep.subr.bf16.mxu0 0
    %1178 = vmatpush1.bf16.msra.mxu0 %v234
    %1179 = vmatprep.subr.bf16.mxu0 0
    %1180 = vmatpush1.bf16.msra.mxu0 %v235
    %1181 = vmatprep.subr.bf16.mxu0 0
    %1182 = vmatpush1.bf16.msra.mxu0 0
    %1183 = vmatprep.subr.bf16.mxu0 0
    %1184 = vmatpush1.bf16.msra.mxu0 0
    %1185 = vmatprep.subr.bf16.mxu0 0
    %1186 = vmatpush1.bf16.msra.mxu0 0
    %1187 = vmatprep.subr.bf16.mxu0 0
    %1188 = vmatpush1.bf16.msra.mxu0 0
    %1189 = vmatprep.subr.bf16.mxu0 0
    %1190 = vmatpush1.bf16.msra.mxu0 0
    %1191 = vmatprep.subr.bf16.mxu0 0
    %1192 = vmatpush1.bf16.msra.mxu0 0
    %1193 = vmatprep.subr.bf16.mxu0 0
    %1194 = vmatpush1.bf16.msra.mxu0 0
    %1195 = vmatprep.subr.bf16.mxu0 0
    %1196 = vmatpush1.bf16.msra.mxu0 0
    %1197 = vmatprep.subr.bf16.mxu0 0
    %1198 = vmatpush1.bf16.msra.mxu0 0
    %1199 = vmatprep.subr.bf16.mxu0 0
    %1200 = vmatpush1.bf16.msra.mxu0 0
    %1201 = vmatprep.subr.bf16.mxu0 0
    %1202 = vmatpush1.bf16.msra.mxu0 0
    %1203 = vmatprep.subr.bf16.mxu0 0
    %1204 = vmatpush1.bf16.msra.mxu0 0
    %1205 = vmatprep.subr.bf16.mxu0 0
    %1206 = vmatpush1.bf16.msra.mxu0 0
    %1207 = vmatprep.subr.bf16.mxu0 0
    %1208 = vmatpush1.bf16.msra.mxu0 0
    %1209 = vmatprep.mubr.bf16.mxu0 0
    %1210 = vmatmul.mubr.bf16.gmra.mrb[0].mxu0 %v1175
    %v1211 = vpop.f32.mrb[0].mxu0
    %v1212 = vadd.f32 0.0, %v1211
    %v1213 = vpop.f32.mrb[0].mxu0
    %v1214 = vpop.f32.mrb[0].mxu0
    %v1215 = vpop.f32.mrb[0].mxu0
    %1216 = vdwg.mxu0
    %v1217 = vunpack.c.l.bf16 %v1171
    %v1218 = vadd.f32 %v1217, %v1212
    %s1219 = scalar_lea.vmem [#allocation7], 12
    %v1220 = vld [vmem:[%s1219] sm:$0xf]
    %v1221 = vld [vmem:[#allocation4] sm:$0xff]
    %v1222 = vpack.c.bf16 %v1221, %v1221
    %v1224 = vsel %vm238, %v1222, 0
    %1226 = vmatprep.subr.bf16.mxu0 0
    %1227 = vmatpush1.bf16.msra.mxu0 %v296
    %1228 = vmatprep.subr.bf16.mxu0 0
    %1229 = vmatpush1.bf16.msra.mxu0 %v297
    %1230 = vmatprep.subr.bf16.mxu0 0
    %1231 = vmatpush1.bf16.msra.mxu0 0
    %1232 = vmatprep.subr.bf16.mxu0 0
    %1233 = vmatpush1.bf16.msra.mxu0 0
    %1234 = vmatprep.subr.bf16.mxu0 0
    %1235 = vmatpush1.bf16.msra.mxu0 0
    %1236 = vmatprep.subr.bf16.mxu0 0
    %1237 = vmatpush1.bf16.msra.mxu0 0
    %1238 = vmatprep.subr.bf16.mxu0 0
    %1239 = vmatpush1.bf16.msra.mxu0 0
    %1240 = vmatprep.subr.bf16.mxu0 0
    %1241 = vmatpush1.bf16.msra.mxu0 0
    %1242 = vmatprep.subr.bf16.mxu0 0
    %1243 = vmatpush1.bf16.msra.mxu0 0
    %1244 = vmatprep.subr.bf16.mxu0 0
    %1245 = vmatpush1.bf16.msra.mxu0 0
    %1246 = vmatprep.subr.bf16.mxu0 0
    %1247 = vmatpush1.bf16.msra.mxu0 0
    %1248 = vmatprep.subr.bf16.mxu0 0
    %1249 = vmatpush1.bf16.msra.mxu0 0
    %1250 = vmatprep.subr.bf16.mxu0 0
    %1251 = vmatpush1.bf16.msra.mxu0 0
    %1252 = vmatprep.subr.bf16.mxu0 0
    %1253 = vmatpush1.bf16.msra.mxu0 0
    %1254 = vmatprep.subr.bf16.mxu0 0
    %1255 = vmatpush1.bf16.msra.mxu0 0
    %1256 = vmatprep.subr.bf16.mxu0 0
    %1257 = vmatpush1.bf16.msra.mxu0 0
    %1258 = vmatprep.mubr.bf16.mxu0 0
    %1259 = vmatmul.mubr.bf16.gmra.mrb[0].mxu0 %v1224
    %v1260 = vpop.f32.mrb[0].mxu0
    %v1261 = vadd.f32 0.0, %v1260
    %v1262 = vpop.f32.mrb[0].mxu0
    %v1263 = vpop.f32.mrb[0].mxu0
    %v1264 = vpop.f32.mrb[0].mxu0
    %1265 = vdwg.mxu0
    %v1266 = vunpack.c.l.bf16 %v1220
    %v1267 = vadd.f32 %v1266, %v1261
    %v1268 = vxor.u32 %v1218, 2147483648
    %v1269 = vmul.f32 %v1268, 1.442695
    %v1270 = vpow.pop %v1269
    %v1271 = vadd.f32 %v1270, 1.0
    %v1272 = vrcp.pop %v1271
    %v1273 = vmul.f32 1.0, %v1272
    %v1274 = vxor.u32 %v1267, 2147483648
    %v1275 = vmul.f32 %v1274, 1.442695
    %v1276 = vpow.pop %v1275
    %v1277 = vadd.f32 %v1276, 1.0
    %v1278 = vrcp.pop %v1277
    %v1279 = vmul.f32 1.0, %v1278
    %v1280 = vtanh.pop %v1218
    %v1281 = vtanh.pop %v1267
    %v1282 = vld [vmem:[#allocation3] sm:$0xff]
    %1284 = vrot.lane.b32.xlu0 %v1282, 32
    %v1285 = vpop.permute.xlu0 %1284
    %v1287 = vmul.f32 %v1273, %v1285
    %1289 = vrot.lane.b32.xlu0 %v1280, 32
    %v1290 = vpop.permute.xlu0 %1289
    %v1292 = vmul.f32 %v1273, %v1290
    %1294 = vrot.lane.b32.xlu0 %v1292, 32
    %v1295 = vpop.permute.xlu0 %1294
    %v1297 = vadd.f32 %v1287, %v1295
    %v1298 = vld [vmem:[#allocation5] sm:$0xff]
    %1300 = vrot.lane.b32.xlu0 %v1298, 32
    %v1301 = vpop.permute.xlu0 %1300
    %v1303 = vmul.f32 %v1279, %v1301
    %1305 = vrot.lane.b32.xlu0 %v1281, 32
    %v1306 = vpop.permute.xlu0 %1305
    %v1308 = vmul.f32 %v1279, %v1306
    %1310 = vrot.lane.b32.xlu0 %v1308, 32
    %v1311 = vpop.permute.xlu0 %1310
    %v1313 = vadd.f32 %v1303, %v1311
    %v1314 = vtanh.pop %v1297
    %1316 = vrot.lane.b32.xlu0 %v1314, 32
    %v1317 = vpop.permute.xlu0 %1316
    %v1319 = vmul.f32 %v1273, %v1317
    %v1320 = vtanh.pop %v1313
    %1322 = vrot.lane.b32.xlu0 %v1320, 32
    %v1323 = vpop.permute.xlu0 %1322
    %v1325 = vmul.f32 %v1279, %v1323
    %s1326 = scalar_lea.vmem %s2, 32
    %v1327 = vld [vmem:[%s1326] sm:$0xff]
    %vm1328 = vcmp.gt.f32.partialorder %v1327, 0.5
    %s1329 = scalar_lea.vmem %s193, 24
    %v1330 = vld [vmem:[%s1329] sm:$0xff]
    %vm1331 = vcmp.gt.f32.partialorder %v1330, 0.5
    %v1332 = vsel %vm1328, 1, 0
    %1333 = vset.pattern.permute.xlu0 0
    %1334 = vperm.xlu0 %1333, %v1332
    %v1335 = vpop.permute.xlu0 %1334
    %vm1336 = vcmp.eq.s32.totalorder %v1335, 1
    %v1337 = vsel %vm1336, %v1297, %v1285
    %1339 = vrot.lane.b32.xlu0 %v1337, 96
    %v1340 = vpop.permute.xlu0 %1339
    %1342 = vst.msk [vmem:[#allocation3] sm:$0xff] %vm238, %v1340
    %v1343 = vld [vmem:[#allocation5] sm:$0xff]
    %v1344 = vsel %vm1331, 1, 0
    %1345 = vset.pattern.permute.xlu0 0
    %1346 = vperm.xlu0 %1345, %v1344
    %v1347 = vpop.permute.xlu0 %1346
    %vm1348 = vcmp.eq.s32.totalorder %v1347, 1
    %1350 = vrot.lane.b32.xlu0 %v1343, 32
    %v1351 = vpop.permute.xlu0 %1350
    %v1353 = vsel %vm1348, %v1313, %v1351
    %1355 = vrot.lane.b32.xlu0 %v1353, 96
    %v1356 = vpop.permute.xlu0 %1355
    %1358 = vst.msk [vmem:[#allocation5] sm:$0xff] %vm238, %v1356
    %v1359 = vld [vmem:[#allocation2] sm:$0xff]
    %1361 = vrot.lane.b32.xlu0 %v1359, 64
    %v1362 = vpop.permute.xlu0 %1361
    %v1364 = vsel %vm1336, %v1319, %v1362
    %1366 = vrot.lane.b32.xlu0 %v1364, 64
    %v1367 = vpop.permute.xlu0 %1366
    %1369 = vst.msk [vmem:[#allocation2] sm:$0xff] %vm238, %v1367
    %v1370 = vld [vmem:[#allocation4] sm:$0xff]
    %1372 = vrot.lane.b32.xlu0 %v1370, 64
    %v1373 = vpop.permute.xlu0 %1372
    %v1375 = vsel %vm1348, %v1325, %v1373
    %1377 = vrot.lane.b32.xlu0 %v1375, 64
    %v1378 = vpop.permute.xlu0 %1377
    %1380 = vst.msk [vmem:[#allocation4] sm:$0xff] %vm238, %v1378
    %v1381 = vsel %vm1336, %v1319, 0.0
    %v1382 = vpack.c.bf16 %v1381, %v1381
    %v1384 = vunpack.c.l.b16 %v1382
    %v1385 = vpack.c.b16 %v1384, %v1384
    %1386 = vrot.lane.b32.xlu0 %v1385, 64
    %v1387 = vpop.permute.xlu0 %1386
    %s1389 = scalar_lea.vmem %s5, 16
    %1390 = vst.msk [vmem:[%s1389] sm:$0xf] %vm465, %v1387
    %v1391 = vsel %vm1348, %v1325, 0.0
    %v1392 = vpack.c.bf16 %v1391, %v1391
    %v1394 = vunpack.c.l.b16 %v1392
    %v1395 = vpack.c.b16 %v1394, %v1394
    %1396 = vrot.lane.b32.xlu0 %v1395, 64
    %v1397 = vpop.permute.xlu0 %1396
    %s1399 = scalar_lea.vmem %s201, 12
    %1400 = vst.msk [vmem:[%s1399] sm:$0xf] %vm465, %v1397
    %s1401 = scalar_lea.vmem [#allocation6], 20
    %v1402 = vld [vmem:[%s1401] sm:$0xf]
    %v1403 = vld [vmem:[#allocation2] sm:$0xff]
    %v1404 = vpack.c.bf16 %v1403, %v1403
    %v1406 = vsel %vm238, %v1404, 0
    %1408 = vmatprep.subr.bf16.mxu0 0
    %1409 = vmatpush1.bf16.msra.mxu0 %v234
    %1410 = vmatprep.subr.bf16.mxu0 0
    %1411 = vmatpush1.bf16.msra.mxu0 %v235
    %1412 = vmatprep.subr.bf16.mxu0 0
    %1413 = vmatpush1.bf16.msra.mxu0 0
    %1414 = vmatprep.subr.bf16.mxu0 0
    %1415 = vmatpush1.bf16.msra.mxu0 0
    %1416 = vmatprep.subr.bf16.mxu0 0
    %1417 = vmatpush1.bf16.msra.mxu0 0
    %1418 = vmatprep.subr.bf16.mxu0 0
    %1419 = vmatpush1.bf16.msra.mxu0 0
    %1420 = vmatprep.subr.bf16.mxu0 0
    %1421 = vmatpush1.bf16.msra.mxu0 0
    %1422 = vmatprep.subr.bf16.mxu0 0
    %1423 = vmatpush1.bf16.msra.mxu0 0
    %1424 = vmatprep.subr.bf16.mxu0 0
    %1425 = vmatpush1.bf16.msra.mxu0 0
    %1426 = vmatprep.subr.bf16.mxu0 0
    %1427 = vmatpush1.bf16.msra.mxu0 0
    %1428 = vmatprep.subr.bf16.mxu0 0
    %1429 = vmatpush1.bf16.msra.mxu0 0
    %1430 = vmatprep.subr.bf16.mxu0 0
    %1431 = vmatpush1.bf16.msra.mxu0 0
    %1432 = vmatprep.subr.bf16.mxu0 0
    %1433 = vmatpush1.bf16.msra.mxu0 0
    %1434 = vmatprep.subr.bf16.mxu0 0
    %1435 = vmatpush1.bf16.msra.mxu0 0
    %1436 = vmatprep.subr.bf16.mxu0 0
    %1437 = vmatpush1.bf16.msra.mxu0 0
    %1438 = vmatprep.subr.bf16.mxu0 0
    %1439 = vmatpush1.bf16.msra.mxu0 0
    %1440 = vmatprep.mubr.bf16.mxu0 0
    %1441 = vmatmul.mubr.bf16.gmra.mrb[0].mxu0 %v1406
    %v1442 = vpop.f32.mrb[0].mxu0
    %v1443 = vadd.f32 0.0, %v1442
    %v1444 = vpop.f32.mrb[0].mxu0
    %v1445 = vpop.f32.mrb[0].mxu0
    %v1446 = vpop.f32.mrb[0].mxu0
    %1447 = vdwg.mxu0
    %v1448 = vunpack.c.l.bf16 %v1402
    %v1449 = vadd.f32 %v1448, %v1443
    %s1450 = scalar_lea.vmem [#allocation7], 8
    %v1451 = vld [vmem:[%s1450] sm:$0xf]
    %v1452 = vld [vmem:[#allocation4] sm:$0xff]
    %v1453 = vpack.c.bf16 %v1452, %v1452
    %v1455 = vsel %vm238, %v1453, 0
    %1457 = vmatprep.subr.bf16.mxu0 0
    %1458 = vmatpush1.bf16.msra.mxu0 %v296
    %1459 = vmatprep.subr.bf16.mxu0 0
    %1460 = vmatpush1.bf16.msra.mxu0 %v297
    %1461 = vmatprep.subr.bf16.mxu0 0
    %1462 = vmatpush1.bf16.msra.mxu0 0
    %1463 = vmatprep.subr.bf16.mxu0 0
    %1464 = vmatpush1.bf16.msra.mxu0 0
    %1465 = vmatprep.subr.bf16.mxu0 0
    %1466 = vmatpush1.bf16.msra.mxu0 0
    %1467 = vmatprep.subr.bf16.mxu0 0
    %1468 = vmatpush1.bf16.msra.mxu0 0
    %1469 = vmatprep.subr.bf16.mxu0 0
    %1470 = vmatpush1.bf16.msra.mxu0 0
    %1471 = vmatprep.subr.bf16.mxu0 0
    %1472 = vmatpush1.bf16.msra.mxu0 0
    %1473 = vmatprep.subr.bf16.mxu0 0
    %1474 = vmatpush1.bf16.msra.mxu0 0
    %1475 = vmatprep.subr.bf16.mxu0 0
    %1476 = vmatpush1.bf16.msra.mxu0 0
    %1477 = vmatprep.subr.bf16.mxu0 0
    %1478 = vmatpush1.bf16.msra.mxu0 0
    %1479 = vmatprep.subr.bf16.mxu0 0
    %1480 = vmatpush1.bf16.msra.mxu0 0
    %1481 = vmatprep.subr.bf16.mxu0 0
    %1482 = vmatpush1.bf16.msra.mxu0 0
    %1483 = vmatprep.subr.bf16.mxu0 0
    %1484 = vmatpush1.bf16.msra.mxu0 0
    %1485 = vmatprep.subr.bf16.mxu0 0
    %1486 = vmatpush1.bf16.msra.mxu0 0
    %1487 = vmatprep.subr.bf16.mxu0 0
    %1488 = vmatpush1.bf16.msra.mxu0 0
    %1489 = vmatprep.mubr.bf16.mxu0 0
    %1490 = vmatmul.mubr.bf16.gmra.mrb[0].mxu0 %v1455
    %v1491 = vpop.f32.mrb[0].mxu0
    %v1492 = vadd.f32 0.0, %v1491
    %v1493 = vpop.f32.mrb[0].mxu0
    %v1494 = vpop.f32.mrb[0].mxu0
    %v1495 = vpop.f32.mrb[0].mxu0
    %1496 = vdwg.mxu0
    %v1497 = vunpack.c.l.bf16 %v1451
    %v1498 = vadd.f32 %v1497, %v1492
    %v1499 = vxor.u32 %v1449, 2147483648
    %v1500 = vmul.f32 %v1499, 1.442695
    %v1501 = vpow.pop %v1500
    %v1502 = vadd.f32 %v1501, 1.0
    %v1503 = vrcp.pop %v1502
    %v1504 = vmul.f32 1.0, %v1503
    %v1505 = vxor.u32 %v1498, 2147483648
    %v1506 = vmul.f32 %v1505, 1.442695
    %v1507 = vpow.pop %v1506
    %v1508 = vadd.f32 %v1507, 1.0
    %v1509 = vrcp.pop %v1508
    %v1510 = vmul.f32 1.0, %v1509
    %v1511 = vtanh.pop %v1449
    %v1512 = vtanh.pop %v1498
    %v1513 = vld [vmem:[#allocation3] sm:$0xff]
    %1515 = vrot.lane.b32.xlu0 %v1513, 32
    %v1516 = vpop.permute.xlu0 %1515
    %v1518 = vmul.f32 %v1504, %v1516
    %1520 = vrot.lane.b32.xlu0 %v1511, 32
    %v1521 = vpop.permute.xlu0 %1520
    %v1523 = vmul.f32 %v1504, %v1521
    %1525 = vrot.lane.b32.xlu0 %v1523, 32
    %v1526 = vpop.permute.xlu0 %1525
    %v1528 = vadd.f32 %v1518, %v1526
    %v1529 = vld [vmem:[#allocation5] sm:$0xff]
    %1531 = vrot.lane.b32.xlu0 %v1529, 32
    %v1532 = vpop.permute.xlu0 %1531
    %v1534 = vmul.f32 %v1510, %v1532
    %1536 = vrot.lane.b32.xlu0 %v1512, 32
    %v1537 = vpop.permute.xlu0 %1536
    %v1539 = vmul.f32 %v1510, %v1537
    %1541 = vrot.lane.b32.xlu0 %v1539, 32
    %v1542 = vpop.permute.xlu0 %1541
    %v1544 = vadd.f32 %v1534, %v1542
    %v1545 = vtanh.pop %v1528
    %1547 = vrot.lane.b32.xlu0 %v1545, 32
    %v1548 = vpop.permute.xlu0 %1547
    %v1550 = vmul.f32 %v1504, %v1548
    %v1551 = vtanh.pop %v1544
    %1553 = vrot.lane.b32.xlu0 %v1551, 32
    %v1554 = vpop.permute.xlu0 %1553
    %v1556 = vmul.f32 %v1510, %v1554
    %s1557 = scalar_lea.vmem %s2, 40
    %v1558 = vld [vmem:[%s1557] sm:$0xff]
    %vm1559 = vcmp.gt.f32.partialorder %v1558, 0.5
    %s1560 = scalar_lea.vmem %s193, 16
    %v1561 = vld [vmem:[%s1560] sm:$0xff]
    %vm1562 = vcmp.gt.f32.partialorder %v1561, 0.5
    %v1563 = vsel %vm1559, 1, 0
    %1564 = vset.pattern.permute.xlu0 0
    %1565 = vperm.xlu0 %1564, %v1563
    %v1566 = vpop.permute.xlu0 %1565
    %vm1567 = vcmp.eq.s32.totalorder %v1566, 1
    %v1568 = vsel %vm1567, %v1528, %v1516
    %1570 = vrot.lane.b32.xlu0 %v1568, 96
    %v1571 = vpop.permute.xlu0 %1570
    %1573 = vst.msk [vmem:[#allocation3] sm:$0xff] %vm238, %v1571
    %v1574 = vld [vmem:[#allocation5] sm:$0xff]
    %v1575 = vsel %vm1562, 1, 0
    %1576 = vset.pattern.permute.xlu0 0
    %1577 = vperm.xlu0 %1576, %v1575
    %v1578 = vpop.permute.xlu0 %1577
    %vm1579 = vcmp.eq.s32.totalorder %v1578, 1
    %1581 = vrot.lane.b32.xlu0 %v1574, 32
    %v1582 = vpop.permute.xlu0 %1581
    %v1584 = vsel %vm1579, %v1544, %v1582
    %1586 = vrot.lane.b32.xlu0 %v1584, 96
    %v1587 = vpop.permute.xlu0 %1586
    %1589 = vst.msk [vmem:[#allocation5] sm:$0xff] %vm238, %v1587
    %v1590 = vld [vmem:[#allocation2] sm:$0xff]
    %1592 = vrot.lane.b32.xlu0 %v1590, 64
    %v1593 = vpop.permute.xlu0 %1592
    %v1595 = vsel %vm1567, %v1550, %v1593
    %1597 = vrot.lane.b32.xlu0 %v1595, 64
    %v1598 = vpop.permute.xlu0 %1597
    %1600 = vst.msk [vmem:[#allocation2] sm:$0xff] %vm238, %v1598
    %v1601 = vld [vmem:[#allocation4] sm:$0xff]
    %1603 = vrot.lane.b32.xlu0 %v1601, 64
    %v1604 = vpop.permute.xlu0 %1603
    %v1606 = vsel %vm1579, %v1556, %v1604
    %1608 = vrot.lane.b32.xlu0 %v1606, 64
    %v1609 = vpop.permute.xlu0 %1608
    %1611 = vst.msk [vmem:[#allocation4] sm:$0xff] %vm238, %v1609
    %v1612 = vsel %vm1567, %v1550, 0.0
    %v1613 = vpack.c.bf16 %v1612, %v1612
    %v1615 = vunpack.c.l.b16 %v1613
    %v1616 = vpack.c.b16 %v1615, %v1615
    %1617 = vrot.lane.b32.xlu0 %v1616, 64
    %v1618 = vpop.permute.xlu0 %1617
    %s1620 = scalar_lea.vmem %s5, 20
    %1621 = vst.msk [vmem:[%s1620] sm:$0xf] %vm465, %v1618
    %v1622 = vsel %vm1579, %v1556, 0.0
    %v1623 = vpack.c.bf16 %v1622, %v1622
    %v1625 = vunpack.c.l.b16 %v1623
    %v1626 = vpack.c.b16 %v1625, %v1625
    %1627 = vrot.lane.b32.xlu0 %v1626, 64
    %v1628 = vpop.permute.xlu0 %1627
    %s1630 = scalar_lea.vmem %s201, 8
    %1631 = vst.msk [vmem:[%s1630] sm:$0xf] %vm465, %v1628
    %s1632 = scalar_lea.vmem [#allocation6], 24
    %v1633 = vld [vmem:[%s1632] sm:$0xf]
    %v1634 = vld [vmem:[#allocation2] sm:$0xff]
    %v1635 = vpack.c.bf16 %v1634, %v1634
    %v1637 = vsel %vm238, %v1635, 0
    %1639 = vmatprep.subr.bf16.mxu0 0
    %1640 = vmatpush1.bf16.msra.mxu0 %v234
    %1641 = vmatprep.subr.bf16.mxu0 0
    %1642 = vmatpush1.bf16.msra.mxu0 %v235
    %1643 = vmatprep.subr.bf16.mxu0 0
    %1644 = vmatpush1.bf16.msra.mxu0 0
    %1645 = vmatprep.subr.bf16.mxu0 0
    %1646 = vmatpush1.bf16.msra.mxu0 0
    %1647 = vmatprep.subr.bf16.mxu0 0
    %1648 = vmatpush1.bf16.msra.mxu0 0
    %1649 = vmatprep.subr.bf16.mxu0 0
    %1650 = vmatpush1.bf16.msra.mxu0 0
    %1651 = vmatprep.subr.bf16.mxu0 0
    %1652 = vmatpush1.bf16.msra.mxu0 0
    %1653 = vmatprep.subr.bf16.mxu0 0
    %1654 = vmatpush1.bf16.msra.mxu0 0
    %1655 = vmatprep.subr.bf16.mxu0 0
    %1656 = vmatpush1.bf16.msra.mxu0 0
    %1657 = vmatprep.subr.bf16.mxu0 0
    %1658 = vmatpush1.bf16.msra.mxu0 0
    %1659 = vmatprep.subr.bf16.mxu0 0
    %1660 = vmatpush1.bf16.msra.mxu0 0
    %1661 = vmatprep.subr.bf16.mxu0 0
    %1662 = vmatpush1.bf16.msra.mxu0 0
    %1663 = vmatprep.subr.bf16.mxu0 0
    %1664 = vmatpush1.bf16.msra.mxu0 0
    %1665 = vmatprep.subr.bf16.mxu0 0
    %1666 = vmatpush1.bf16.msra.mxu0 0
    %1667 = vmatprep.subr.bf16.mxu0 0
    %1668 = vmatpush1.bf16.msra.mxu0 0
    %1669 = vmatprep.subr.bf16.mxu0 0
    %1670 = vmatpush1.bf16.msra.mxu0 0
    %1671 = vmatprep.mubr.bf16.mxu0 0
    %1672 = vmatmul.mubr.bf16.gmra.mrb[0].mxu0 %v1637
    %v1673 = vpop.f32.mrb[0].mxu0
    %v1674 = vadd.f32 0.0, %v1673
    %v1675 = vpop.f32.mrb[0].mxu0
    %v1676 = vpop.f32.mrb[0].mxu0
    %v1677 = vpop.f32.mrb[0].mxu0
    %1678 = vdwg.mxu0
    %v1679 = vunpack.c.l.bf16 %v1633
    %v1680 = vadd.f32 %v1679, %v1674
    %s1681 = scalar_lea.vmem [#allocation7], 4
    %v1682 = vld [vmem:[%s1681] sm:$0xf]
    %v1683 = vld [vmem:[#allocation4] sm:$0xff]
    %v1684 = vpack.c.bf16 %v1683, %v1683
    %v1686 = vsel %vm238, %v1684, 0
    %1688 = vmatprep.subr.bf16.mxu0 0
    %1689 = vmatpush1.bf16.msra.mxu0 %v296
    %1690 = vmatprep.subr.bf16.mxu0 0
    %1691 = vmatpush1.bf16.msra.mxu0 %v297
    %1692 = vmatprep.subr.bf16.mxu0 0
    %1693 = vmatpush1.bf16.msra.mxu0 0
    %1694 = vmatprep.subr.bf16.mxu0 0
    %1695 = vmatpush1.bf16.msra.mxu0 0
    %1696 = vmatprep.subr.bf16.mxu0 0
    %1697 = vmatpush1.bf16.msra.mxu0 0
    %1698 = vmatprep.subr.bf16.mxu0 0
    %1699 = vmatpush1.bf16.msra.mxu0 0
    %1700 = vmatprep.subr.bf16.mxu0 0
    %1701 = vmatpush1.bf16.msra.mxu0 0
    %1702 = vmatprep.subr.bf16.mxu0 0
    %1703 = vmatpush1.bf16.msra.mxu0 0
    %1704 = vmatprep.subr.bf16.mxu0 0
    %1705 = vmatpush1.bf16.msra.mxu0 0
    %1706 = vmatprep.subr.bf16.mxu0 0
    %1707 = vmatpush1.bf16.msra.mxu0 0
    %1708 = vmatprep.subr.bf16.mxu0 0
    %1709 = vmatpush1.bf16.msra.mxu0 0
    %1710 = vmatprep.subr.bf16.mxu0 0
    %1711 = vmatpush1.bf16.msra.mxu0 0
    %1712 = vmatprep.subr.bf16.mxu0 0
    %1713 = vmatpush1.bf16.msra.mxu0 0
    %1714 = vmatprep.subr.bf16.mxu0 0
    %1715 = vmatpush1.bf16.msra.mxu0 0
    %1716 = vmatprep.subr.bf16.mxu0 0
    %1717 = vmatpush1.bf16.msra.mxu0 0
    %1718 = vmatprep.subr.bf16.mxu0 0
    %1719 = vmatpush1.bf16.msra.mxu0 0
    %1720 = vmatprep.mubr.bf16.mxu0 0
    %1721 = vmatmul.mubr.bf16.gmra.mrb[0].mxu0 %v1686
    %v1722 = vpop.f32.mrb[0].mxu0
    %v1723 = vadd.f32 0.0, %v1722
    %v1724 = vpop.f32.mrb[0].mxu0
    %v1725 = vpop.f32.mrb[0].mxu0
    %v1726 = vpop.f32.mrb[0].mxu0
    %1727 = vdwg.mxu0
    %v1728 = vunpack.c.l.bf16 %v1682
    %v1729 = vadd.f32 %v1728, %v1723
    %v1730 = vxor.u32 %v1680, 2147483648
    %v1731 = vmul.f32 %v1730, 1.442695
    %v1732 = vpow.pop %v1731
    %v1733 = vadd.f32 %v1732, 1.0
    %v1734 = vrcp.pop %v1733
    %v1735 = vmul.f32 1.0, %v1734
    %v1736 = vxor.u32 %v1729, 2147483648
    %v1737 = vmul.f32 %v1736, 1.442695
    %v1738 = vpow.pop %v1737
    %v1739 = vadd.f32 %v1738, 1.0
    %v1740 = vrcp.pop %v1739
    %v1741 = vmul.f32 1.0, %v1740
    %v1742 = vtanh.pop %v1680
    %v1743 = vtanh.pop %v1729
    %v1744 = vld [vmem:[#allocation3] sm:$0xff]
    %1746 = vrot.lane.b32.xlu0 %v1744, 32
    %v1747 = vpop.permute.xlu0 %1746
    %v1749 = vmul.f32 %v1735, %v1747
    %1751 = vrot.lane.b32.xlu0 %v1742, 32
    %v1752 = vpop.permute.xlu0 %1751
    %v1754 = vmul.f32 %v1735, %v1752
    %1756 = vrot.lane.b32.xlu0 %v1754, 32
    %v1757 = vpop.permute.xlu0 %1756
    %v1759 = vadd.f32 %v1749, %v1757
    %v1760 = vld [vmem:[#allocation5] sm:$0xff]
    %1762 = vrot.lane.b32.xlu0 %v1760, 32
    %v1763 = vpop.permute.xlu0 %1762
    %v1765 = vmul.f32 %v1741, %v1763
    %1767 = vrot.lane.b32.xlu0 %v1743, 32
    %v1768 = vpop.permute.xlu0 %1767
    %v1770 = vmul.f32 %v1741, %v1768
    %1772 = vrot.lane.b32.xlu0 %v1770, 32
    %v1773 = vpop.permute.xlu0 %1772
    %v1775 = vadd.f32 %v1765, %v1773
    %v1776 = vtanh.pop %v1759
    %1778 = vrot.lane.b32.xlu0 %v1776, 32
    %v1779 = vpop.permute.xlu0 %1778
    %v1781 = vmul.f32 %v1735, %v1779
    %v1782 = vtanh.pop %v1775
    %1784 = vrot.lane.b32.xlu0 %v1782, 32
    %v1785 = vpop.permute.xlu0 %1784
    %v1787 = vmul.f32 %v1741, %v1785
    %s1788 = scalar_lea.vmem %s2, 48
    %v1789 = vld [vmem:[%s1788] sm:$0xff]
    %vm1790 = vcmp.gt.f32.partialorder %v1789, 0.5
    %s1791 = scalar_lea.vmem %s193, 8
    %v1792 = vld [vmem:[%s1791] sm:$0xff]
    %vm1793 = vcmp.gt.f32.partialorder %v1792, 0.5
    %v1794 = vsel %vm1790, 1, 0
    %1795 = vset.pattern.permute.xlu0 0
    %1796 = vperm.xlu0 %1795, %v1794
    %v1797 = vpop.permute.xlu0 %1796
    %vm1798 = vcmp.eq.s32.totalorder %v1797, 1
    %v1799 = vsel %vm1798, %v1759, %v1747
    %1801 = vrot.lane.b32.xlu0 %v1799, 96
    %v1802 = vpop.permute.xlu0 %1801
    %1804 = vst.msk [vmem:[#allocation3] sm:$0xff] %vm238, %v1802
    %v1805 = vld [vmem:[#allocation5] sm:$0xff]
    %v1806 = vsel %vm1793, 1, 0
    %1807 = vset.pattern.permute.xlu0 0
    %1808 = vperm.xlu0 %1807, %v1806
    %v1809 = vpop.permute.xlu0 %1808
    %vm1810 = vcmp.eq.s32.totalorder %v1809, 1
    %1812 = vrot.lane.b32.xlu0 %v1805, 32
    %v1813 = vpop.permute.xlu0 %1812
    %v1815 = vsel %vm1810, %v1775, %v1813
    %1817 = vrot.lane.b32.xlu0 %v1815, 96
    %v1818 = vpop.permute.xlu0 %1817
    %1820 = vst.msk [vmem:[#allocation5] sm:$0xff] %vm238, %v1818
    %v1821 = vld [vmem:[#allocation2] sm:$0xff]
    %1823 = vrot.lane.b32.xlu0 %v1821, 64
    %v1824 = vpop.permute.xlu0 %1823
    %v1826 = vsel %vm1798, %v1781, %v1824
    %1828 = vrot.lane.b32.xlu0 %v1826, 64
    %v1829 = vpop.permute.xlu0 %1828
    %1831 = vst.msk [vmem:[#allocation2] sm:$0xff] %vm238, %v1829
    %v1832 = vld [vmem:[#allocation4] sm:$0xff]
    %1834 = vrot.lane.b32.xlu0 %v1832, 64
    %v1835 = vpop.permute.xlu0 %1834
    %v1837 = vsel %vm1810, %v1787, %v1835
    %1839 = vrot.lane.b32.xlu0 %v1837, 64
    %v1840 = vpop.permute.xlu0 %1839
    %1842 = vst.msk [vmem:[#allocation4] sm:$0xff] %vm238, %v1840
    %v1843 = vsel %vm1798, %v1781, 0.0
    %v1844 = vpack.c.bf16 %v1843, %v1843
    %v1846 = vunpack.c.l.b16 %v1844
    %v1847 = vpack.c.b16 %v1846, %v1846
    %1848 = vrot.lane.b32.xlu0 %v1847, 64
    %v1849 = vpop.permute.xlu0 %1848
    %s1851 = scalar_lea.vmem %s5, 24
    %1852 = vst.msk [vmem:[%s1851] sm:$0xf] %vm465, %v1849
    %v1853 = vsel %vm1810, %v1787, 0.0
    %v1854 = vpack.c.bf16 %v1853, %v1853
    %v1856 = vunpack.c.l.b16 %v1854
    %v1857 = vpack.c.b16 %v1856, %v1856
    %1858 = vrot.lane.b32.xlu0 %v1857, 64
    %v1859 = vpop.permute.xlu0 %1858
    %s1861 = scalar_lea.vmem %s201, 4
    %1862 = vst.msk [vmem:[%s1861] sm:$0xf] %vm465, %v1859
    %s1863 = scalar_lea.vmem [#allocation6], 28
    %v1864 = vld [vmem:[%s1863] sm:$0xf]
    %v1865 = vld [vmem:[#allocation2] sm:$0xff]
    %v1866 = vpack.c.bf16 %v1865, %v1865
    %v1868 = vsel %vm238, %v1866, 0
    %1870 = vmatprep.subr.bf16.mxu0 0
    %1871 = vmatpush1.bf16.msra.mxu0 %v234
    %1872 = vmatprep.subr.bf16.mxu0 0
    %1873 = vmatpush1.bf16.msra.mxu0 %v235
    %1874 = vmatprep.subr.bf16.mxu0 0
    %1875 = vmatpush1.bf16.msra.mxu0 0
    %1876 = vmatprep.subr.bf16.mxu0 0
    %1877 = vmatpush1.bf16.msra.mxu0 0
    %1878 = vmatprep.subr.bf16.mxu0 0
    %1879 = vmatpush1.bf16.msra.mxu0 0
    %1880 = vmatprep.subr.bf16.mxu0 0
    %1881 = vmatpush1.bf16.msra.mxu0 0
    %1882 = vmatprep.subr.bf16.mxu0 0
    %1883 = vmatpush1.bf16.msra.mxu0 0
    %1884 = vmatprep.subr.bf16.mxu0 0
    %1885 = vmatpush1.bf16.msra.mxu0 0
    %1886 = vmatprep.subr.bf16.mxu0 0
    %1887 = vmatpush1.bf16.msra.mxu0 0
    %1888 = vmatprep.subr.bf16.mxu0 0
    %1889 = vmatpush1.bf16.msra.mxu0 0
    %1890 = vmatprep.subr.bf16.mxu0 0
    %1891 = vmatpush1.bf16.msra.mxu0 0
    %1892 = vmatprep.subr.bf16.mxu0 0
    %1893 = vmatpush1.bf16.msra.mxu0 0
    %1894 = vmatprep.subr.bf16.mxu0 0
    %1895 = vmatpush1.bf16.msra.mxu0 0
    %1896 = vmatprep.subr.bf16.mxu0 0
    %1897 = vmatpush1.bf16.msra.mxu0 0
    %1898 = vmatprep.subr.bf16.mxu0 0
    %1899 = vmatpush1.bf16.msra.mxu0 0
    %1900 = vmatprep.subr.bf16.mxu0 0
    %1901 = vmatpush1.bf16.msra.mxu0 0
    %1902 = vmatprep.mubr.bf16.mxu0 0
    %1903 = vmatmul.mubr.bf16.gmra.mrb[0].mxu0 %v1868
    %v1904 = vpop.f32.mrb[0].mxu0
    %v1905 = vadd.f32 0.0, %v1904
    %v1906 = vpop.f32.mrb[0].mxu0
    %v1907 = vpop.f32.mrb[0].mxu0
    %v1908 = vpop.f32.mrb[0].mxu0
    %1909 = vdwg.mxu0
    %v1910 = vunpack.c.l.bf16 %v1864
    %v1911 = vadd.f32 %v1910, %v1905
    %v1912 = vld [vmem:[#allocation7] sm:$0xf]
    %v1913 = vld [vmem:[#allocation4] sm:$0xff]
    %v1914 = vpack.c.bf16 %v1913, %v1913
    %v1916 = vsel %vm238, %v1914, 0
    %1918 = vmatprep.subr.bf16.mxu0 0
    %1919 = vmatpush1.bf16.msra.mxu0 %v296
    %1920 = vmatprep.subr.bf16.mxu0 0
    %1921 = vmatpush1.bf16.msra.mxu0 %v297
    %1922 = vmatprep.subr.bf16.mxu0 0
    %1923 = vmatpush1.bf16.msra.mxu0 0
    %1924 = vmatprep.subr.bf16.mxu0 0
    %1925 = vmatpush1.bf16.msra.mxu0 0
    %1926 = vmatprep.subr.bf16.mxu0 0
    %1927 = vmatpush1.bf16.msra.mxu0 0
    %1928 = vmatprep.subr.bf16.mxu0 0
    %1929 = vmatpush1.bf16.msra.mxu0 0
    %1930 = vmatprep.subr.bf16.mxu0 0
    %1931 = vmatpush1.bf16.msra.mxu0 0
    %1932 = vmatprep.subr.bf16.mxu0 0
    %1933 = vmatpush1.bf16.msra.mxu0 0
    %1934 = vmatprep.subr.bf16.mxu0 0
    %1935 = vmatpush1.bf16.msra.mxu0 0
    %1936 = vmatprep.subr.bf16.mxu0 0
    %1937 = vmatpush1.bf16.msra.mxu0 0
    %1938 = vmatprep.subr.bf16.mxu0 0
    %1939 = vmatpush1.bf16.msra.mxu0 0
    %1940 = vmatprep.subr.bf16.mxu0 0
    %1941 = vmatpush1.bf16.msra.mxu0 0
    %1942 = vmatprep.subr.bf16.mxu0 0
    %1943 = vmatpush1.bf16.msra.mxu0 0
    %1944 = vmatprep.subr.bf16.mxu0 0
    %1945 = vmatpush1.bf16.msra.mxu0 0
    %1946 = vmatprep.subr.bf16.mxu0 0
    %1947 = vmatpush1.bf16.msra.mxu0 0
    %1948 = vmatprep.subr.bf16.mxu0 0
    %1949 = vmatpush1.bf16.msra.mxu0 0
    %1950 = vmatprep.mubr.bf16.mxu0 0
    %1951 = vmatmul.mubr.bf16.gmra.mrb[0].mxu0 %v1916
    %v1952 = vpop.f32.mrb[0].mxu0
    %v1953 = vadd.f32 0.0, %v1952
    %v1954 = vpop.f32.mrb[0].mxu0
    %v1955 = vpop.f32.mrb[0].mxu0
    %v1956 = vpop.f32.mrb[0].mxu0
    %1957 = vdwg.mxu0
    %v1958 = vunpack.c.l.bf16 %v1912
    %v1959 = vadd.f32 %v1958, %v1953
    %v1960 = vxor.u32 %v1911, 2147483648
    %v1961 = vmul.f32 %v1960, 1.442695
    %v1962 = vpow.pop %v1961
    %v1963 = vadd.f32 %v1962, 1.0
    %v1964 = vrcp.pop %v1963
    %v1965 = vmul.f32 1.0, %v1964
    %v1966 = vxor.u32 %v1959, 2147483648
    %v1967 = vmul.f32 %v1966, 1.442695
    %v1968 = vpow.pop %v1967
    %v1969 = vadd.f32 %v1968, 1.0
    %v1970 = vrcp.pop %v1969
    %v1971 = vmul.f32 1.0, %v1970
    %v1972 = vtanh.pop %v1911
    %v1973 = vtanh.pop %v1959
    %v1974 = vld [vmem:[#allocation3] sm:$0xff]
    %1976 = vrot.lane.b32.xlu0 %v1974, 32
    %v1977 = vpop.permute.xlu0 %1976
    %v1979 = vmul.f32 %v1965, %v1977
    %1981 = vrot.lane.b32.xlu0 %v1972, 32
    %v1982 = vpop.permute.xlu0 %1981
    %v1984 = vmul.f32 %v1965, %v1982
    %1986 = vrot.lane.b32.xlu0 %v1984, 32
    %v1987 = vpop.permute.xlu0 %1986
    %v1989 = vadd.f32 %v1979, %v1987
    %v1990 = vld [vmem:[#allocation5] sm:$0xff]
    %1992 = vrot.lane.b32.xlu0 %v1990, 32
    %v1993 = vpop.permute.xlu0 %1992
    %v1995 = vmul.f32 %v1971, %v1993
    %1997 = vrot.lane.b32.xlu0 %v1973, 32
    %v1998 = vpop.permute.xlu0 %1997
    %v2000 = vmul.f32 %v1971, %v1998
    %2002 = vrot.lane.b32.xlu0 %v2000, 32
    %v2003 = vpop.permute.xlu0 %2002
    %v2005 = vadd.f32 %v1995, %v2003
    %v2006 = vtanh.pop %v1989
    %2008 = vrot.lane.b32.xlu0 %v2006, 32
    %v2009 = vpop.permute.xlu0 %2008
    %v2011 = vmul.f32 %v1965, %v2009
    %v2012 = vtanh.pop %v2005
    %2014 = vrot.lane.b32.xlu0 %v2012, 32
    %v2015 = vpop.permute.xlu0 %2014
    %v2017 = vmul.f32 %v1971, %v2015
    %s2018 = scalar_lea.vmem %s2, 56
    %v2019 = vld [vmem:[%s2018] sm:$0xff]
    %vm2020 = vcmp.gt.f32.partialorder %v2019, 0.5
    %v2021 = vld [vmem:[%s193] sm:$0xff]
    %vm2022 = vcmp.gt.f32.partialorder %v2021, 0.5
    %v2023 = vsel %vm2020, 1, 0
    %2024 = vset.pattern.permute.xlu0 0
    %2025 = vperm.xlu0 %2024, %v2023
    %v2026 = vpop.permute.xlu0 %2025
    %vm2027 = vcmp.eq.s32.totalorder %v2026, 1
    %v2028 = vsel %vm2027, %v1989, %v1977
    %2030 = vrot.lane.b32.xlu0 %v2028, 96
    %v2031 = vpop.permute.xlu0 %2030
    %2033 = vst.msk [vmem:[#allocation3] sm:$0xff] %vm238, %v2031
    %v2034 = vld [vmem:[#allocation5] sm:$0xff]
    %v2035 = vsel %vm2022, 1, 0
    %2036 = vset.pattern.permute.xlu0 0
    %2037 = vperm.xlu0 %2036, %v2035
    %v2038 = vpop.permute.xlu0 %2037
    %vm2039 = vcmp.eq.s32.totalorder %v2038, 1
    %2041 = vrot.lane.b32.xlu0 %v2034, 32
    %v2042 = vpop.permute.xlu0 %2041
    %v2044 = vsel %vm2039, %v2005, %v2042
    %2046 = vrot.lane.b32.xlu0 %v2044, 96
    %v2047 = vpop.permute.xlu0 %2046
    %2049 = vst.msk [vmem:[#allocation5] sm:$0xff] %vm238, %v2047
    %v2050 = vld [vmem:[#allocation2] sm:$0xff]
    %2052 = vrot.lane.b32.xlu0 %v2050, 64
    %v2053 = vpop.permute.xlu0 %2052
    %v2055 = vsel %vm2027, %v2011, %v2053
    %2057 = vrot.lane.b32.xlu0 %v2055, 64
    %v2058 = vpop.permute.xlu0 %2057
    %2060 = vst.msk [vmem:[#allocation2] sm:$0xff] %vm238, %v2058
    %v2061 = vld [vmem:[#allocation4] sm:$0xff]
    %2063 = vrot.lane.b32.xlu0 %v2061, 64
    %v2064 = vpop.permute.xlu0 %2063
    %v2066 = vsel %vm2039, %v2017, %v2064
    %2068 = vrot.lane.b32.xlu0 %v2066, 64
    %v2069 = vpop.permute.xlu0 %2068
    %2071 = vst.msk [vmem:[#allocation4] sm:$0xff] %vm238, %v2069
    %v2072 = vsel %vm2027, %v2011, 0.0
    %v2073 = vpack.c.bf16 %v2072, %v2072
    %v2075 = vunpack.c.l.b16 %v2073
    %v2076 = vpack.c.b16 %v2075, %v2075
    %2077 = vrot.lane.b32.xlu0 %v2076, 64
    %v2078 = vpop.permute.xlu0 %2077
    %s2080 = scalar_lea.vmem %s5, 28
    %2081 = vst.msk [vmem:[%s2080] sm:$0xf] %vm465, %v2078
    %v2082 = vsel %vm2039, %v2017, 0.0
    %v2083 = vpack.c.bf16 %v2082, %v2082
    %v2085 = vunpack.c.l.b16 %v2083
    %v2086 = vpack.c.b16 %v2085, %v2085
    %2087 = vrot.lane.b32.xlu0 %v2086, 64
    %v2088 = vpop.permute.xlu0 %2087
    %2090 = vst.msk [vmem:[%s201] sm:$0xf] %vm465, %v2088
    %s2091 = ssub.s32 0, 0
    %s2092 = smul.u32 8, %s2091
    %p2093 = scmp.lt.s32.totalorder %s2092, 7
    %s2094 = scalar_select %p2093, %s2092, 7
    %s2095 = smul.addr %s2094, 4
    %s2096 = scalar_lea.vmem %s6, %s2095
    // Predicated region
    $region108: #{blstmn_forward.6} parent=1 // pred_check
      _
    $region109: #{blstmn_forward.6} parent=1 // pred_check_branch
      %2098 = sbr.rel (0) target = $region111
    $region110: #{blstmn_forward.6} parent=1 // pred_region
      _
    $region111: #{blstmn_forward.6} parent=1 // pred_fallthru
      _
    // Predicated region
    $region112: #{blstmn_forward.6} parent=1 // pred_check
      _
    $region113: #{blstmn_forward.6} parent=1 // pred_check_branch
      %2100 = sbr.rel (0) target = $region115
    $region114: #{blstmn_forward.6} parent=1 // pred_region
      %s2101 = ssub.s32 0, 0
      %s2102 = smul.u32 8, %s2101
    $region115: #{blstmn_forward.6} parent=1 // pred_fallthru
      _
    // Predicated region
    $region116: #{blstmn_forward.6} parent=1 // pred_check
      _
    $region117: #{blstmn_forward.6} parent=1 // pred_check_branch
      %2104 = sbr.rel (0) target = $region119
    $region118: #{blstmn_forward.6} parent=1 // pred_region
      _
    $region119: #{blstmn_forward.6} parent=1 // pred_fallthru
      _
    // Predicated region
    $region120: #{blstmn_forward.6} parent=1 // pred_check
      _
    $region121: #{blstmn_forward.6} parent=1 // pred_check_branch
      %2106 = sbr.rel (0) target = $region123
    $region122: #{blstmn_forward.6} parent=1 // pred_region
      %s2107 = ssub.s32 0, 0
      %s2108 = smul.u32 8, %s2107
      %p2109 = scmp.lt.s32.totalorder %s2108, 7
      %s2110 = scalar_select %p2109, %s2108, 7
      %s2111 = smul.addr %s2110, 4
      %s2112 = scalar_lea.vmem %s6, %s2111
    $region123: #{blstmn_forward.6} parent=1 // pred_fallthru
      _

</llo_original>
